<compile_context>
chip_gen: v5e
topology: v5e:2x2
jax: 0.10.0
libtpu: 0.0.40
codegen_flags: <defaults>
</compile_context>

<pallas_src>
from functools import partial

import jax
import jax.numpy as jnp
from jax.experimental import pallas as pl
from jax.experimental.pallas import tpu as pltpu


def _vmem_limit_bytes():
    """Generation-aware scoped-VMEM limit (v7x has only 64 MiB physical)."""
    try:
        info = pltpu.get_tpu_info()
        cap = getattr(info, "vmem_capacity_bytes", None)
        if cap:
            return min(int(cap * 0.65), 100 * 1024 * 1024)
    except Exception:
        pass
    return 40 * 1024 * 1024  # safe on every generation (v7x: 64 MiB physical)


VMEM_LIMIT = _vmem_limit_bytes()


def _round_up(a, b):
    return (a + b - 1) // b * b


def _pick_tile(n, cands=(1024, 512, 256, 128), max_pad_ratio=1.4):
    """Tile for a lane-mapped (last / contraction) dim: multiple of 128.

    Picks the LARGEST candidate whose padding overhead is bounded and relies
    on zero-padding (fixes the old fallback-to-128 for dims like 3600, which
    half-filled the 256-wide MXU and exploded the grid-step count).
    """
    cap = _round_up(n, 128)
    for t in cands:
        if _round_up(n, t) <= max_pad_ratio * cap:
            return t
    return 128


def _pick_tm(m):
    return 512 if m >= 512 else _round_up(m, 8)


# ----------------------------------------------------------------------------
# Pallas kernels
# ----------------------------------------------------------------------------
def _matmul_affine_kernel(x_ref, w_ref, scale_ref, bias_ref, *refs,
                          act, extra_sigmoid):
    """o = act((x @ w) * scale + bias), K-tiled with fp32 accumulator.

    With extra_sigmoid=True the kernel also emits sigmoid(pre-activation) as a
    second output from the same epilogue (used by intra3: logits feed the
    transform conv, sigmoid feeds the context bmm / sim map).
    """
    if extra_sigmoid:
        o_ref, o2_ref, acc_ref = refs
    else:
        o_ref, acc_ref = refs
        o2_ref = None

    @pl.when(pl.program_id(2) == 0)
    def _():
        acc_ref[...] = jnp.zeros_like(acc_ref)

    acc_ref[...] += jnp.dot(x_ref[...], w_ref[...],
                            preferred_element_type=jnp.float32)

    @pl.when(pl.program_id(2) == pl.num_programs(2) - 1)
    def _():
        y = acc_ref[...] * scale_ref[...] + bias_ref[...]
        if act == "relu":
            z = jnp.maximum(y, 0.0)
        elif act == "sigmoid":
            z = jax.nn.sigmoid(y)
        else:
            z = y
        o_ref[...] = z.astype(o_ref.dtype)
        if extra_sigmoid:
            o2_ref[...] = jax.nn.sigmoid(y).astype(o2_ref.dtype)


def _ctx_bmm_kernel(s_ref, t_ref, v_ref, intra_ref, inter_ref, acc_ref,
                    *, inv_denom, tq):
    """Fused intra/inter context bmm with pre-activated inputs:
         intra += S_sig_tile @ V_tile       (S_sig = sigmoid(intra logits))
         inter += T_sig_tile @ V_tile       (T_sig = sigmoid(-transform logits))
       Both accumulations share one (2*tp, C) accumulator and ONE MXU matmul
       per step (shared RHS push).  V is fully resident per batch; the Q tile
       is sliced in-kernel.  The /hw normalisation is fused at the last step.
    """
    qq = pl.program_id(2)

    @pl.when(qq == 0)
    def _():
        acc_ref[...] = jnp.zeros_like(acc_ref)

    lhs = jnp.concatenate([s_ref[0], t_ref[0]], axis=0)       # (2*tp, tq) bf16
    off = pl.multiple_of(qq * tq, tq)
    v = v_ref[0, pl.ds(off, tq), :]                           # (tq, C) bf16
    acc_ref[...] += jnp.dot(lhs, v, preferred_element_type=jnp.float32)

    @pl.when(qq == pl.num_programs(2) - 1)
    def _():
        tp = intra_ref.shape[1]
        out = acc_ref[...] * inv_denom
        intra_ref[0] = out[:tp].astype(intra_ref.dtype)
        inter_ref[0] = out[tp:].astype(inter_ref.dtype)


def _log_softmax_nchw_kernel(x_ref, o_ref):
    """log_softmax over the class axis of an NCHW block (lane-dense: W on lanes)."""
    x = x_ref[...].astype(jnp.float32)                 # (1, C, th, tw)
    m = jnp.max(x, axis=1, keepdims=True)
    z = x - m
    lse = jnp.log(jnp.sum(jnp.exp(z), axis=1, keepdims=True))
    o_ref[...] = (z - lse).astype(o_ref.dtype)


# ----------------------------------------------------------------------------
# Pallas wrappers
# ----------------------------------------------------------------------------
def matmul_affine(x, w, scale, bias, act=None, out_dtype=jnp.bfloat16,
                  extra_sigmoid=False):
    """x: (M, K), w: (K, N), scale/bias: (N,).  Returns act((x@w)*scale+bias).

    Tiled (M, N, K) grid, bf16 MXU inputs, fp32 accumulation + epilogue.
    Pads only when needed (weights are stored pre-bf16 so the cast is a no-op).
    With extra_sigmoid=True also returns sigmoid(pre-activation).
    """
    m, k = x.shape
    n = w.shape[1]
    tm, tk, tn = _pick_tm(m), _pick_tile(k), _pick_tile(n)
    mp, kp, np_ = _round_up(m, tm), _round_up(k, tk), _round_up(n, tn)

    xb = x.astype(jnp.bfloat16)
    if (mp, kp) != (m, k):
        xb = jnp.pad(xb, ((0, mp - m), (0, kp - k)))
    wb = w.astype(jnp.bfloat16)
    if (kp, np_) != (k, n):
        wb = jnp.pad(wb, ((0, kp - k), (0, np_ - n)))
    sc = scale.astype(jnp.float32).reshape(1, n)
    bi = bias.astype(jnp.float32).reshape(1, n)
    if np_ != n:
        sc = jnp.pad(sc, ((0, 0), (0, np_ - n)))
        bi = jnp.pad(bi, ((0, 0), (0, np_ - n)))

    out_shapes = [jax.ShapeDtypeStruct((mp, np_), out_dtype)]
    out_specs = [pl.BlockSpec((tm, tn), lambda i, j, kk: (i, j))]
    if extra_sigmoid:
        out_shapes.append(jax.ShapeDtypeStruct((mp, np_), jnp.bfloat16))
        out_specs.append(pl.BlockSpec((tm, tn), lambda i, j, kk: (i, j)))

    outs = pl.pallas_call(
        partial(_matmul_affine_kernel, act=act, extra_sigmoid=extra_sigmoid),
        out_shape=tuple(out_shapes) if extra_sigmoid else out_shapes[0],
        grid=(mp // tm, np_ // tn, kp // tk),
        in_specs=[
            pl.BlockSpec((tm, tk), lambda i, j, kk: (i, kk)),
            pl.BlockSpec((tk, tn), lambda i, j, kk: (kk, j)),
            pl.BlockSpec((1, tn), lambda i, j, kk: (0, j)),
            pl.BlockSpec((1, tn), lambda i, j, kk: (0, j)),
        ],
        out_specs=tuple(out_specs) if extra_sigmoid else out_specs[0],
        scratch_shapes=[pltpu.VMEM((tm, tn), jnp.float32)],
        compiler_params=pltpu.CompilerParams(
            dimension_semantics=("parallel", "parallel", "arbitrary"),
            vmem_limit_bytes=VMEM_LIMIT),
    )(xb, wb, sc, bi)

    if extra_sigmoid:
        return outs[0][:m, :n], outs[1][:m, :n]
    return outs[:m, :n]


def fused_context_bmm(S_sig, T_sig, V, denom):
    """S_sig, T_sig: (B, P, Q) pre-sigmoided similarity maps; V: (B, Q, C).

    Returns intra_ctx, inter_ctx = (S_sig @ V)/denom, (T_sig @ V)/denom, bf16.
    Padding is exact: S_sig/T_sig pad columns AND V pad rows are zero, so the
    padded Q range contributes nothing to the contraction.
    """
    b, p, q = S_sig.shape
    c = V.shape[-1]
    tp = 512 if p >= 512 else _round_up(p, 8)
    tq = _pick_tile(q, cands=(512, 256, 128))
    pp, qp = _round_up(p, tp), _round_up(q, tq)

    Sp = S_sig.astype(jnp.bfloat16)
    Tp = T_sig.astype(jnp.bfloat16)
    if (pp, qp) != (p, q):
        Sp = jnp.pad(Sp, ((0, 0), (0, pp - p), (0, qp - q)))
        Tp = jnp.pad(Tp, ((0, 0), (0, pp - p), (0, qp - q)))
    Vp = V.astype(jnp.bfloat16)
    if qp != q:
        Vp = jnp.pad(Vp, ((0, 0), (0, qp - q), (0, 0)))  # pad rows MUST be zero

    outs = pl.pallas_call(
        partial(_ctx_bmm_kernel, inv_denom=1.0 / float(denom), tq=tq),
        out_shape=(jax.ShapeDtypeStruct((b, pp, c), jnp.bfloat16),
                   jax.ShapeDtypeStruct((b, pp, c), jnp.bfloat16)),
        grid=(b, pp // tp, qp // tq),
        in_specs=[
            pl.BlockSpec((1, tp, tq), lambda bb, i, qq: (bb, i, qq)),
            pl.BlockSpec((1, tp, tq), lambda bb, i, qq: (bb, i, qq)),
            # V stays resident per batch (constant block index across i / qq).
            pl.BlockSpec((1, qp, c), lambda bb, i, qq: (bb, 0, 0)),
        ],
        out_specs=(pl.BlockSpec((1, tp, c), lambda bb, i, qq: (bb, i, 0)),
                   pl.BlockSpec((1, tp, c), lambda bb, i, qq: (bb, i, 0))),
        scratch_shapes=[pltpu.VMEM((2 * tp, c), jnp.float32)],
        compiler_params=pltpu.CompilerParams(
            dimension_semantics=("parallel", "parallel", "arbitrary"),
            vmem_limit_bytes=VMEM_LIMIT),
    )(Sp, Tp, Vp)

    return outs[0][:, :p, :], outs[1][:, :p, :]


def log_softmax_channels_nchw(x):
    """x: (B, C, H, W) fp32 -> log_softmax along C (lane-dense: W on lanes)."""
    b, c, h, w = x.shape
    th = h
    for t in (32, 16, 8):
        if h % t == 0:
            th = t
            break
    return pl.pallas_call(
        _log_softmax_nchw_kernel,
        out_shape=jax.ShapeDtypeStruct((b, c, h, w), jnp.float32),
        grid=(b, h // th),
        in_specs=[pl.BlockSpec((1, c, th, w), lambda bb, i: (bb, 0, i, 0))],
        out_specs=pl.BlockSpec((1, c, th, w), lambda bb, i: (bb, 0, i, 0)),
        compiler_params=pltpu.CompilerParams(
            dimension_semantics=("parallel", "parallel"),
            vmem_limit_bytes=VMEM_LIMIT),
    )(x.astype(jnp.float32))


# ----------------------------------------------------------------------------
# Conv helpers (glue: im2col / reshapes; the matmul itself is the Pallas kernel)
# ----------------------------------------------------------------------------
def conv1x1(x, params, act=None, out_dtype=jnp.bfloat16):
    b, h, w, c = x.shape
    wt, scale, bias = params
    y = matmul_affine(x.reshape(b * h * w, c), wt, scale, bias, act, out_dtype)
    return y.reshape(b, h, w, -1)


def conv1x1_logits_and_sigmoid(x, params):
    """Returns (logits, sigmoid(logits)) from one fused kernel (intra3)."""
    b, h, w, c = x.shape
    wt, scale, bias = params
    logits, sig = matmul_affine(x.reshape(b * h * w, c), wt, scale, bias,
                                act=None, out_dtype=jnp.bfloat16,
                                extra_sigmoid=True)
    n = wt.shape[1]
    return logits.reshape(b, h, w, n), sig.reshape(b, h, w, n)


def _im2col_3x3(x, stride=1):
    # TODO(synk): replace with in-kernel halo/tap accumulation (overlapping
    # window manual DMA) to remove the 9x HBM materialization; kept in bf16.
    b, h, w, c = x.shape
    xp = jnp.pad(x, ((0, 0), (1, 1), (1, 1), (0, 0)))
    ho = (h + 2 - 3) // stride + 1
    wo = (w + 2 - 3) // stride + 1
    cols = []
    for kh in range(3):
        for kw in range(3):
            cols.append(
                xp[:, kh:kh + stride * (ho - 1) + 1:stride,
                      kw:kw + stride * (wo - 1) + 1:stride, :])
    return jnp.concatenate(cols, axis=-1), ho, wo  # (B, Ho, Wo, 9*C)


def conv3x3(x, params, act=None, stride=1, out_dtype=jnp.bfloat16):
    cols, ho, wo = _im2col_3x3(x.astype(jnp.bfloat16), stride)
    b = x.shape[0]
    wt, scale, bias = params
    y = matmul_affine(cols.reshape(b * ho * wo, -1), wt, scale, bias, act, out_dtype)
    return y.reshape(b, ho, wo, -1)


def _interp_matrix(n_in, n_out):
    if n_in == 1:
        return jnp.ones((n_out, 1), jnp.float32)
    pos = jnp.arange(n_out, dtype=jnp.float32) * (n_in - 1) / (n_out - 1)
    lo = jnp.clip(jnp.floor(pos).astype(jnp.int32), 0, n_in - 2)
    frac = pos - lo.astype(jnp.float32)
    rows = jnp.arange(n_out)
    mat = jnp.zeros((n_out, n_in), jnp.float32)
    mat = mat.at[rows, lo].add(1.0 - frac)
    mat = mat.at[rows, lo + 1].add(frac)
    return mat


def upsample8_bilinear_nchw(x):
    """F.interpolate(scale_factor=8, mode='bilinear', align_corners=True), NCHW."""
    b, c, h, w = x.shape
    mh = _interp_matrix(h, h * 8)
    mw = _interp_matrix(w, w * 8)
    y = jnp.einsum("oh,bchw->bcow", mh, x.astype(jnp.float32))
    y = jnp.einsum("pw,bcow->bcop", mw, y)
    return y


# ----------------------------------------------------------------------------
# ObjectContext
# ----------------------------------------------------------------------------
def object_context(x, p, want_sim):
    b, h, w, _ = x.shape
    hw = h * w  # plays the role of the hard-coded 3600 (= 60*60) in the reference

    value = conv1x1(x, p["reduce"], "relu")                      # (B,H,W,IC)
    s = conv1x1(value, p["intra1"], "relu")
    s = conv1x1(s, p["intra2"], "relu")                          # (B,H,W,hw)
    # intra3: one kernel emits the raw logits (transform-conv input) AND
    # sigmoid(logits) (bmm LHS / similarity map) -> sigmoid moved off the EUP
    # of the bmm kernel, sim map is free and already bf16.
    s_logits, s_sig = conv1x1_logits_and_sigmoid(s, p["intra3"])
    # transform: negated BN affine + sigmoid epilogue gives
    # sigmoid(-(acc*scale+bias)) == 1 - sigmoid(T) directly.
    wt, tsc, tbi = p["transform"]
    t_sig = conv1x1(s_logits, (wt, -tsc, -tbi), "sigmoid")       # (B,H,W,hw)

    ic = value.shape[-1]
    S = s_sig.reshape(b, hw, hw)      # [batch, spatial, map-channel]
    T = t_sig.reshape(b, hw, hw)
    V = value.reshape(b, hw, ic)      # [batch, spatial, inner-channel]

    # intra_context = sigmoid(S) @ V / 3600 ; inter uses (1 - sigmoid(T)),
    # both pre-activated and fused into one kernel sharing resident V tiles.
    intra_ctx, inter_ctx = fused_context_bmm(S, T, V, denom=hw)

    intra_ctx = conv1x1(intra_ctx.reshape(b, h, w, ic), p["intra_post"], "relu")
    inter_ctx = conv1x1(inter_ctx.reshape(b, h, w, ic), p["inter_post"], "relu")

    output = jnp.concatenate([x, intra_ctx, inter_ctx], axis=-1)
    sim_map = S if want_sim else None   # loss-path only; bf16
    return output, sim_map


# ----------------------------------------------------------------------------
# CPNet forward (inference / label=None path)
# ----------------------------------------------------------------------------
def cpnet_forward(data_nchw, params, *, with_aux=False, with_sim_map=False):
    x = jnp.transpose(data_nchw, (0, 2, 3, 1)).astype(jnp.bfloat16)  # -> NHWC

    # --- backbone stand-in, output stride 8 (see TODO at file top) ---
    c = conv3x3(x, params["stem1"], "relu", stride=2)
    c = conv3x3(c, params["stem2"], "relu", stride=2)
    c3 = conv3x3(c, params["layer3"], "relu", stride=2)   # blocks[-2] (~1024ch)
    c4 = conv1x1(c3, params["layer4"], "relu")            # blocks[-1] (~2048ch)

    # --- context + head ---
    fm, intra_sim_map = object_context(c4, params["context"], with_sim_map)
    fm = conv3x3(fm, params["head1"], "relu")
    # Dropout2d(0.1): identity at inference
    fm = conv1x1(fm, params["head2"], None, out_dtype=jnp.float32)  # 1x1 + bias
    fm = jnp.transpose(fm, (0, 3, 1, 2))           # NCHW while the map is small
    fm = upsample8_bilinear_nchw(fm)               # (B, C, 8H, 8W) fp32
    softmax_fm = log_softmax_channels_nchw(fm)     # lane-dense log-softmax

    # --- aux branch: dead compute when label is None, gated off at inference ---
    aux_fm = None
    if with_aux:
        aux = conv3x3(c3, params["aux1"], "relu")
        aux = conv1x1(aux, params["aux2"], None, out_dtype=jnp.float32)
        aux = jnp.transpose(aux, (0, 3, 1, 2))
        aux_fm = upsample8_bilinear_nchw(aux)

    return softmax_fm, aux_fm, intra_sim_map


# ----------------------------------------------------------------------------
# Deterministic parameter construction (ConvBnRelu: conv(no bias) + eval-BN)
# ----------------------------------------------------------------------------
def _conv_bn(key, cin_eff, cout, has_bn=True, has_bias=False):
    k1, k2, k3, k4, k5, k6 = jax.random.split(key, 6)
    w = jax.random.normal(k1, (cin_eff, cout), jnp.float32) / jnp.sqrt(cin_eff)
    if has_bn:
        gamma = 1.0 + 0.1 * jax.random.normal(k2, (cout,), jnp.float32)
        beta = 0.1 * jax.random.normal(k3, (cout,), jnp.float32)
        mean = 0.1 * jax.random.normal(k4, (cout,), jnp.float32)
        var = jnp.abs(jax.random.normal(k5, (cout,), jnp.float32)) + 0.5
        scale = gamma / jnp.sqrt(var + 1e-5)
        bias = beta - mean * scale
    else:
        scale = jnp.ones((cout,), jnp.float32)
        bias = (0.1 * jax.random.normal(k6, (cout,), jnp.float32)
                if has_bias else jnp.zeros((cout,), jnp.float32))
    # Weights stored in bf16 so the per-call MXU cast is a no-op.
    return w.astype(jnp.bfloat16), scale, bias


def build_params(key, cin, c_stem1, c_stem2, c3, c4, inner, hw, out_planes):
    ks = jax.random.split(key, 16)
    ctx = {
        "reduce":     _conv_bn(ks[0], c4, inner),
        "intra1":     _conv_bn(ks[1], inner, inner),
        "intra2":     _conv_bn(ks[2], inner, hw),
        "intra3":     _conv_bn(ks[3], hw, hw),
        "transform":  _conv_bn(ks[4], hw, hw),
        "intra_post": _conv_bn(ks[5], inner, inner),
        "inter_post": _conv_bn(ks[6], inner, inner),
    }
    return {
        "stem1":  _conv_bn(ks[7], 9 * cin, c_stem1),
        "stem2":  _conv_bn(ks[8], 9 * c_stem1, c_stem2),
        "layer3": _conv_bn(ks[9], 9 * c_stem2, c3),
        "layer4": _conv_bn(ks[10], c3, c4),
        "context": ctx,
        "head1":  _conv_bn(ks[11], 9 * (c4 + 2 * inner), inner),
        "head2":  _conv_bn(ks[12], inner, out_planes, has_bn=False, has_bias=True),
        "aux1":   _conv_bn(ks[13], 9 * c3, inner),
        "aux2":   _conv_bn(ks[14], inner, out_planes, has_bn=False, has_bias=True),
    }


# ----------------------------------------------------------------------------
if __name__ == "__main__":
    # Small, self-consistent configuration (real model: 2048/1024/512/3600):
    B, CIN, H, W = 2, 3, 32, 32          # input image (NCHW)
    C_STEM1, C_STEM2 = 16, 32
    C3, C4, INNER = 64, 128, 32          # stand-ins for 1024 / 2048 / 512
    OUT_PLANES = 8
    HF, WF = H // 8, W // 8              # output-stride-8 feature map
    HW = HF * WF                         # stand-in for the hard-coded 3600

    key = jax.random.PRNGKey(0)
    pkey, dkey = jax.random.split(key)
    params = build_params(pkey, CIN, C_STEM1, C_STEM2, C3, C4, INNER, HW, OUT_PLANES)
    data = jax.random.normal(dkey, (B, CIN, H, W), jnp.float32)

    fwd = jax.jit(cpnet_forward, static_argnames=("with_aux", "with_sim_map"))

    # Inference path (label=None semantics): only softmax_fm is materialized.
    softmax_fm, aux_fm, sim_map = fwd(data, params)
    jax.block_until_ready(softmax_fm)
    assert softmax_fm.shape == (B, OUT_PLANES, H, W)
    assert aux_fm is None and sim_map is None
    # log_softmax sanity: exp sums to 1 along class dim
    probs_sum = jnp.sum(jnp.exp(softmax_fm), axis=1)
    assert bool(jnp.allclose(probs_sum, 1.0, atol=1e-4))

    # Full path (all PyTorch-forward intermediates) for shape validation.
    softmax2, aux2, sim2 = fwd(data, params, with_aux=True, with_sim_map=True)
    jax.block_until_ready((softmax2, aux2, sim2))
    assert aux2.shape == (B, OUT_PLANES, H, W)
    assert sim2.shape == (B, HW, HW)
    assert bool(jnp.allclose(softmax_fm, softmax2, atol=1e-3, rtol=1e-3))
    s2 = sim2.astype(jnp.float32)
    assert bool(jnp.all((s2 >= 0.0) & (s2 <= 1.0)))

    print("KERNEL_OK")
</pallas_src>

<mosaic_0001>
module attributes {stable_mosaic.version = 11 : i64} {
  func.func @_matmul_affine_kernel(%arg0: i32, %arg1: i32, %arg2: i32, %arg3: memref<512x128xbf16, #tpu.memory_space<vmem>>, %arg4: memref<128x128xbf16, #tpu.memory_space<vmem>>, %arg5: memref<1x128xf32, #tpu.memory_space<vmem>>, %arg6: memref<1x128xf32, #tpu.memory_space<vmem>>, %arg7: memref<512x128xbf16, #tpu.memory_space<vmem>>, %arg8: memref<512x128xf32, #tpu.memory_space<vmem>>) attributes {dimension_semantics = [#tpu.dimension_semantics<parallel>, #tpu.dimension_semantics<parallel>, #tpu.dimension_semantics<arbitrary>], iteration_bounds = array<i64: 1, 1, 1>, scalar_prefetch = 0 : i64, scratch_operands = 1 : i64, tpu.core_type = #tpu.core_type<tc>, window_params = [{transform_indices = @transform_0, window_bounds = array<i64: 512, 128>}, {transform_indices = @transform_1, window_bounds = array<i64: 128, 128>}, {transform_indices = @transform_2, window_bounds = array<i64: 1, 128>}, {transform_indices = @transform_3, window_bounds = array<i64: 1, 128>}, {transform_indices = @transform_4, window_bounds = array<i64: 512, 128>}]} {
    %c0_i32 = arith.constant 0 : i32
    %0 = arith.cmpi eq, %arg2, %c0_i32 : i32
    %1 = arith.extui %0 : i1 to i32
    %c0_i32_0 = arith.constant 0 : i32
    %2 = arith.cmpi ne, %1, %c0_i32_0 : i32
    scf.if %2 {
      %cst_10 = arith.constant 0.000000e+00 : f32
      %12 = vector.broadcast %cst_10 : f32 to vector<512x128xf32>
      %c0_11 = arith.constant 0 : index
      %c0_12 = arith.constant 0 : index
      %13 = vector.load %arg8[%c0_11, %c0_12] : memref<512x128xf32, #tpu.memory_space<vmem>>, vector<512x128xf32>
      tpu.vector_store %arg8[%c0_11, %c0_12], %12 {strides = array<i32>} : memref<512x128xf32, #tpu.memory_space<vmem>>, vector<512x128xf32>,
    } else {
    }
    %c0 = arith.constant 0 : index
    %c0_1 = arith.constant 0 : index
    %3 = vector.load %arg8[%c0, %c0_1] : memref<512x128xf32, #tpu.memory_space<vmem>>, vector<512x128xf32>
    %c0_2 = arith.constant 0 : index
    %c0_3 = arith.constant 0 : index
    %4 = vector.load %arg3[%c0_2, %c0_3] : memref<512x128xbf16, #tpu.memory_space<vmem>>, vector<512x128xbf16>
    %c0_4 = arith.constant 0 : index
    %c0_5 = arith.constant 0 : index
    %5 = vector.load %arg4[%c0_4, %c0_5] : memref<128x128xbf16, #tpu.memory_space<vmem>>, vector<128x128xbf16>
    %cst = arith.constant dense<0.000000e+00> : vector<512x128xf32>
    %6 = tpu.matmul %4, %5, %cst {dimension_numbers = #tpu.dot_dimension_numbers<[1], [0], [0], [1], [0, 0, 1, 1], [], []>} : vector<512x128xbf16>, vector<128x128xbf16>, vector<512x128xf32> -> vector<512x128xf32>
    %7 = arith.addf %3, %6 : vector<512x128xf32>
    %c0_6 = arith.constant 0 : index
    %c0_7 = arith.constant 0 : index
    %8 = vector.load %arg8[%c0_6, %c0_7] : memref<512x128xf32, #tpu.memory_space<vmem>>, vector<512x128xf32>
    tpu.vector_store %arg8[%c0_6, %c0_7], %7 {strides = array<i32>} : memref<512x128xf32, #tpu.memory_space<vmem>>, vector<512x128xf32>,
    %c0_i32_8 = arith.constant 0 : i32
    %9 = arith.cmpi eq, %arg2, %c0_i32_8 : i32
    %10 = arith.extui %9 : i1 to i32
    %c0_i32_9 = arith.constant 0 : i32
    %11 = arith.cmpi ne, %10, %c0_i32_9 : i32
    scf.if %11 {
      %c0_10 = arith.constant 0 : index
      %c0_11 = arith.constant 0 : index
      %12 = vector.load %arg8[%c0_10, %c0_11] : memref<512x128xf32, #tpu.memory_space<vmem>>, vector<512x128xf32>
      %c0_12 = arith.constant 0 : index
      %c0_13 = arith.constant 0 : index
      %13 = vector.load %arg5[%c0_12, %c0_13] : memref<1x128xf32, #tpu.memory_space<vmem>>, vector<1x128xf32>
      %14 = vector.broadcast %13 : vector<1x128xf32> to vector<512x128xf32>
      %15 = arith.mulf %12, %14 : vector<512x128xf32>
      %c0_14 = arith.constant 0 : index
      %c0_15 = arith.constant 0 : index
      %16 = vector.load %arg6[%c0_14, %c0_15] : memref<1x128xf32, #tpu.memory_space<vmem>>, vector<1x128xf32>
      %17 = vector.broadcast %16 : vector<1x128xf32> to vector<512x128xf32>
      %18 = arith.addf %15, %17 : vector<512x128xf32>
      %cst_16 = arith.constant 0.000000e+00 : f32
      %19 = vector.broadcast %cst_16 : f32 to vector<512x128xf32>
      %20 = arith.maximumf %18, %19 : vector<512x128xf32>
      %21 = arith.truncf %20 : vector<512x128xf32> to vector<512x128xbf16>
      %c0_17 = arith.constant 0 : index
      %c0_18 = arith.constant 0 : index
      %22 = vector.load %arg7[%c0_17, %c0_18] : memref<512x128xbf16, #tpu.memory_space<vmem>>, vector<512x128xbf16>
      tpu.vector_store %arg7[%c0_17, %c0_18], %21 {strides = array<i32>} : memref<512x128xbf16, #tpu.memory_space<vmem>>, vector<512x128xbf16>,
    } else {
    }
    return
  }
  func.func @transform_0(%arg0: i32, %arg1: i32, %arg2: i32) -> (i32, i32) {
    %c0_i32 = arith.constant 0 : i32
    return %arg0, %arg2 : i32, i32
  }
  func.func @transform_1(%arg0: i32, %arg1: i32, %arg2: i32) -> (i32, i32) {
    %c0_i32 = arith.constant 0 : i32
    return %arg2, %arg1 : i32, i32
  }
  func.func @transform_2(%arg0: i32, %arg1: i32, %arg2: i32) -> (i32, i32) {
    %c0_i32 = arith.constant 0 : i32
    %c0_i32_0 = arith.constant 0 : i32
    return %c0_i32, %arg1 : i32, i32
  }
  func.func @transform_3(%arg0: i32, %arg1: i32, %arg2: i32) -> (i32, i32) {
    %c0_i32 = arith.constant 0 : i32
    %c0_i32_0 = arith.constant 0 : i32
    return %c0_i32, %arg1 : i32, i32
  }
  func.func @transform_4(%arg0: i32, %arg1: i32, %arg2: i32) -> (i32, i32) {
    %c0_i32 = arith.constant 0 : i32
    return %arg0, %arg1 : i32, i32
  }
}

module attributes {stable_mosaic.version = 11 : i64} {
  func.func @_matmul_affine_kernel(%arg0: i32, %arg1: i32, %arg2: i32, %arg3: memref<128x256xbf16, #tpu.memory_space<vmem>>, %arg4: memref<256x128xbf16, #tpu.memory_space<vmem>>, %arg5: memref<1x128xf32, #tpu.memory_space<vmem>>, %arg6: memref<1x128xf32, #tpu.memory_space<vmem>>, %arg7: memref<128x128xbf16, #tpu.memory_space<vmem>>, %arg8: memref<128x128xf32, #tpu.memory_space<vmem>>) attributes {dimension_semantics = [#tpu.dimension_semantics<parallel>, #tpu.dimension_semantics<parallel>, #tpu.dimension_semantics<arbitrary>], iteration_bounds = array<i64: 1, 1, 1>, scalar_prefetch = 0 : i64, scratch_operands = 1 : i64, tpu.core_type = #tpu.core_type<tc>, window_params = [{transform_indices = @transform_0, window_bounds = array<i64: 128, 256>}, {transform_indices = @transform_1, window_bounds = array<i64: 256, 128>}, {transform_indices = @transform_2, window_bounds = array<i64: 1, 128>}, {transform_indices = @transform_3, window_bounds = array<i64: 1, 128>}, {transform_indices = @transform_4, window_bounds = array<i64: 128, 128>}]} {
    %c0_i32 = arith.constant 0 : i32
    %0 = arith.cmpi eq, %arg2, %c0_i32 : i32
    %1 = arith.extui %0 : i1 to i32
    %c0_i32_0 = arith.constant 0 : i32
    %2 = arith.cmpi ne, %1, %c0_i32_0 : i32
    scf.if %2 {
      %cst_10 = arith.constant 0.000000e+00 : f32
      %12 = vector.broadcast %cst_10 : f32 to vector<128x128xf32>
      %c0_11 = arith.constant 0 : index
      %c0_12 = arith.constant 0 : index
      %13 = vector.load %arg8[%c0_11, %c0_12] : memref<128x128xf32, #tpu.memory_space<vmem>>, vector<128x128xf32>
      tpu.vector_store %arg8[%c0_11, %c0_12], %12 {strides = array<i32>} : memref<128x128xf32, #tpu.memory_space<vmem>>, vector<128x128xf32>,
    } else {
    }
    %c0 = arith.constant 0 : index
    %c0_1 = arith.constant 0 : index
    %3 = vector.load %arg8[%c0, %c0_1] : memref<128x128xf32, #tpu.memory_space<vmem>>, vector<128x128xf32>
    %c0_2 = arith.constant 0 : index
    %c0_3 = arith.constant 0 : index
    %4 = vector.load %arg3[%c0_2, %c0_3] : memref<128x256xbf16, #tpu.memory_space<vmem>>, vector<128x256xbf16>
    %c0_4 = arith.constant 0 : index
    %c0_5 = arith.constant 0 : index
    %5 = vector.load %arg4[%c0_4, %c0_5] : memref<256x128xbf16, #tpu.memory_space<vmem>>, vector<256x128xbf16>
    %cst = arith.constant dense<0.000000e+00> : vector<128x128xf32>
    %6 = tpu.matmul %4, %5, %cst {dimension_numbers = #tpu.dot_dimension_numbers<[1], [0], [0], [1], [0, 0, 1, 1], [], []>} : vector<128x256xbf16>, vector<256x128xbf16>, vector<128x128xf32> -> vector<128x128xf32>
    %7 = arith.addf %3, %6 : vector<128x128xf32>
    %c0_6 = arith.constant 0 : index
    %c0_7 = arith.constant 0 : index
    %8 = vector.load %arg8[%c0_6, %c0_7] : memref<128x128xf32, #tpu.memory_space<vmem>>, vector<128x128xf32>
    tpu.vector_store %arg8[%c0_6, %c0_7], %7 {strides = array<i32>} : memref<128x128xf32, #tpu.memory_space<vmem>>, vector<128x128xf32>,
    %c0_i32_8 = arith.constant 0 : i32
    %9 = arith.cmpi eq, %arg2, %c0_i32_8 : i32
    %10 = arith.extui %9 : i1 to i32
    %c0_i32_9 = arith.constant 0 : i32
    %11 = arith.cmpi ne, %10, %c0_i32_9 : i32
    scf.if %11 {
      %c0_10 = arith.constant 0 : index
      %c0_11 = arith.constant 0 : index
      %12 = vector.load %arg8[%c0_10, %c0_11] : memref<128x128xf32, #tpu.memory_space<vmem>>, vector<128x128xf32>
      %c0_12 = arith.constant 0 : index
      %c0_13 = arith.constant 0 : index
      %13 = vector.load %arg5[%c0_12, %c0_13] : memref<1x128xf32, #tpu.memory_space<vmem>>, vector<1x128xf32>
      %14 = vector.broadcast %13 : vector<1x128xf32> to vector<128x128xf32>
      %15 = arith.mulf %12, %14 : vector<128x128xf32>
      %c0_14 = arith.constant 0 : index
      %c0_15 = arith.constant 0 : index
      %16 = vector.load %arg6[%c0_14, %c0_15] : memref<1x128xf32, #tpu.memory_space<vmem>>, vector<1x128xf32>
      %17 = vector.broadcast %16 : vector<1x128xf32> to vector<128x128xf32>
      %18 = arith.addf %15, %17 : vector<128x128xf32>
      %cst_16 = arith.constant 0.000000e+00 : f32
      %19 = vector.broadcast %cst_16 : f32 to vector<128x128xf32>
      %20 = arith.maximumf %18, %19 : vector<128x128xf32>
      %21 = arith.truncf %20 : vector<128x128xf32> to vector<128x128xbf16>
      %c0_17 = arith.constant 0 : index
      %c0_18 = arith.constant 0 : index
      %22 = vector.load %arg7[%c0_17, %c0_18] : memref<128x128xbf16, #tpu.memory_space<vmem>>, vector<128x128xbf16>
      tpu.vector_store %arg7[%c0_17, %c0_18], %21 {strides = array<i32>} : memref<128x128xbf16, #tpu.memory_space<vmem>>, vector<128x128xbf16>,
    } else {
    }
    return
  }
  func.func @transform_0(%arg0: i32, %arg1: i32, %arg2: i32) -> (i32, i32) {
    %c0_i32 = arith.constant 0 : i32
    return %arg0, %arg2 : i32, i32
  }
  func.func @transform_1(%arg0: i32, %arg1: i32, %arg2: i32) -> (i32, i32) {
    %c0_i32 = arith.constant 0 : i32
    return %arg2, %arg1 : i32, i32
  }
  func.func @transform_2(%arg0: i32, %arg1: i32, %arg2: i32) -> (i32, i32) {
    %c0_i32 = arith.constant 0 : i32
    %c0_i32_0 = arith.constant 0 : i32
    return %c0_i32, %arg1 : i32, i32
  }
  func.func @transform_3(%arg0: i32, %arg1: i32, %arg2: i32) -> (i32, i32) {
    %c0_i32 = arith.constant 0 : i32
    %c0_i32_0 = arith.constant 0 : i32
    return %c0_i32, %arg1 : i32, i32
  }
  func.func @transform_4(%arg0: i32, %arg1: i32, %arg2: i32) -> (i32, i32) {
    %c0_i32 = arith.constant 0 : i32
    return %arg0, %arg1 : i32, i32
  }
}

module attributes {stable_mosaic.version = 11 : i64} {
  func.func @_matmul_affine_kernel(%arg0: i32, %arg1: i32, %arg2: i32, %arg3: memref<32x128xbf16, #tpu.memory_space<vmem>>, %arg4: memref<128x128xbf16, #tpu.memory_space<vmem>>, %arg5: memref<1x128xf32, #tpu.memory_space<vmem>>, %arg6: memref<1x128xf32, #tpu.memory_space<vmem>>, %arg7: memref<32x128xbf16, #tpu.memory_space<vmem>>, %arg8: memref<32x128xf32, #tpu.memory_space<vmem>>) attributes {dimension_semantics = [#tpu.dimension_semantics<parallel>, #tpu.dimension_semantics<parallel>, #tpu.dimension_semantics<arbitrary>], iteration_bounds = array<i64: 1, 1, 1>, scalar_prefetch = 0 : i64, scratch_operands = 1 : i64, tpu.core_type = #tpu.core_type<tc>, window_params = [{transform_indices = @transform_0, window_bounds = array<i64: 32, 128>}, {transform_indices = @transform_1, window_bounds = array<i64: 128, 128>}, {transform_indices = @transform_2, window_bounds = array<i64: 1, 128>}, {transform_indices = @transform_3, window_bounds = array<i64: 1, 128>}, {transform_indices = @transform_4, window_bounds = array<i64: 32, 128>}]} {
    %c0_i32 = arith.constant 0 : i32
    %0 = arith.cmpi eq, %arg2, %c0_i32 : i32
    %1 = arith.extui %0 : i1 to i32
    %c0_i32_0 = arith.constant 0 : i32
    %2 = arith.cmpi ne, %1, %c0_i32_0 : i32
    scf.if %2 {
      %cst_10 = arith.constant 0.000000e+00 : f32
      %12 = vector.broadcast %cst_10 : f32 to vector<32x128xf32>
      %c0_11 = arith.constant 0 : index
      %c0_12 = arith.constant 0 : index
      %13 = vector.load %arg8[%c0_11, %c0_12] : memref<32x128xf32, #tpu.memory_space<vmem>>, vector<32x128xf32>
      tpu.vector_store %arg8[%c0_11, %c0_12], %12 {strides = array<i32>} : memref<32x128xf32, #tpu.memory_space<vmem>>, vector<32x128xf32>,
    } else {
    }
    %c0 = arith.constant 0 : index
    %c0_1 = arith.constant 0 : index
    %3 = vector.load %arg8[%c0, %c0_1] : memref<32x128xf32, #tpu.memory_space<vmem>>, vector<32x128xf32>
    %c0_2 = arith.constant 0 : index
    %c0_3 = arith.constant 0 : index
    %4 = vector.load %arg3[%c0_2, %c0_3] : memref<32x128xbf16, #tpu.memory_space<vmem>>, vector<32x128xbf16>
    %c0_4 = arith.constant 0 : index
    %c0_5 = arith.constant 0 : index
    %5 = vector.load %arg4[%c0_4, %c0_5] : memref<128x128xbf16, #tpu.memory_space<vmem>>, vector<128x128xbf16>
    %cst = arith.constant dense<0.000000e+00> : vector<32x128xf32>
    %6 = tpu.matmul %4, %5, %cst {dimension_numbers = #tpu.dot_dimension_numbers<[1], [0], [0], [1], [0, 0, 1, 1], [], []>} : vector<32x128xbf16>, vector<128x128xbf16>, vector<32x128xf32> -> vector<32x128xf32>
    %7 = arith.addf %3, %6 : vector<32x128xf32>
    %c0_6 = arith.constant 0 : index
    %c0_7 = arith.constant 0 : index
    %8 = vector.load %arg8[%c0_6, %c0_7] : memref<32x128xf32, #tpu.memory_space<vmem>>, vector<32x128xf32>
    tpu.vector_store %arg8[%c0_6, %c0_7], %7 {strides = array<i32>} : memref<32x128xf32, #tpu.memory_space<vmem>>, vector<32x128xf32>,
    %c0_i32_8 = arith.constant 0 : i32
    %9 = arith.cmpi eq, %arg2, %c0_i32_8 : i32
    %10 = arith.extui %9 : i1 to i32
    %c0_i32_9 = arith.constant 0 : i32
    %11 = arith.cmpi ne, %10, %c0_i32_9 : i32
    scf.if %11 {
      %c0_10 = arith.constant 0 : index
      %c0_11 = arith.constant 0 : index
      %12 = vector.load %arg8[%c0_10, %c0_11] : memref<32x128xf32, #tpu.memory_space<vmem>>, vector<32x128xf32>
      %c0_12 = arith.constant 0 : index
      %c0_13 = arith.constant 0 : index
      %13 = vector.load %arg5[%c0_12, %c0_13] : memref<1x128xf32, #tpu.memory_space<vmem>>, vector<1x128xf32>
      %14 = vector.broadcast %13 : vector<1x128xf32> to vector<32x128xf32>
      %15 = arith.mulf %12, %14 : vector<32x128xf32>
      %c0_14 = arith.constant 0 : index
      %c0_15 = arith.constant 0 : index
      %16 = vector.load %arg6[%c0_14, %c0_15] : memref<1x128xf32, #tpu.memory_space<vmem>>, vector<1x128xf32>
      %17 = vector.broadcast %16 : vector<1x128xf32> to vector<32x128xf32>
      %18 = arith.addf %15, %17 : vector<32x128xf32>
      %cst_16 = arith.constant 0.000000e+00 : f32
      %19 = vector.broadcast %cst_16 : f32 to vector<32x128xf32>
      %20 = arith.maximumf %18, %19 : vector<32x128xf32>
      %21 = arith.truncf %20 : vector<32x128xf32> to vector<32x128xbf16>
      %c0_17 = arith.constant 0 : index
      %c0_18 = arith.constant 0 : index
      %22 = vector.load %arg7[%c0_17, %c0_18] : memref<32x128xbf16, #tpu.memory_space<vmem>>, vector<32x128xbf16>
      tpu.vector_store %arg7[%c0_17, %c0_18], %21 {strides = array<i32>} : memref<32x128xbf16, #tpu.memory_space<vmem>>, vector<32x128xbf16>,
    } else {
    }
    return
  }
  func.func @transform_0(%arg0: i32, %arg1: i32, %arg2: i32) -> (i32, i32) {
    %c0_i32 = arith.constant 0 : i32
    return %arg0, %arg2 : i32, i32
  }
  func.func @transform_1(%arg0: i32, %arg1: i32, %arg2: i32) -> (i32, i32) {
    %c0_i32 = arith.constant 0 : i32
    return %arg2, %arg1 : i32, i32
  }
  func.func @transform_2(%arg0: i32, %arg1: i32, %arg2: i32) -> (i32, i32) {
    %c0_i32 = arith.constant 0 : i32
    %c0_i32_0 = arith.constant 0 : i32
    return %c0_i32, %arg1 : i32, i32
  }
  func.func @transform_3(%arg0: i32, %arg1: i32, %arg2: i32) -> (i32, i32) {
    %c0_i32 = arith.constant 0 : i32
    %c0_i32_0 = arith.constant 0 : i32
    return %c0_i32, %arg1 : i32, i32
  }
  func.func @transform_4(%arg0: i32, %arg1: i32, %arg2: i32) -> (i32, i32) {
    %c0_i32 = arith.constant 0 : i32
    return %arg0, %arg1 : i32, i32
  }
}

module attributes {stable_mosaic.version = 11 : i64} {
  func.func @_matmul_affine_kernel(%arg0: i32, %arg1: i32, %arg2: i32, %arg3: memref<32x512xbf16, #tpu.memory_space<vmem>>, %arg4: memref<512x128xbf16, #tpu.memory_space<vmem>>, %arg5: memref<1x128xf32, #tpu.memory_space<vmem>>, %arg6: memref<1x128xf32, #tpu.memory_space<vmem>>, %arg7: memref<32x128xbf16, #tpu.memory_space<vmem>>, %arg8: memref<32x128xf32, #tpu.memory_space<vmem>>) attributes {dimension_semantics = [#tpu.dimension_semantics<parallel>, #tpu.dimension_semantics<parallel>, #tpu.dimension_semantics<arbitrary>], iteration_bounds = array<i64: 1, 1, 1>, scalar_prefetch = 0 : i64, scratch_operands = 1 : i64, tpu.core_type = #tpu.core_type<tc>, window_params = [{transform_indices = @transform_0, window_bounds = array<i64: 32, 512>}, {transform_indices = @transform_1, window_bounds = array<i64: 512, 128>}, {transform_indices = @transform_2, window_bounds = array<i64: 1, 128>}, {transform_indices = @transform_3, window_bounds = array<i64: 1, 128>}, {transform_indices = @transform_4, window_bounds = array<i64: 32, 128>}]} {
    %c0_i32 = arith.constant 0 : i32
    %0 = arith.cmpi eq, %arg2, %c0_i32 : i32
    %1 = arith.extui %0 : i1 to i32
    %c0_i32_0 = arith.constant 0 : i32
    %2 = arith.cmpi ne, %1, %c0_i32_0 : i32
    scf.if %2 {
      %cst_10 = arith.constant 0.000000e+00 : f32
      %12 = vector.broadcast %cst_10 : f32 to vector<32x128xf32>
      %c0_11 = arith.constant 0 : index
      %c0_12 = arith.constant 0 : index
      %13 = vector.load %arg8[%c0_11, %c0_12] : memref<32x128xf32, #tpu.memory_space<vmem>>, vector<32x128xf32>
      tpu.vector_store %arg8[%c0_11, %c0_12], %12 {strides = array<i32>} : memref<32x128xf32, #tpu.memory_space<vmem>>, vector<32x128xf32>,
    } else {
    }
    %c0 = arith.constant 0 : index
    %c0_1 = arith.constant 0 : index
    %3 = vector.load %arg8[%c0, %c0_1] : memref<32x128xf32, #tpu.memory_space<vmem>>, vector<32x128xf32>
    %c0_2 = arith.constant 0 : index
    %c0_3 = arith.constant 0 : index
    %4 = vector.load %arg3[%c0_2, %c0_3] : memref<32x512xbf16, #tpu.memory_space<vmem>>, vector<32x512xbf16>
    %c0_4 = arith.constant 0 : index
    %c0_5 = arith.constant 0 : index
    %5 = vector.load %arg4[%c0_4, %c0_5] : memref<512x128xbf16, #tpu.memory_space<vmem>>, vector<512x128xbf16>
    %cst = arith.constant dense<0.000000e+00> : vector<32x128xf32>
    %6 = tpu.matmul %4, %5, %cst {dimension_numbers = #tpu.dot_dimension_numbers<[1], [0], [0], [1], [0, 0, 1, 1], [], []>} : vector<32x512xbf16>, vector<512x128xbf16>, vector<32x128xf32> -> vector<32x128xf32>
    %7 = arith.addf %3, %6 : vector<32x128xf32>
    %c0_6 = arith.constant 0 : index
    %c0_7 = arith.constant 0 : index
    %8 = vector.load %arg8[%c0_6, %c0_7] : memref<32x128xf32, #tpu.memory_space<vmem>>, vector<32x128xf32>
    tpu.vector_store %arg8[%c0_6, %c0_7], %7 {strides = array<i32>} : memref<32x128xf32, #tpu.memory_space<vmem>>, vector<32x128xf32>,
    %c0_i32_8 = arith.constant 0 : i32
    %9 = arith.cmpi eq, %arg2, %c0_i32_8 : i32
    %10 = arith.extui %9 : i1 to i32
    %c0_i32_9 = arith.constant 0 : i32
    %11 = arith.cmpi ne, %10, %c0_i32_9 : i32
    scf.if %11 {
      %c0_10 = arith.constant 0 : index
      %c0_11 = arith.constant 0 : index
      %12 = vector.load %arg8[%c0_10, %c0_11] : memref<32x128xf32, #tpu.memory_space<vmem>>, vector<32x128xf32>
      %c0_12 = arith.constant 0 : index
      %c0_13 = arith.constant 0 : index
      %13 = vector.load %arg5[%c0_12, %c0_13] : memref<1x128xf32, #tpu.memory_space<vmem>>, vector<1x128xf32>
      %14 = vector.broadcast %13 : vector<1x128xf32> to vector<32x128xf32>
      %15 = arith.mulf %12, %14 : vector<32x128xf32>
      %c0_14 = arith.constant 0 : index
      %c0_15 = arith.constant 0 : index
      %16 = vector.load %arg6[%c0_14, %c0_15] : memref<1x128xf32, #tpu.memory_space<vmem>>, vector<1x128xf32>
      %17 = vector.broadcast %16 : vector<1x128xf32> to vector<32x128xf32>
      %18 = arith.addf %15, %17 : vector<32x128xf32>
      %cst_16 = arith.constant 0.000000e+00 : f32
      %19 = vector.broadcast %cst_16 : f32 to vector<32x128xf32>
      %20 = arith.maximumf %18, %19 : vector<32x128xf32>
      %21 = arith.truncf %20 : vector<32x128xf32> to vector<32x128xbf16>
      %c0_17 = arith.constant 0 : index
      %c0_18 = arith.constant 0 : index
      %22 = vector.load %arg7[%c0_17, %c0_18] : memref<32x128xbf16, #tpu.memory_space<vmem>>, vector<32x128xbf16>
      tpu.vector_store %arg7[%c0_17, %c0_18], %21 {strides = array<i32>} : memref<32x128xbf16, #tpu.memory_space<vmem>>, vector<32x128xbf16>,
    } else {
    }
    return
  }
  func.func @transform_0(%arg0: i32, %arg1: i32, %arg2: i32) -> (i32, i32) {
    %c0_i32 = arith.constant 0 : i32
    return %arg0, %arg2 : i32, i32
  }
  func.func @transform_1(%arg0: i32, %arg1: i32, %arg2: i32) -> (i32, i32) {
    %c0_i32 = arith.constant 0 : i32
    return %arg2, %arg1 : i32, i32
  }
  func.func @transform_2(%arg0: i32, %arg1: i32, %arg2: i32) -> (i32, i32) {
    %c0_i32 = arith.constant 0 : i32
    %c0_i32_0 = arith.constant 0 : i32
    return %c0_i32, %arg1 : i32, i32
  }
  func.func @transform_3(%arg0: i32, %arg1: i32, %arg2: i32) -> (i32, i32) {
    %c0_i32 = arith.constant 0 : i32
    %c0_i32_0 = arith.constant 0 : i32
    return %c0_i32, %arg1 : i32, i32
  }
  func.func @transform_4(%arg0: i32, %arg1: i32, %arg2: i32) -> (i32, i32) {
    %c0_i32 = arith.constant 0 : i32
    return %arg0, %arg1 : i32, i32
  }
}

module attributes {stable_mosaic.version = 11 : i64} {
  func.func @_matmul_affine_kernel(%arg0: i32, %arg1: i32, %arg2: i32, %arg3: memref<32x128xbf16, #tpu.memory_space<vmem>>, %arg4: memref<128x128xbf16, #tpu.memory_space<vmem>>, %arg5: memref<1x128xf32, #tpu.memory_space<vmem>>, %arg6: memref<1x128xf32, #tpu.memory_space<vmem>>, %arg7: memref<32x128xbf16, #tpu.memory_space<vmem>>, %arg8: memref<32x128xbf16, #tpu.memory_space<vmem>>, %arg9: memref<32x128xf32, #tpu.memory_space<vmem>>) attributes {dimension_semantics = [#tpu.dimension_semantics<parallel>, #tpu.dimension_semantics<parallel>, #tpu.dimension_semantics<arbitrary>], iteration_bounds = array<i64: 1, 1, 1>, scalar_prefetch = 0 : i64, scratch_operands = 1 : i64, tpu.core_type = #tpu.core_type<tc>, window_params = [{transform_indices = @transform_0, window_bounds = array<i64: 32, 128>}, {transform_indices = @transform_1, window_bounds = array<i64: 128, 128>}, {transform_indices = @transform_2, window_bounds = array<i64: 1, 128>}, {transform_indices = @transform_3, window_bounds = array<i64: 1, 128>}, {transform_indices = @transform_4, window_bounds = array<i64: 32, 128>}, {transform_indices = @transform_5, window_bounds = array<i64: 32, 128>}]} {
    %c0_i32 = arith.constant 0 : i32
    %0 = arith.cmpi eq, %arg2, %c0_i32 : i32
    %1 = arith.extui %0 : i1 to i32
    %c0_i32_0 = arith.constant 0 : i32
    %2 = arith.cmpi ne, %1, %c0_i32_0 : i32
    scf.if %2 {
      %cst_10 = arith.constant 0.000000e+00 : f32
      %12 = vector.broadcast %cst_10 : f32 to vector<32x128xf32>
      %c0_11 = arith.constant 0 : index
      %c0_12 = arith.constant 0 : index
      %13 = vector.load %arg9[%c0_11, %c0_12] : memref<32x128xf32, #tpu.memory_space<vmem>>, vector<32x128xf32>
      tpu.vector_store %arg9[%c0_11, %c0_12], %12 {strides = array<i32>} : memref<32x128xf32, #tpu.memory_space<vmem>>, vector<32x128xf32>,
    } else {
    }
    %c0 = arith.constant 0 : index
    %c0_1 = arith.constant 0 : index
    %3 = vector.load %arg9[%c0, %c0_1] : memref<32x128xf32, #tpu.memory_space<vmem>>, vector<32x128xf32>
    %c0_2 = arith.constant 0 : index
    %c0_3 = arith.constant 0 : index
    %4 = vector.load %arg3[%c0_2, %c0_3] : memref<32x128xbf16, #tpu.memory_space<vmem>>, vector<32x128xbf16>
    %c0_4 = arith.constant 0 : index
    %c0_5 = arith.constant 0 : index
    %5 = vector.load %arg4[%c0_4, %c0_5] : memref<128x128xbf16, #tpu.memory_space<vmem>>, vector<128x128xbf16>
    %cst = arith.constant dense<0.000000e+00> : vector<32x128xf32>
    %6 = tpu.matmul %4, %5, %cst {dimension_numbers = #tpu.dot_dimension_numbers<[1], [0], [0], [1], [0, 0, 1, 1], [], []>} : vector<32x128xbf16>, vector<128x128xbf16>, vector<32x128xf32> -> vector<32x128xf32>
    %7 = arith.addf %3, %6 : vector<32x128xf32>
    %c0_6 = arith.constant 0 : index
    %c0_7 = arith.constant 0 : index
    %8 = vector.load %arg9[%c0_6, %c0_7] : memref<32x128xf32, #tpu.memory_space<vmem>>, vector<32x128xf32>
    tpu.vector_store %arg9[%c0_6, %c0_7], %7 {strides = array<i32>} : memref<32x128xf32, #tpu.memory_space<vmem>>, vector<32x128xf32>,
    %c0_i32_8 = arith.constant 0 : i32
    %9 = arith.cmpi eq, %arg2, %c0_i32_8 : i32
    %10 = arith.extui %9 : i1 to i32
    %c0_i32_9 = arith.constant 0 : i32
    %11 = arith.cmpi ne, %10, %c0_i32_9 : i32
    scf.if %11 {
      %c0_10 = arith.constant 0 : index
      %c0_11 = arith.constant 0 : index
      %12 = vector.load %arg9[%c0_10, %c0_11] : memref<32x128xf32, #tpu.memory_space<vmem>>, vector<32x128xf32>
      %c0_12 = arith.constant 0 : index
      %c0_13 = arith.constant 0 : index
      %13 = vector.load %arg5[%c0_12, %c0_13] : memref<1x128xf32, #tpu.memory_space<vmem>>, vector<1x128xf32>
      %14 = vector.broadcast %13 : vector<1x128xf32> to vector<32x128xf32>
      %15 = arith.mulf %12, %14 : vector<32x128xf32>
      %c0_14 = arith.constant 0 : index
      %c0_15 = arith.constant 0 : index
      %16 = vector.load %arg6[%c0_14, %c0_15] : memref<1x128xf32, #tpu.memory_space<vmem>>, vector<1x128xf32>
      %17 = vector.broadcast %16 : vector<1x128xf32> to vector<32x128xf32>
      %18 = arith.addf %15, %17 : vector<32x128xf32>
      %19 = arith.truncf %18 : vector<32x128xf32> to vector<32x128xbf16>
      %c0_16 = arith.constant 0 : index
      %c0_17 = arith.constant 0 : index
      %20 = vector.load %arg7[%c0_16, %c0_17] : memref<32x128xbf16, #tpu.memory_space<vmem>>, vector<32x128xbf16>
      tpu.vector_store %arg7[%c0_16, %c0_17], %19 {strides = array<i32>} : memref<32x128xbf16, #tpu.memory_space<vmem>>, vector<32x128xbf16>,
      %21 = arith.negf %18 : vector<32x128xf32>
      %22 = math.exp %21 : vector<32x128xf32>
      %cst_18 = arith.constant 1.000000e+00 : f32
      %23 = vector.broadcast %cst_18 : f32 to vector<32x128xf32>
      %24 = arith.addf %23, %22 : vector<32x128xf32>
      %25 = arith.divf %23, %24 : vector<32x128xf32>
      %26 = arith.truncf %25 : vector<32x128xf32> to vector<32x128xbf16>
      %c0_19 = arith.constant 0 : index
      %c0_20 = arith.constant 0 : index
      %27 = vector.load %arg8[%c0_19, %c0_20] : memref<32x128xbf16, #tpu.memory_space<vmem>>, vector<32x128xbf16>
      tpu.vector_store %arg8[%c0_19, %c0_20], %26 {strides = array<i32>} : memref<32x128xbf16, #tpu.memory_space<vmem>>, vector<32x128xbf16>,
    } else {
    }
    return
  }
  func.func @transform_0(%arg0: i32, %arg1: i32, %arg2: i32) -> (i32, i32) {
    %c0_i32 = arith.constant 0 : i32
    return %arg0, %arg2 : i32, i32
  }
  func.func @transform_1(%arg0: i32, %arg1: i32, %arg2: i32) -> (i32, i32) {
    %c0_i32 = arith.constant 0 : i32
    return %arg2, %arg1 : i32, i32
  }
  func.func @transform_2(%arg0: i32, %arg1: i32, %arg2: i32) -> (i32, i32) {
    %c0_i32 = arith.constant 0 : i32
    %c0_i32_0 = arith.constant 0 : i32
    return %c0_i32, %arg1 : i32, i32
  }
  func.func @transform_3(%arg0: i32, %arg1: i32, %arg2: i32) -> (i32, i32) {
    %c0_i32 = arith.constant 0 : i32
    %c0_i32_0 = arith.constant 0 : i32
    return %c0_i32, %arg1 : i32, i32
  }
  func.func @transform_4(%arg0: i32, %arg1: i32, %arg2: i32) -> (i32, i32) {
    %c0_i32 = arith.constant 0 : i32
    return %arg0, %arg1 : i32, i32
  }
  func.func @transform_5(%arg0: i32, %arg1: i32, %arg2: i32) -> (i32, i32) {
    %c0_i32 = arith.constant 0 : i32
    return %arg0, %arg1 : i32, i32
  }
}

module attributes {stable_mosaic.version = 11 : i64} {
  func.func @_matmul_affine_kernel(%arg0: i32, %arg1: i32, %arg2: i32, %arg3: memref<32x128xbf16, #tpu.memory_space<vmem>>, %arg4: memref<128x128xbf16, #tpu.memory_space<vmem>>, %arg5: memref<1x128xf32, #tpu.memory_space<vmem>>, %arg6: memref<1x128xf32, #tpu.memory_space<vmem>>, %arg7: memref<32x128xbf16, #tpu.memory_space<vmem>>, %arg8: memref<32x128xf32, #tpu.memory_space<vmem>>) attributes {dimension_semantics = [#tpu.dimension_semantics<parallel>, #tpu.dimension_semantics<parallel>, #tpu.dimension_semantics<arbitrary>], iteration_bounds = array<i64: 1, 1, 1>, scalar_prefetch = 0 : i64, scratch_operands = 1 : i64, tpu.core_type = #tpu.core_type<tc>, window_params = [{transform_indices = @transform_0, window_bounds = array<i64: 32, 128>}, {transform_indices = @transform_1, window_bounds = array<i64: 128, 128>}, {transform_indices = @transform_2, window_bounds = array<i64: 1, 128>}, {transform_indices = @transform_3, window_bounds = array<i64: 1, 128>}, {transform_indices = @transform_4, window_bounds = array<i64: 32, 128>}]} {
    %c0_i32 = arith.constant 0 : i32
    %0 = arith.cmpi eq, %arg2, %c0_i32 : i32
    %1 = arith.extui %0 : i1 to i32
    %c0_i32_0 = arith.constant 0 : i32
    %2 = arith.cmpi ne, %1, %c0_i32_0 : i32
    scf.if %2 {
      %cst_10 = arith.constant 0.000000e+00 : f32
      %12 = vector.broadcast %cst_10 : f32 to vector<32x128xf32>
      %c0_11 = arith.constant 0 : index
      %c0_12 = arith.constant 0 : index
      %13 = vector.load %arg8[%c0_11, %c0_12] : memref<32x128xf32, #tpu.memory_space<vmem>>, vector<32x128xf32>
      tpu.vector_store %arg8[%c0_11, %c0_12], %12 {strides = array<i32>} : memref<32x128xf32, #tpu.memory_space<vmem>>, vector<32x128xf32>,
    } else {
    }
    %c0 = arith.constant 0 : index
    %c0_1 = arith.constant 0 : index
    %3 = vector.load %arg8[%c0, %c0_1] : memref<32x128xf32, #tpu.memory_space<vmem>>, vector<32x128xf32>
    %c0_2 = arith.constant 0 : index
    %c0_3 = arith.constant 0 : index
    %4 = vector.load %arg3[%c0_2, %c0_3] : memref<32x128xbf16, #tpu.memory_space<vmem>>, vector<32x128xbf16>
    %c0_4 = arith.constant 0 : index
    %c0_5 = arith.constant 0 : index
    %5 = vector.load %arg4[%c0_4, %c0_5] : memref<128x128xbf16, #tpu.memory_space<vmem>>, vector<128x128xbf16>
    %cst = arith.constant dense<0.000000e+00> : vector<32x128xf32>
    %6 = tpu.matmul %4, %5, %cst {dimension_numbers = #tpu.dot_dimension_numbers<[1], [0], [0], [1], [0, 0, 1, 1], [], []>} : vector<32x128xbf16>, vector<128x128xbf16>, vector<32x128xf32> -> vector<32x128xf32>
    %7 = arith.addf %3, %6 : vector<32x128xf32>
    %c0_6 = arith.constant 0 : index
    %c0_7 = arith.constant 0 : index
    %8 = vector.load %arg8[%c0_6, %c0_7] : memref<32x128xf32, #tpu.memory_space<vmem>>, vector<32x128xf32>
    tpu.vector_store %arg8[%c0_6, %c0_7], %7 {strides = array<i32>} : memref<32x128xf32, #tpu.memory_space<vmem>>, vector<32x128xf32>,
    %c0_i32_8 = arith.constant 0 : i32
    %9 = arith.cmpi eq, %arg2, %c0_i32_8 : i32
    %10 = arith.extui %9 : i1 to i32
    %c0_i32_9 = arith.constant 0 : i32
    %11 = arith.cmpi ne, %10, %c0_i32_9 : i32
    scf.if %11 {
      %c0_10 = arith.constant 0 : index
      %c0_11 = arith.constant 0 : index
      %12 = vector.load %arg8[%c0_10, %c0_11] : memref<32x128xf32, #tpu.memory_space<vmem>>, vector<32x128xf32>
      %c0_12 = arith.constant 0 : index
      %c0_13 = arith.constant 0 : index
      %13 = vector.load %arg5[%c0_12, %c0_13] : memref<1x128xf32, #tpu.memory_space<vmem>>, vector<1x128xf32>
      %14 = vector.broadcast %13 : vector<1x128xf32> to vector<32x128xf32>
      %15 = arith.mulf %12, %14 : vector<32x128xf32>
      %c0_14 = arith.constant 0 : index
      %c0_15 = arith.constant 0 : index
      %16 = vector.load %arg6[%c0_14, %c0_15] : memref<1x128xf32, #tpu.memory_space<vmem>>, vector<1x128xf32>
      %17 = vector.broadcast %16 : vector<1x128xf32> to vector<32x128xf32>
      %18 = arith.addf %15, %17 : vector<32x128xf32>
      %19 = arith.negf %18 : vector<32x128xf32>
      %20 = math.exp %19 : vector<32x128xf32>
      %cst_16 = arith.constant 1.000000e+00 : f32
      %21 = vector.broadcast %cst_16 : f32 to vector<32x128xf32>
      %22 = arith.addf %21, %20 : vector<32x128xf32>
      %23 = arith.divf %21, %22 : vector<32x128xf32>
      %24 = arith.truncf %23 : vector<32x128xf32> to vector<32x128xbf16>
      %c0_17 = arith.constant 0 : index
      %c0_18 = arith.constant 0 : index
      %25 = vector.load %arg7[%c0_17, %c0_18] : memref<32x128xbf16, #tpu.memory_space<vmem>>, vector<32x128xbf16>
      tpu.vector_store %arg7[%c0_17, %c0_18], %24 {strides = array<i32>} : memref<32x128xbf16, #tpu.memory_space<vmem>>, vector<32x128xbf16>,
    } else {
    }
    return
  }
  func.func @transform_0(%arg0: i32, %arg1: i32, %arg2: i32) -> (i32, i32) {
    %c0_i32 = arith.constant 0 : i32
    return %arg0, %arg2 : i32, i32
  }
  func.func @transform_1(%arg0: i32, %arg1: i32, %arg2: i32) -> (i32, i32) {
    %c0_i32 = arith.constant 0 : i32
    return %arg2, %arg1 : i32, i32
  }
  func.func @transform_2(%arg0: i32, %arg1: i32, %arg2: i32) -> (i32, i32) {
    %c0_i32 = arith.constant 0 : i32
    %c0_i32_0 = arith.constant 0 : i32
    return %c0_i32, %arg1 : i32, i32
  }
  func.func @transform_3(%arg0: i32, %arg1: i32, %arg2: i32) -> (i32, i32) {
    %c0_i32 = arith.constant 0 : i32
    %c0_i32_0 = arith.constant 0 : i32
    return %c0_i32, %arg1 : i32, i32
  }
  func.func @transform_4(%arg0: i32, %arg1: i32, %arg2: i32) -> (i32, i32) {
    %c0_i32 = arith.constant 0 : i32
    return %arg0, %arg1 : i32, i32
  }
}

module attributes {stable_mosaic.version = 11 : i64} {
  func.func @_ctx_bmm_kernel(%arg0: i32, %arg1: i32, %arg2: i32, %arg3: memref<1x16x128xbf16, #tpu.memory_space<vmem>>, %arg4: memref<1x16x128xbf16, #tpu.memory_space<vmem>>, %arg5: memref<1x128x32xbf16, #tpu.memory_space<vmem>>, %arg6: memref<1x16x32xbf16, #tpu.memory_space<vmem>>, %arg7: memref<1x16x32xbf16, #tpu.memory_space<vmem>>, %arg8: memref<32x32xf32, #tpu.memory_space<vmem>>) attributes {dimension_semantics = [#tpu.dimension_semantics<parallel>, #tpu.dimension_semantics<parallel>, #tpu.dimension_semantics<arbitrary>], iteration_bounds = array<i64: 2, 1, 1>, scalar_prefetch = 0 : i64, scratch_operands = 1 : i64, tpu.core_type = #tpu.core_type<tc>, window_params = [{transform_indices = @transform_0, window_bounds = array<i64: 1, 16, 128>}, {transform_indices = @transform_1, window_bounds = array<i64: 1, 16, 128>}, {transform_indices = @transform_2, window_bounds = array<i64: 1, 128, 32>}, {transform_indices = @transform_3, window_bounds = array<i64: 1, 16, 32>}, {transform_indices = @transform_4, window_bounds = array<i64: 1, 16, 32>}]} {
    %c0_i32 = arith.constant 0 : i32
    %0 = arith.cmpi eq, %arg2, %c0_i32 : i32
    %1 = arith.extui %0 : i1 to i32
    %c0_i32_0 = arith.constant 0 : i32
    %2 = arith.cmpi ne, %1, %c0_i32_0 : i32
    scf.if %2 {
      %cst_14 = arith.constant 0.000000e+00 : f32
      %20 = vector.broadcast %cst_14 : f32 to vector<32x32xf32>
      %c0_15 = arith.constant 0 : index
      %c0_16 = arith.constant 0 : index
      %21 = vector.load %arg8[%c0_15, %c0_16] : memref<32x32xf32, #tpu.memory_space<vmem>>, vector<32x32xf32>
      tpu.vector_store %arg8[%c0_15, %c0_16], %20 {strides = array<i32>} : memref<32x32xf32, #tpu.memory_space<vmem>>, vector<32x32xf32>,
    } else {
    }
    %c0 = arith.constant 0 : index
    %c0_1 = arith.constant 0 : index
    %c0_2 = arith.constant 0 : index
    %3 = vector.load %arg3[%c0, %c0_1, %c0_2] : memref<1x16x128xbf16, #tpu.memory_space<vmem>>, vector<1x16x128xbf16>
    %4 = vector.shape_cast %3 : vector<1x16x128xbf16> to vector<16x128xbf16>
    %c0_3 = arith.constant 0 : index
    %c0_4 = arith.constant 0 : index
    %c0_5 = arith.constant 0 : index
    %5 = vector.load %arg4[%c0_3, %c0_4, %c0_5] : memref<1x16x128xbf16, #tpu.memory_space<vmem>>, vector<1x16x128xbf16>
    %6 = vector.shape_cast %5 : vector<1x16x128xbf16> to vector<16x128xbf16>
    %7 = tpu.concatenate %4, %6 in 0 : vector<16x128xbf16>, vector<16x128xbf16> -> vector<32x128xbf16>
    %c128_i32 = arith.constant 128 : i32
    %8 = arith.muli %arg2, %c128_i32 : i32
    %9 = tpu.assume_multiple %8, 128 : i32
    %c0_6 = arith.constant 0 : index
    %10 = arith.index_cast %9 : i32 to index
    %c0_7 = arith.constant 0 : index
    %11 = vector.load %arg5[%c0_6, %10, %c0_7] : memref<1x128x32xbf16, #tpu.memory_space<vmem>>, vector<1x128x32xbf16>
    %12 = vector.shape_cast %11 : vector<1x128x32xbf16> to vector<128x32xbf16>
    %c0_8 = arith.constant 0 : index
    %c0_9 = arith.constant 0 : index
    %13 = vector.load %arg8[%c0_8, %c0_9] : memref<32x32xf32, #tpu.memory_space<vmem>>, vector<32x32xf32>
    %cst = arith.constant dense<0.000000e+00> : vector<32x32xf32>
    %14 = tpu.matmul %7, %12, %cst {dimension_numbers = #tpu.dot_dimension_numbers<[1], [0], [0], [1], [0, 0, 1, 1], [], []>} : vector<32x128xbf16>, vector<128x32xbf16>, vector<32x32xf32> -> vector<32x32xf32>
    %15 = arith.addf %13, %14 : vector<32x32xf32>
    %c0_10 = arith.constant 0 : index
    %c0_11 = arith.constant 0 : index
    %16 = vector.load %arg8[%c0_10, %c0_11] : memref<32x32xf32, #tpu.memory_space<vmem>>, vector<32x32xf32>
    tpu.vector_store %arg8[%c0_10, %c0_11], %15 {strides = array<i32>} : memref<32x32xf32, #tpu.memory_space<vmem>>, vector<32x32xf32>,
    %c0_i32_12 = arith.constant 0 : i32
    %17 = arith.cmpi eq, %arg2, %c0_i32_12 : i32
    %18 = arith.extui %17 : i1 to i32
    %c0_i32_13 = arith.constant 0 : i32
    %19 = arith.cmpi ne, %18, %c0_i32_13 : i32
    scf.if %19 {
      %c0_14 = arith.constant 0 : index
      %c0_15 = arith.constant 0 : index
      %20 = vector.load %arg8[%c0_14, %c0_15] : memref<32x32xf32, #tpu.memory_space<vmem>>, vector<32x32xf32>
      %cst_16 = arith.constant 6.250000e-02 : f32
      %21 = vector.broadcast %cst_16 : f32 to vector<32x32xf32>
      %22 = arith.mulf %20, %21 : vector<32x32xf32>
      %23 = vector.extract_strided_slice %22 {offsets = [0, 0], sizes = [16, 32], strides = [1, 1]} : vector<32x32xf32> to vector<16x32xf32>
      %24 = arith.truncf %23 : vector<16x32xf32> to vector<16x32xbf16>
      %c0_17 = arith.constant 0 : index
      %c0_18 = arith.constant 0 : index
      %c0_19 = arith.constant 0 : index
      %25 = vector.load %arg6[%c0_17, %c0_18, %c0_19] : memref<1x16x32xbf16, #tpu.memory_space<vmem>>, vector<1x16x32xbf16>
      %26 = vector.shape_cast %25 : vector<1x16x32xbf16> to vector<16x32xbf16>
      %27 = vector.shape_cast %24 : vector<16x32xbf16> to vector<1x16x32xbf16>
      tpu.vector_store %arg6[%c0_17, %c0_18, %c0_19], %27 {strides = array<i32>} : memref<1x16x32xbf16, #tpu.memory_space<vmem>>, vector<1x16x32xbf16>,
      %28 = vector.extract_strided_slice %22 {offsets = [16, 0], sizes = [16, 32], strides = [1, 1]} : vector<32x32xf32> to vector<16x32xf32>
      %29 = arith.truncf %28 : vector<16x32xf32> to vector<16x32xbf16>
      %c0_20 = arith.constant 0 : index
      %c0_21 = arith.constant 0 : index
      %c0_22 = arith.constant 0 : index
      %30 = vector.load %arg7[%c0_20, %c0_21, %c0_22] : memref<1x16x32xbf16, #tpu.memory_space<vmem>>, vector<1x16x32xbf16>
      %31 = vector.shape_cast %30 : vector<1x16x32xbf16> to vector<16x32xbf16>
      %32 = vector.shape_cast %29 : vector<16x32xbf16> to vector<1x16x32xbf16>
      tpu.vector_store %arg7[%c0_20, %c0_21, %c0_22], %32 {strides = array<i32>} : memref<1x16x32xbf16, #tpu.memory_space<vmem>>, vector<1x16x32xbf16>,
    } else {
    }
    return
  }
  func.func @transform_0(%arg0: i32, %arg1: i32, %arg2: i32) -> (i32, i32, i32) {
    %c0_i32 = arith.constant 0 : i32
    return %arg0, %arg1, %arg2 : i32, i32, i32
  }
  func.func @transform_1(%arg0: i32, %arg1: i32, %arg2: i32) -> (i32, i32, i32) {
    %c0_i32 = arith.constant 0 : i32
    return %arg0, %arg1, %arg2 : i32, i32, i32
  }
  func.func @transform_2(%arg0: i32, %arg1: i32, %arg2: i32) -> (i32, i32, i32) {
    %c0_i32 = arith.constant 0 : i32
    %c0_i32_0 = arith.constant 0 : i32
    %c0_i32_1 = arith.constant 0 : i32
    return %arg0, %c0_i32, %c0_i32_0 : i32, i32, i32
  }
  func.func @transform_3(%arg0: i32, %arg1: i32, %arg2: i32) -> (i32, i32, i32) {
    %c0_i32 = arith.constant 0 : i32
    %c0_i32_0 = arith.constant 0 : i32
    return %arg0, %arg1, %c0_i32 : i32, i32, i32
  }
  func.func @transform_4(%arg0: i32, %arg1: i32, %arg2: i32) -> (i32, i32, i32) {
    %c0_i32 = arith.constant 0 : i32
    %c0_i32_0 = arith.constant 0 : i32
    return %arg0, %arg1, %c0_i32 : i32, i32, i32
  }
}

module attributes {stable_mosaic.version = 11 : i64} {
  func.func @_matmul_affine_kernel(%arg0: i32, %arg1: i32, %arg2: i32, %arg3: memref<32x1024xbf16, #tpu.memory_space<vmem>>, %arg4: memref<1024x128xbf16, #tpu.memory_space<vmem>>, %arg5: memref<1x128xf32, #tpu.memory_space<vmem>>, %arg6: memref<1x128xf32, #tpu.memory_space<vmem>>, %arg7: memref<32x128xbf16, #tpu.memory_space<vmem>>, %arg8: memref<32x128xf32, #tpu.memory_space<vmem>>) attributes {dimension_semantics = [#tpu.dimension_semantics<parallel>, #tpu.dimension_semantics<parallel>, #tpu.dimension_semantics<arbitrary>], iteration_bounds = array<i64: 1, 1, 2>, scalar_prefetch = 0 : i64, scratch_operands = 1 : i64, tpu.core_type = #tpu.core_type<tc>, window_params = [{transform_indices = @transform_0, window_bounds = array<i64: 32, 1024>}, {transform_indices = @transform_1, window_bounds = array<i64: 1024, 128>}, {transform_indices = @transform_2, window_bounds = array<i64: 1, 128>}, {transform_indices = @transform_3, window_bounds = array<i64: 1, 128>}, {transform_indices = @transform_4, window_bounds = array<i64: 32, 128>}]} {
    %c0_i32 = arith.constant 0 : i32
    %0 = arith.cmpi eq, %arg2, %c0_i32 : i32
    %1 = arith.extui %0 : i1 to i32
    %c0_i32_0 = arith.constant 0 : i32
    %2 = arith.cmpi ne, %1, %c0_i32_0 : i32
    scf.if %2 {
      %cst_9 = arith.constant 0.000000e+00 : f32
      %12 = vector.broadcast %cst_9 : f32 to vector<32x128xf32>
      %c0_10 = arith.constant 0 : index
      %c0_11 = arith.constant 0 : index
      %13 = vector.load %arg8[%c0_10, %c0_11] : memref<32x128xf32, #tpu.memory_space<vmem>>, vector<32x128xf32>
      tpu.vector_store %arg8[%c0_10, %c0_11], %12 {strides = array<i32>} : memref<32x128xf32, #tpu.memory_space<vmem>>, vector<32x128xf32>,
    } else {
    }
    %c0 = arith.constant 0 : index
    %c0_1 = arith.constant 0 : index
    %3 = vector.load %arg8[%c0, %c0_1] : memref<32x128xf32, #tpu.memory_space<vmem>>, vector<32x128xf32>
    %c0_2 = arith.constant 0 : index
    %c0_3 = arith.constant 0 : index
    %4 = vector.load %arg3[%c0_2, %c0_3] : memref<32x1024xbf16, #tpu.memory_space<vmem>>, vector<32x1024xbf16>
    %c0_4 = arith.constant 0 : index
    %c0_5 = arith.constant 0 : index
    %5 = vector.load %arg4[%c0_4, %c0_5] : memref<1024x128xbf16, #tpu.memory_space<vmem>>, vector<1024x128xbf16>
    %cst = arith.constant dense<0.000000e+00> : vector<32x128xf32>
    %6 = tpu.matmul %4, %5, %cst {dimension_numbers = #tpu.dot_dimension_numbers<[1], [0], [0], [1], [0, 0, 1, 1], [], []>} : vector<32x1024xbf16>, vector<1024x128xbf16>, vector<32x128xf32> -> vector<32x128xf32>
    %7 = arith.addf %3, %6 : vector<32x128xf32>
    %c0_6 = arith.constant 0 : index
    %c0_7 = arith.constant 0 : index
    %8 = vector.load %arg8[%c0_6, %c0_7] : memref<32x128xf32, #tpu.memory_space<vmem>>, vector<32x128xf32>
    tpu.vector_store %arg8[%c0_6, %c0_7], %7 {strides = array<i32>} : memref<32x128xf32, #tpu.memory_space<vmem>>, vector<32x128xf32>,
    %c1_i32 = arith.constant 1 : i32
    %9 = arith.cmpi eq, %arg2, %c1_i32 : i32
    %10 = arith.extui %9 : i1 to i32
    %c0_i32_8 = arith.constant 0 : i32
    %11 = arith.cmpi ne, %10, %c0_i32_8 : i32
    scf.if %11 {
      %c0_9 = arith.constant 0 : index
      %c0_10 = arith.constant 0 : index
      %12 = vector.load %arg8[%c0_9, %c0_10] : memref<32x128xf32, #tpu.memory_space<vmem>>, vector<32x128xf32>
      %c0_11 = arith.constant 0 : index
      %c0_12 = arith.constant 0 : index
      %13 = vector.load %arg5[%c0_11, %c0_12] : memref<1x128xf32, #tpu.memory_space<vmem>>, vector<1x128xf32>
      %14 = vector.broadcast %13 : vector<1x128xf32> to vector<32x128xf32>
      %15 = arith.mulf %12, %14 : vector<32x128xf32>
      %c0_13 = arith.constant 0 : index
      %c0_14 = arith.constant 0 : index
      %16 = vector.load %arg6[%c0_13, %c0_14] : memref<1x128xf32, #tpu.memory_space<vmem>>, vector<1x128xf32>
      %17 = vector.broadcast %16 : vector<1x128xf32> to vector<32x128xf32>
      %18 = arith.addf %15, %17 : vector<32x128xf32>
      %cst_15 = arith.constant 0.000000e+00 : f32
      %19 = vector.broadcast %cst_15 : f32 to vector<32x128xf32>
      %20 = arith.maximumf %18, %19 : vector<32x128xf32>
      %21 = arith.truncf %20 : vector<32x128xf32> to vector<32x128xbf16>
      %c0_16 = arith.constant 0 : index
      %c0_17 = arith.constant 0 : index
      %22 = vector.load %arg7[%c0_16, %c0_17] : memref<32x128xbf16, #tpu.memory_space<vmem>>, vector<32x128xbf16>
      tpu.vector_store %arg7[%c0_16, %c0_17], %21 {strides = array<i32>} : memref<32x128xbf16, #tpu.memory_space<vmem>>, vector<32x128xbf16>,
    } else {
    }
    return
  }
  func.func @transform_0(%arg0: i32, %arg1: i32, %arg2: i32) -> (i32, i32) {
    %c0_i32 = arith.constant 0 : i32
    return %arg0, %arg2 : i32, i32
  }
  func.func @transform_1(%arg0: i32, %arg1: i32, %arg2: i32) -> (i32, i32) {
    %c0_i32 = arith.constant 0 : i32
    return %arg2, %arg1 : i32, i32
  }
  func.func @transform_2(%arg0: i32, %arg1: i32, %arg2: i32) -> (i32, i32) {
    %c0_i32 = arith.constant 0 : i32
    %c0_i32_0 = arith.constant 0 : i32
    return %c0_i32, %arg1 : i32, i32
  }
  func.func @transform_3(%arg0: i32, %arg1: i32, %arg2: i32) -> (i32, i32) {
    %c0_i32 = arith.constant 0 : i32
    %c0_i32_0 = arith.constant 0 : i32
    return %c0_i32, %arg1 : i32, i32
  }
  func.func @transform_4(%arg0: i32, %arg1: i32, %arg2: i32) -> (i32, i32) {
    %c0_i32 = arith.constant 0 : i32
    return %arg0, %arg1 : i32, i32
  }
}

module attributes {stable_mosaic.version = 11 : i64} {
  func.func @_matmul_affine_kernel(%arg0: i32, %arg1: i32, %arg2: i32, %arg3: memref<32x128xbf16, #tpu.memory_space<vmem>>, %arg4: memref<128x128xbf16, #tpu.memory_space<vmem>>, %arg5: memref<1x128xf32, #tpu.memory_space<vmem>>, %arg6: memref<1x128xf32, #tpu.memory_space<vmem>>, %arg7: memref<32x128xf32, #tpu.memory_space<vmem>>, %arg8: memref<32x128xf32, #tpu.memory_space<vmem>>) attributes {dimension_semantics = [#tpu.dimension_semantics<parallel>, #tpu.dimension_semantics<parallel>, #tpu.dimension_semantics<arbitrary>], iteration_bounds = array<i64: 1, 1, 1>, scalar_prefetch = 0 : i64, scratch_operands = 1 : i64, tpu.core_type = #tpu.core_type<tc>, window_params = [{transform_indices = @transform_0, window_bounds = array<i64: 32, 128>}, {transform_indices = @transform_1, window_bounds = array<i64: 128, 128>}, {transform_indices = @transform_2, window_bounds = array<i64: 1, 128>}, {transform_indices = @transform_3, window_bounds = array<i64: 1, 128>}, {transform_indices = @transform_4, window_bounds = array<i64: 32, 128>}]} {
    %c0_i32 = arith.constant 0 : i32
    %0 = arith.cmpi eq, %arg2, %c0_i32 : i32
    %1 = arith.extui %0 : i1 to i32
    %c0_i32_0 = arith.constant 0 : i32
    %2 = arith.cmpi ne, %1, %c0_i32_0 : i32
    scf.if %2 {
      %cst_10 = arith.constant 0.000000e+00 : f32
      %12 = vector.broadcast %cst_10 : f32 to vector<32x128xf32>
      %c0_11 = arith.constant 0 : index
      %c0_12 = arith.constant 0 : index
      %13 = vector.load %arg8[%c0_11, %c0_12] : memref<32x128xf32, #tpu.memory_space<vmem>>, vector<32x128xf32>
      tpu.vector_store %arg8[%c0_11, %c0_12], %12 {strides = array<i32>} : memref<32x128xf32, #tpu.memory_space<vmem>>, vector<32x128xf32>,
    } else {
    }
    %c0 = arith.constant 0 : index
    %c0_1 = arith.constant 0 : index
    %3 = vector.load %arg8[%c0, %c0_1] : memref<32x128xf32, #tpu.memory_space<vmem>>, vector<32x128xf32>
    %c0_2 = arith.constant 0 : index
    %c0_3 = arith.constant 0 : index
    %4 = vector.load %arg3[%c0_2, %c0_3] : memref<32x128xbf16, #tpu.memory_space<vmem>>, vector<32x128xbf16>
    %c0_4 = arith.constant 0 : index
    %c0_5 = arith.constant 0 : index
    %5 = vector.load %arg4[%c0_4, %c0_5] : memref<128x128xbf16, #tpu.memory_space<vmem>>, vector<128x128xbf16>
    %cst = arith.constant dense<0.000000e+00> : vector<32x128xf32>
    %6 = tpu.matmul %4, %5, %cst {dimension_numbers = #tpu.dot_dimension_numbers<[1], [0], [0], [1], [0, 0, 1, 1], [], []>} : vector<32x128xbf16>, vector<128x128xbf16>, vector<32x128xf32> -> vector<32x128xf32>
    %7 = arith.addf %3, %6 : vector<32x128xf32>
    %c0_6 = arith.constant 0 : index
    %c0_7 = arith.constant 0 : index
    %8 = vector.load %arg8[%c0_6, %c0_7] : memref<32x128xf32, #tpu.memory_space<vmem>>, vector<32x128xf32>
    tpu.vector_store %arg8[%c0_6, %c0_7], %7 {strides = array<i32>} : memref<32x128xf32, #tpu.memory_space<vmem>>, vector<32x128xf32>,
    %c0_i32_8 = arith.constant 0 : i32
    %9 = arith.cmpi eq, %arg2, %c0_i32_8 : i32
    %10 = arith.extui %9 : i1 to i32
    %c0_i32_9 = arith.constant 0 : i32
    %11 = arith.cmpi ne, %10, %c0_i32_9 : i32
    scf.if %11 {
      %c0_10 = arith.constant 0 : index
      %c0_11 = arith.constant 0 : index
      %12 = vector.load %arg8[%c0_10, %c0_11] : memref<32x128xf32, #tpu.memory_space<vmem>>, vector<32x128xf32>
      %c0_12 = arith.constant 0 : index
      %c0_13 = arith.constant 0 : index
      %13 = vector.load %arg5[%c0_12, %c0_13] : memref<1x128xf32, #tpu.memory_space<vmem>>, vector<1x128xf32>
      %14 = vector.broadcast %13 : vector<1x128xf32> to vector<32x128xf32>
      %15 = arith.mulf %12, %14 : vector<32x128xf32>
      %c0_14 = arith.constant 0 : index
      %c0_15 = arith.constant 0 : index
      %16 = vector.load %arg6[%c0_14, %c0_15] : memref<1x128xf32, #tpu.memory_space<vmem>>, vector<1x128xf32>
      %17 = vector.broadcast %16 : vector<1x128xf32> to vector<32x128xf32>
      %18 = arith.addf %15, %17 : vector<32x128xf32>
      %c0_16 = arith.constant 0 : index
      %c0_17 = arith.constant 0 : index
      %19 = vector.load %arg7[%c0_16, %c0_17] : memref<32x128xf32, #tpu.memory_space<vmem>>, vector<32x128xf32>
      tpu.vector_store %arg7[%c0_16, %c0_17], %18 {strides = array<i32>} : memref<32x128xf32, #tpu.memory_space<vmem>>, vector<32x128xf32>,
    } else {
    }
    return
  }
  func.func @transform_0(%arg0: i32, %arg1: i32, %arg2: i32) -> (i32, i32) {
    %c0_i32 = arith.constant 0 : i32
    return %arg0, %arg2 : i32, i32
  }
  func.func @transform_1(%arg0: i32, %arg1: i32, %arg2: i32) -> (i32, i32) {
    %c0_i32 = arith.constant 0 : i32
    return %arg2, %arg1 : i32, i32
  }
  func.func @transform_2(%arg0: i32, %arg1: i32, %arg2: i32) -> (i32, i32) {
    %c0_i32 = arith.constant 0 : i32
    %c0_i32_0 = arith.constant 0 : i32
    return %c0_i32, %arg1 : i32, i32
  }
  func.func @transform_3(%arg0: i32, %arg1: i32, %arg2: i32) -> (i32, i32) {
    %c0_i32 = arith.constant 0 : i32
    %c0_i32_0 = arith.constant 0 : i32
    return %c0_i32, %arg1 : i32, i32
  }
  func.func @transform_4(%arg0: i32, %arg1: i32, %arg2: i32) -> (i32, i32) {
    %c0_i32 = arith.constant 0 : i32
    return %arg0, %arg1 : i32, i32
  }
}

module attributes {stable_mosaic.version = 11 : i64} {
  func.func @_log_softmax_nchw_kernel(%arg0: i32, %arg1: i32, %arg2: memref<1x8x32x32xf32, #tpu.memory_space<vmem>>, %arg3: memref<1x8x32x32xf32, #tpu.memory_space<vmem>>) attributes {dimension_semantics = [#tpu.dimension_semantics<parallel>, #tpu.dimension_semantics<parallel>], iteration_bounds = array<i64: 2, 1>, scalar_prefetch = 0 : i64, scratch_operands = 0 : i64, tpu.core_type = #tpu.core_type<tc>, window_params = [{transform_indices = @transform_0, window_bounds = array<i64: 1, 8, 32, 32>}, {transform_indices = @transform_1, window_bounds = array<i64: 1, 8, 32, 32>}]} {
    %c0 = arith.constant 0 : index
    %c0_0 = arith.constant 0 : index
    %c0_1 = arith.constant 0 : index
    %c0_2 = arith.constant 0 : index
    %0 = vector.load %arg2[%c0, %c0_0, %c0_1, %c0_2] : memref<1x8x32x32xf32, #tpu.memory_space<vmem>>, vector<1x8x32x32xf32>
    %cst = arith.constant dense<0xFF800000> : vector<1x32x32xf32>
    %1 = vector.multi_reduction <maximumf>, %0, %cst [1] : vector<1x8x32x32xf32> to vector<1x32x32xf32>
    %2 = vector.shape_cast %1 : vector<1x32x32xf32> to vector<1x1x32x32xf32>
    %3 = vector.broadcast %2 : vector<1x1x32x32xf32> to vector<1x8x32x32xf32>
    %4 = arith.subf %0, %3 : vector<1x8x32x32xf32>
    %5 = math.exp %4 : vector<1x8x32x32xf32>
    %cst_3 = arith.constant dense<0.000000e+00> : vector<1x32x32xf32>
    %6 = vector.multi_reduction <add>, %5, %cst_3 [1] : vector<1x8x32x32xf32> to vector<1x32x32xf32>
    %7 = vector.shape_cast %6 : vector<1x32x32xf32> to vector<1x1x32x32xf32>
    %8 = math.log %7 : vector<1x1x32x32xf32>
    %9 = vector.broadcast %8 : vector<1x1x32x32xf32> to vector<1x8x32x32xf32>
    %10 = arith.subf %4, %9 : vector<1x8x32x32xf32>
    %c0_4 = arith.constant 0 : index
    %c0_5 = arith.constant 0 : index
    %c0_6 = arith.constant 0 : index
    %c0_7 = arith.constant 0 : index
    %11 = vector.load %arg3[%c0_4, %c0_5, %c0_6, %c0_7] : memref<1x8x32x32xf32, #tpu.memory_space<vmem>>, vector<1x8x32x32xf32>
    tpu.vector_store %arg3[%c0_4, %c0_5, %c0_6, %c0_7], %10 {strides = array<i32>} : memref<1x8x32x32xf32, #tpu.memory_space<vmem>>, vector<1x8x32x32xf32>,
    return
  }
  func.func @transform_0(%arg0: i32, %arg1: i32) -> (i32, i32, i32, i32) {
    %c0_i32 = arith.constant 0 : i32
    %c0_i32_0 = arith.constant 0 : i32
    %c0_i32_1 = arith.constant 0 : i32
    return %arg0, %c0_i32, %arg1, %c0_i32_0 : i32, i32, i32, i32
  }
  func.func @transform_1(%arg0: i32, %arg1: i32) -> (i32, i32, i32, i32) {
    %c0_i32 = arith.constant 0 : i32
    %c0_i32_0 = arith.constant 0 : i32
    %c0_i32_1 = arith.constant 0 : i32
    return %arg0, %c0_i32, %arg1, %c0_i32_0 : i32, i32, i32, i32
  }
}

</mosaic_0001>

<llo_original>
// kernel: cpnet_forward.15
$region0: #{cpnet_forward.15}
  #allocation0 [shape = 'u32[]', space=smem, size = 0x4, offset = 0x4, fixed_abs, tag = 'smem constant byte address 0x4 - core index']
  #allocation1 [shape = 'u32[72,128]{1,0:T(1,128)}', space=vmem, size = 0x9000, scoped, tag = 'internal scratch']
  #allocation2 [shape = 'f32[512,128]{1,0:T(8,128)}', space=vmem, size = 0x40000, scoped, tag = 'scratch operand']
  %s0 = inlined_call_operand.vmem [shape: bf16[512,128], index: 0, kind: input, shape index: {}]
  %s1 = inlined_call_operand.vmem [shape: bf16[128,128], index: 1, kind: input, shape index: {}]
  %s2 = inlined_call_operand.vmem [shape: f32[1,128], index: 2, kind: input, shape index: {}]
  %s3 = inlined_call_operand.vmem [shape: f32[1,128], index: 3, kind: input, shape index: {}]
  %s4 = inlined_call_operand.vmem [shape: bf16[512,128], index: 4, kind: output, shape index: {}]
  %s5 = sld [smem:[#allocation0]]
  $region34: #{cpnet_forward.15} parent=0
    _
  %s7 = ssub.s32 1, %s5
  %s8 = scalar_select 0, %s7, %s5
  // Predicated region
  $region2: #{cpnet_forward.15} parent=0 // pred_check
    _
  $region3: #{cpnet_forward.15} parent=0 // pred_check_branch
    %10 = sbr.rel (0) target = $region5
  $region4: #{cpnet_forward.15} parent=0 // pred_region
    _
  $region5: #{cpnet_forward.15} parent=0 // pred_fallthru
    _
  // Predicated region
  $region6: #{cpnet_forward.15} parent=0 // pred_check
    _
  $region7: #{cpnet_forward.15} parent=0 // pred_check_branch
    %12 = sbr.rel (0) target = $region9
  $region8: #{cpnet_forward.15} parent=0 // pred_region
    _
  $region9: #{cpnet_forward.15} parent=0 // pred_fallthru
    _
  // Predicated region
  $region10: #{cpnet_forward.15} parent=0 // pred_check
    _
  $region11: #{cpnet_forward.15} parent=0 // pred_check_branch
    %14 = sbr.rel (0) target = $region13
  $region12: #{cpnet_forward.15} parent=0 // pred_region
    _
  $region13: #{cpnet_forward.15} parent=0 // pred_fallthru
    _
  // Predicated region
  $region14: #{cpnet_forward.15} parent=0 // pred_check
    _
  $region15: #{cpnet_forward.15} parent=0 // pred_check_branch
    %16 = sbr.rel (0) target = $region17
  $region16: #{cpnet_forward.15} parent=0 // pred_region
    _
  $region17: #{cpnet_forward.15} parent=0 // pred_fallthru
    _
  %p17 = scmp.eq.s32.totalorder 0, 0
  // Predicated region
  $region18: #{cpnet_forward.15} parent=0 // pred_check
    %p18 = pneg %p17
  $region19: #{cpnet_forward.15} parent=0 // pred_check_branch
    %20 = sbr.rel (%p18) target = $region21
  $region20: #{cpnet_forward.15} parent=0 // pred_region
    %21 = vst [vmem:[#allocation2] sm:$0xff] 0.0
    %22 = vst [vmem:[#allocation2 + $0x8] sm:$0xff] 0.0
    %23 = vst [vmem:[#allocation2 + $0x10] sm:$0xff] 0.0
    %24 = vst [vmem:[#allocation2 + $0x18] sm:$0xff] 0.0
    %25 = vst [vmem:[#allocation2 + $0x20] sm:$0xff] 0.0
    %26 = vst [vmem:[#allocation2 + $0x28] sm:$0xff] 0.0
    %27 = vst [vmem:[#allocation2 + $0x30] sm:$0xff] 0.0
    %28 = vst [vmem:[#allocation2 + $0x38] sm:$0xff] 0.0
    %29 = vst [vmem:[#allocation2 + $0x40] sm:$0xff] 0.0
    %30 = vst [vmem:[#allocation2 + $0x48] sm:$0xff] 0.0
    %31 = vst [vmem:[#allocation2 + $0x50] sm:$0xff] 0.0
    %32 = vst [vmem:[#allocation2 + $0x58] sm:$0xff] 0.0
    %33 = vst [vmem:[#allocation2 + $0x60] sm:$0xff] 0.0
    %34 = vst [vmem:[#allocation2 + $0x68] sm:$0xff] 0.0
    %35 = vst [vmem:[#allocation2 + $0x70] sm:$0xff] 0.0
    %36 = vst [vmem:[#allocation2 + $0x78] sm:$0xff] 0.0
    %37 = vst [vmem:[#allocation2 + $0x80] sm:$0xff] 0.0
    %38 = vst [vmem:[#allocation2 + $0x88] sm:$0xff] 0.0
    %39 = vst [vmem:[#allocation2 + $0x90] sm:$0xff] 0.0
    %40 = vst [vmem:[#allocation2 + $0x98] sm:$0xff] 0.0
    %41 = vst [vmem:[#allocation2 + $0xa0] sm:$0xff] 0.0
    %42 = vst [vmem:[#allocation2 + $0xa8] sm:$0xff] 0.0
    %43 = vst [vmem:[#allocation2 + $0xb0] sm:$0xff] 0.0
    %44 = vst [vmem:[#allocation2 + $0xb8] sm:$0xff] 0.0
    %45 = vst [vmem:[#allocation2 + $0xc0] sm:$0xff] 0.0
    %46 = vst [vmem:[#allocation2 + $0xc8] sm:$0xff] 0.0
    %47 = vst [vmem:[#allocation2 + $0xd0] sm:$0xff] 0.0
    %48 = vst [vmem:[#allocation2 + $0xd8] sm:$0xff] 0.0
    %49 = vst [vmem:[#allocation2 + $0xe0] sm:$0xff] 0.0
    %50 = vst [vmem:[#allocation2 + $0xe8] sm:$0xff] 0.0
    %51 = vst [vmem:[#allocation2 + $0xf0] sm:$0xff] 0.0
    %52 = vst [vmem:[#allocation2 + $0xf8] sm:$0xff] 0.0
    %53 = vst [vmem:[#allocation2 + $0x100] sm:$0xff] 0.0
    %54 = vst [vmem:[#allocation2 + $0x108] sm:$0xff] 0.0
    %55 = vst [vmem:[#allocation2 + $0x110] sm:$0xff] 0.0
    %56 = vst [vmem:[#allocation2 + $0x118] sm:$0xff] 0.0
    %57 = vst [vmem:[#allocation2 + $0x120] sm:$0xff] 0.0
    %58 = vst [vmem:[#allocation2 + $0x128] sm:$0xff] 0.0
    %59 = vst [vmem:[#allocation2 + $0x130] sm:$0xff] 0.0
    %60 = vst [vmem:[#allocation2 + $0x138] sm:$0xff] 0.0
    %61 = vst [vmem:[#allocation2 + $0x140] sm:$0xff] 0.0
    %62 = vst [vmem:[#allocation2 + $0x148] sm:$0xff] 0.0
    %63 = vst [vmem:[#allocation2 + $0x150] sm:$0xff] 0.0
    %64 = vst [vmem:[#allocation2 + $0x158] sm:$0xff] 0.0
    %65 = vst [vmem:[#allocation2 + $0x160] sm:$0xff] 0.0
    %66 = vst [vmem:[#allocation2 + $0x168] sm:$0xff] 0.0
    %67 = vst [vmem:[#allocation2 + $0x170] sm:$0xff] 0.0
    %68 = vst [vmem:[#allocation2 + $0x178] sm:$0xff] 0.0
    %69 = vst [vmem:[#allocation2 + $0x180] sm:$0xff] 0.0
    %70 = vst [vmem:[#allocation2 + $0x188] sm:$0xff] 0.0
    %71 = vst [vmem:[#allocation2 + $0x190] sm:$0xff] 0.0
    %72 = vst [vmem:[#allocation2 + $0x198] sm:$0xff] 0.0
    %73 = vst [vmem:[#allocation2 + $0x1a0] sm:$0xff] 0.0
    %74 = vst [vmem:[#allocation2 + $0x1a8] sm:$0xff] 0.0
    %75 = vst [vmem:[#allocation2 + $0x1b0] sm:$0xff] 0.0
    %76 = vst [vmem:[#allocation2 + $0x1b8] sm:$0xff] 0.0
    %77 = vst [vmem:[#allocation2 + $0x1c0] sm:$0xff] 0.0
    %78 = vst [vmem:[#allocation2 + $0x1c8] sm:$0xff] 0.0
    %79 = vst [vmem:[#allocation2 + $0x1d0] sm:$0xff] 0.0
    %80 = vst [vmem:[#allocation2 + $0x1d8] sm:$0xff] 0.0
    %81 = vst [vmem:[#allocation2 + $0x1e0] sm:$0xff] 0.0
    %82 = vst [vmem:[#allocation2 + $0x1e8] sm:$0xff] 0.0
    %83 = vst [vmem:[#allocation2 + $0x1f0] sm:$0xff] 0.0
    %84 = vst [vmem:[#allocation2 + $0x1f8] sm:$0xff] 0.0
  $region21: #{cpnet_forward.15} parent=0 // pred_fallthru
    _
  %v85 = vld [vmem:[#allocation2] sm:$0xff]
  %v86 = vld [vmem:[#allocation2 + $0x8] sm:$0xff]
  %v87 = vld [vmem:[#allocation2 + $0x10] sm:$0xff]
  %v88 = vld [vmem:[#allocation2 + $0x18] sm:$0xff]
  %v89 = vld [vmem:[#allocation2 + $0x20] sm:$0xff]
  %v90 = vld [vmem:[#allocation2 + $0x28] sm:$0xff]
  %v91 = vld [vmem:[#allocation2 + $0x30] sm:$0xff]
  %v92 = vld [vmem:[#allocation2 + $0x38] sm:$0xff]
  %v93 = vld [vmem:[#allocation2 + $0x40] sm:$0xff]
  %v94 = vld [vmem:[#allocation2 + $0x48] sm:$0xff]
  %v95 = vld [vmem:[#allocation2 + $0x50] sm:$0xff]
  %v96 = vld [vmem:[#allocation2 + $0x58] sm:$0xff]
  %v97 = vld [vmem:[#allocation2 + $0x60] sm:$0xff]
  %v98 = vld [vmem:[#allocation2 + $0x68] sm:$0xff]
  %v99 = vld [vmem:[#allocation2 + $0x70] sm:$0xff]
  %v100 = vld [vmem:[#allocation2 + $0x78] sm:$0xff]
  %v101 = vld [vmem:[#allocation2 + $0x80] sm:$0xff]
  %v102 = vld [vmem:[#allocation2 + $0x88] sm:$0xff]
  %v103 = vld [vmem:[#allocation2 + $0x90] sm:$0xff]
  %v104 = vld [vmem:[#allocation2 + $0x98] sm:$0xff]
  %v105 = vld [vmem:[#allocation2 + $0xa0] sm:$0xff]
  %v106 = vld [vmem:[#allocation2 + $0xa8] sm:$0xff]
  %v107 = vld [vmem:[#allocation2 + $0xb0] sm:$0xff]
  %v108 = vld [vmem:[#allocation2 + $0xb8] sm:$0xff]
  %v109 = vld [vmem:[#allocation2 + $0xc0] sm:$0xff]
  %v110 = vld [vmem:[#allocation2 + $0xc8] sm:$0xff]
  %v111 = vld [vmem:[#allocation2 + $0xd0] sm:$0xff]
  %v112 = vld [vmem:[#allocation2 + $0xd8] sm:$0xff]
  %v113 = vld [vmem:[#allocation2 + $0xe0] sm:$0xff]
  %v114 = vld [vmem:[#allocation2 + $0xe8] sm:$0xff]
  %v115 = vld [vmem:[#allocation2 + $0xf0] sm:$0xff]
  %v116 = vld [vmem:[#allocation2 + $0xf8] sm:$0xff]
  %v117 = vld [vmem:[#allocation2 + $0x100] sm:$0xff]
  %v118 = vld [vmem:[#allocation2 + $0x108] sm:$0xff]
  %v119 = vld [vmem:[#allocation2 + $0x110] sm:$0xff]
  %v120 = vld [vmem:[#allocation2 + $0x118] sm:$0xff]
  %v121 = vld [vmem:[#allocation2 + $0x120] sm:$0xff]
  %v122 = vld [vmem:[#allocation2 + $0x128] sm:$0xff]
  %v123 = vld [vmem:[#allocation2 + $0x130] sm:$0xff]
  %v124 = vld [vmem:[#allocation2 + $0x138] sm:$0xff]
  %v125 = vld [vmem:[#allocation2 + $0x140] sm:$0xff]
  %v126 = vld [vmem:[#allocation2 + $0x148] sm:$0xff]
  %v127 = vld [vmem:[#allocation2 + $0x150] sm:$0xff]
  %v128 = vld [vmem:[#allocation2 + $0x158] sm:$0xff]
  %v129 = vld [vmem:[#allocation2 + $0x160] sm:$0xff]
  %v130 = vld [vmem:[#allocation2 + $0x168] sm:$0xff]
  %v131 = vld [vmem:[#allocation2 + $0x170] sm:$0xff]
  %v132 = vld [vmem:[#allocation2 + $0x178] sm:$0xff]
  %v133 = vld [vmem:[#allocation2 + $0x180] sm:$0xff]
  %v134 = vld [vmem:[#allocation2 + $0x188] sm:$0xff]
  %v135 = vld [vmem:[#allocation2 + $0x190] sm:$0xff]
  %v136 = vld [vmem:[#allocation2 + $0x198] sm:$0xff]
  %v137 = vld [vmem:[#allocation2 + $0x1a0] sm:$0xff]
  %v138 = vld [vmem:[#allocation2 + $0x1a8] sm:$0xff]
  %v139 = vld [vmem:[#allocation2 + $0x1b0] sm:$0xff]
  %v140 = vld [vmem:[#allocation2 + $0x1b8] sm:$0xff]
  %v141 = vld [vmem:[#allocation2 + $0x1c0] sm:$0xff]
  %v142 = vld [vmem:[#allocation2 + $0x1c8] sm:$0xff]
  %v143 = vld [vmem:[#allocation2 + $0x1d0] sm:$0xff]
  %v144 = vld [vmem:[#allocation2 + $0x1d8] sm:$0xff]
  %v145 = vld [vmem:[#allocation2 + $0x1e0] sm:$0xff]
  %v146 = vld [vmem:[#allocation2 + $0x1e8] sm:$0xff]
  %v147 = vld [vmem:[#allocation2 + $0x1f0] sm:$0xff]
  %v148 = vld [vmem:[#allocation2 + $0x1f8] sm:$0xff]
  %v149 = vld [vmem:[%s0] sm:$0xf]
  %v150 = vld [vmem:[%s0 + $0x4] sm:$0xf]
  %v151 = vld [vmem:[%s0 + $0x8] sm:$0xf]
  %v152 = vld [vmem:[%s0 + $0xc] sm:$0xf]
  %v153 = vld [vmem:[%s0 + $0x10] sm:$0xf]
  %v154 = vld [vmem:[%s0 + $0x14] sm:$0xf]
  %v155 = vld [vmem:[%s0 + $0x18] sm:$0xf]
  %v156 = vld [vmem:[%s0 + $0x1c] sm:$0xf]
  %v157 = vld [vmem:[%s0 + $0x20] sm:$0xf]
  %v158 = vld [vmem:[%s0 + $0x24] sm:$0xf]
  %v159 = vld [vmem:[%s0 + $0x28] sm:$0xf]
  %v160 = vld [vmem:[%s0 + $0x2c] sm:$0xf]
  %v161 = vld [vmem:[%s0 + $0x30] sm:$0xf]
  %v162 = vld [vmem:[%s0 + $0x34] sm:$0xf]
  %v163 = vld [vmem:[%s0 + $0x38] sm:$0xf]
  %v164 = vld [vmem:[%s0 + $0x3c] sm:$0xf]
  %v165 = vld [vmem:[%s0 + $0x40] sm:$0xf]
  %v166 = vld [vmem:[%s0 + $0x44] sm:$0xf]
  %v167 = vld [vmem:[%s0 + $0x48] sm:$0xf]
  %v168 = vld [vmem:[%s0 + $0x4c] sm:$0xf]
  %v169 = vld [vmem:[%s0 + $0x50] sm:$0xf]
  %v170 = vld [vmem:[%s0 + $0x54] sm:$0xf]
  %v171 = vld [vmem:[%s0 + $0x58] sm:$0xf]
  %v172 = vld [vmem:[%s0 + $0x5c] sm:$0xf]
  %v173 = vld [vmem:[%s0 + $0x60] sm:$0xf]
  %v174 = vld [vmem:[%s0 + $0x64] sm:$0xf]
  %v175 = vld [vmem:[%s0 + $0x68] sm:$0xf]
  %v176 = vld [vmem:[%s0 + $0x6c] sm:$0xf]
  %v177 = vld [vmem:[%s0 + $0x70] sm:$0xf]
  %v178 = vld [vmem:[%s0 + $0x74] sm:$0xf]
  %v179 = vld [vmem:[%s0 + $0x78] sm:$0xf]
  %v180 = vld [vmem:[%s0 + $0x7c] sm:$0xf]
  %v181 = vld [vmem:[%s0 + $0x80] sm:$0xf]
  %v182 = vld [vmem:[%s0 + $0x84] sm:$0xf]
  %v183 = vld [vmem:[%s0 + $0x88] sm:$0xf]
  %v184 = vld [vmem:[%s0 + $0x8c] sm:$0xf]
  %v185 = vld [vmem:[%s0 + $0x90] sm:$0xf]
  %v186 = vld [vmem:[%s0 + $0x94] sm:$0xf]
  %v187 = vld [vmem:[%s0 + $0x98] sm:$0xf]
  %v188 = vld [vmem:[%s0 + $0x9c] sm:$0xf]
  %v189 = vld [vmem:[%s0 + $0xa0] sm:$0xf]
  %v190 = vld [vmem:[%s0 + $0xa4] sm:$0xf]
  %v191 = vld [vmem:[%s0 + $0xa8] sm:$0xf]
  %v192 = vld [vmem:[%s0 + $0xac] sm:$0xf]
  %v193 = vld [vmem:[%s0 + $0xb0] sm:$0xf]
  %v194 = vld [vmem:[%s0 + $0xb4] sm:$0xf]
  %v195 = vld [vmem:[%s0 + $0xb8] sm:$0xf]
  %v196 = vld [vmem:[%s0 + $0xbc] sm:$0xf]
  %v197 = vld [vmem:[%s0 + $0xc0] sm:$0xf]
  %v198 = vld [vmem:[%s0 + $0xc4] sm:$0xf]
  %v199 = vld [vmem:[%s0 + $0xc8] sm:$0xf]
  %v200 = vld [vmem:[%s0 + $0xcc] sm:$0xf]
  %v201 = vld [vmem:[%s0 + $0xd0] sm:$0xf]
  %v202 = vld [vmem:[%s0 + $0xd4] sm:$0xf]
  %v203 = vld [vmem:[%s0 + $0xd8] sm:$0xf]
  %v204 = vld [vmem:[%s0 + $0xdc] sm:$0xf]
  %v205 = vld [vmem:[%s0 + $0xe0] sm:$0xf]
  %v206 = vld [vmem:[%s0 + $0xe4] sm:$0xf]
  %v207 = vld [vmem:[%s0 + $0xe8] sm:$0xf]
  %v208 = vld [vmem:[%s0 + $0xec] sm:$0xf]
  %v209 = vld [vmem:[%s0 + $0xf0] sm:$0xf]
  %v210 = vld [vmem:[%s0 + $0xf4] sm:$0xf]
  %v211 = vld [vmem:[%s0 + $0xf8] sm:$0xf]
  %v212 = vld [vmem:[%s0 + $0xfc] sm:$0xf]
  %v213 = vld [vmem:[%s1] sm:$0xf]
  %v214 = vld [vmem:[%s1 + $0x4] sm:$0xf]
  %v215 = vld [vmem:[%s1 + $0x8] sm:$0xf]
  %v216 = vld [vmem:[%s1 + $0xc] sm:$0xf]
  %v217 = vld [vmem:[%s1 + $0x10] sm:$0xf]
  %v218 = vld [vmem:[%s1 + $0x14] sm:$0xf]
  %v219 = vld [vmem:[%s1 + $0x18] sm:$0xf]
  %v220 = vld [vmem:[%s1 + $0x1c] sm:$0xf]
  %v221 = vld [vmem:[%s1 + $0x20] sm:$0xf]
  %v222 = vld [vmem:[%s1 + $0x24] sm:$0xf]
  %v223 = vld [vmem:[%s1 + $0x28] sm:$0xf]
  %v224 = vld [vmem:[%s1 + $0x2c] sm:$0xf]
  %v225 = vld [vmem:[%s1 + $0x30] sm:$0xf]
  %v226 = vld [vmem:[%s1 + $0x34] sm:$0xf]
  %v227 = vld [vmem:[%s1 + $0x38] sm:$0xf]
  %v228 = vld [vmem:[%s1 + $0x3c] sm:$0xf]
  %v293 = vunpack.c.l.b16 %v149
  %v294 = vunpack.c.l.b16 %v150
  %v295 = vunpack.c.l.b16 %v151
  %v296 = vunpack.c.l.b16 %v152
  %v297 = vunpack.c.l.b16 %v153
  %v298 = vunpack.c.l.b16 %v154
  %v299 = vunpack.c.l.b16 %v155
  %v300 = vunpack.c.l.b16 %v156
  %v301 = vunpack.c.l.b16 %v157
  %v302 = vunpack.c.l.b16 %v158
  %v303 = vunpack.c.l.b16 %v159
  %v304 = vunpack.c.l.b16 %v160
  %v305 = vunpack.c.l.b16 %v161
  %v306 = vunpack.c.l.b16 %v162
  %v307 = vunpack.c.l.b16 %v163
  %v308 = vunpack.c.l.b16 %v164
  %v309 = vunpack.c.l.b16 %v165
  %v310 = vunpack.c.l.b16 %v166
  %v311 = vunpack.c.l.b16 %v167
  %v312 = vunpack.c.l.b16 %v168
  %v313 = vunpack.c.l.b16 %v169
  %v314 = vunpack.c.l.b16 %v170
  %v315 = vunpack.c.l.b16 %v171
  %v316 = vunpack.c.l.b16 %v172
  %v317 = vunpack.c.l.b16 %v173
  %v318 = vunpack.c.l.b16 %v174
  %v319 = vunpack.c.l.b16 %v175
  %v320 = vunpack.c.l.b16 %v176
  %v321 = vunpack.c.l.b16 %v177
  %v322 = vunpack.c.l.b16 %v178
  %v323 = vunpack.c.l.b16 %v179
  %v324 = vunpack.c.l.b16 %v180
  %v325 = vunpack.c.l.b16 %v181
  %v326 = vunpack.c.l.b16 %v182
  %v327 = vunpack.c.l.b16 %v183
  %v328 = vunpack.c.l.b16 %v184
  %v329 = vunpack.c.l.b16 %v185
  %v330 = vunpack.c.l.b16 %v186
  %v331 = vunpack.c.l.b16 %v187
  %v332 = vunpack.c.l.b16 %v188
  %v333 = vunpack.c.l.b16 %v189
  %v334 = vunpack.c.l.b16 %v190
  %v335 = vunpack.c.l.b16 %v191
  %v336 = vunpack.c.l.b16 %v192
  %v337 = vunpack.c.l.b16 %v193
  %v338 = vunpack.c.l.b16 %v194
  %v339 = vunpack.c.l.b16 %v195
  %v340 = vunpack.c.l.b16 %v196
  %v341 = vunpack.c.l.b16 %v197
  %v342 = vunpack.c.l.b16 %v198
  %v343 = vunpack.c.l.b16 %v199
  %v344 = vunpack.c.l.b16 %v200
  %v345 = vunpack.c.l.b16 %v201
  %v346 = vunpack.c.l.b16 %v202
  %v347 = vunpack.c.l.b16 %v203
  %v348 = vunpack.c.l.b16 %v204
  %v349 = vunpack.c.l.b16 %v205
  %v350 = vunpack.c.l.b16 %v206
  %v351 = vunpack.c.l.b16 %v207
  %v352 = vunpack.c.l.b16 %v208
  %v353 = vunpack.c.l.b16 %v209
  %v354 = vunpack.c.l.b16 %v210
  %v355 = vunpack.c.l.b16 %v211
  %v356 = vunpack.c.l.b16 %v212
  %v357 = vpack.c.b16 %v294, %v293
  %v358 = vpack.c.b16 %v296, %v295
  %v359 = vpack.c.b16 %v298, %v297
  %v360 = vpack.c.b16 %v300, %v299
  %v361 = vpack.c.b16 %v302, %v301
  %v362 = vpack.c.b16 %v304, %v303
  %v363 = vpack.c.b16 %v306, %v305
  %v364 = vpack.c.b16 %v308, %v307
  %v365 = vpack.c.b16 %v310, %v309
  %v366 = vpack.c.b16 %v312, %v311
  %v367 = vpack.c.b16 %v314, %v313
  %v368 = vpack.c.b16 %v316, %v315
  %v369 = vpack.c.b16 %v318, %v317
  %v370 = vpack.c.b16 %v320, %v319
  %v371 = vpack.c.b16 %v322, %v321
  %v372 = vpack.c.b16 %v324, %v323
  %v373 = vpack.c.b16 %v326, %v325
  %v374 = vpack.c.b16 %v328, %v327
  %v375 = vpack.c.b16 %v330, %v329
  %v376 = vpack.c.b16 %v332, %v331
  %v377 = vpack.c.b16 %v334, %v333
  %v378 = vpack.c.b16 %v336, %v335
  %v379 = vpack.c.b16 %v338, %v337
  %v380 = vpack.c.b16 %v340, %v339
  %v381 = vpack.c.b16 %v342, %v341
  %v382 = vpack.c.b16 %v344, %v343
  %v383 = vpack.c.b16 %v346, %v345
  %v384 = vpack.c.b16 %v348, %v347
  %v385 = vpack.c.b16 %v350, %v349
  %v386 = vpack.c.b16 %v352, %v351
  %v387 = vpack.c.b16 %v354, %v353
  %v388 = vpack.c.b16 %v356, %v355
  %v437 = vunpack.c.l.b16 %v213
  %v438 = vunpack.c.l.b16 %v214
  %v439 = vunpack.c.l.b16 %v215
  %v440 = vunpack.c.l.b16 %v216
  %v441 = vunpack.c.l.b16 %v217
  %v442 = vunpack.c.l.b16 %v218
  %v443 = vunpack.c.l.b16 %v219
  %v444 = vunpack.c.l.b16 %v220
  %v445 = vunpack.c.l.b16 %v221
  %v446 = vunpack.c.l.b16 %v222
  %v447 = vunpack.c.l.b16 %v223
  %v448 = vunpack.c.l.b16 %v224
  %v449 = vunpack.c.l.b16 %v225
  %v450 = vunpack.c.l.b16 %v226
  %v451 = vunpack.c.l.b16 %v227
  %v452 = vunpack.c.l.b16 %v228
  %v453 = vpack.c.b16 %v438, %v437
  %v454 = vpack.c.b16 %v440, %v439
  %v455 = vpack.c.b16 %v442, %v441
  %v456 = vpack.c.b16 %v444, %v443
  %v457 = vpack.c.b16 %v446, %v445
  %v458 = vpack.c.b16 %v448, %v447
  %v459 = vpack.c.b16 %v450, %v449
  %v460 = vpack.c.b16 %v452, %v451
  %469 = vmatpush.bf16.msra.mxu0 %v460
  %470 = vmatpush.bf16.msra.mxu0 %v459
  %471 = vmatpush.bf16.msra.mxu0 %v458
  %472 = vmatpush.bf16.msra.mxu0 %v457
  %473 = vmatpush.bf16.msra.mxu0 %v456
  %474 = vmatpush.bf16.msra.mxu0 %v455
  %475 = vmatpush.bf16.msra.mxu0 %v454
  %476 = vmatpush.bf16.msra.mxu0 %v453
  %477 = vmatmul.bf16.gmra.mxu0 %v357
  %v478 = vpop.f32.mrf.mxu0
  %v479 = vadd.f32 0.0, %v478
  %v480 = vpop.f32.mrf.mxu0
  %v481 = vadd.f32 0.0, %v480
  %482 = vmatmul.bf16.gmra.mxu0 %v358
  %v483 = vpop.f32.mrf.mxu0
  %v484 = vadd.f32 0.0, %v483
  %v485 = vpop.f32.mrf.mxu0
  %v486 = vadd.f32 0.0, %v485
  %487 = vmatmul.bf16.gmra.mxu0 %v359
  %v488 = vpop.f32.mrf.mxu0
  %v489 = vadd.f32 0.0, %v488
  %v490 = vpop.f32.mrf.mxu0
  %v491 = vadd.f32 0.0, %v490
  %492 = vmatmul.bf16.gmra.mxu0 %v360
  %v493 = vpop.f32.mrf.mxu0
  %v494 = vadd.f32 0.0, %v493
  %v495 = vpop.f32.mrf.mxu0
  %v496 = vadd.f32 0.0, %v495
  %497 = vmatmul.bf16.gmra.mxu0 %v361
  %v498 = vpop.f32.mrf.mxu0
  %v499 = vadd.f32 0.0, %v498
  %v500 = vpop.f32.mrf.mxu0
  %v501 = vadd.f32 0.0, %v500
  %502 = vmatmul.bf16.gmra.mxu0 %v362
  %v503 = vpop.f32.mrf.mxu0
  %v504 = vadd.f32 0.0, %v503
  %v505 = vpop.f32.mrf.mxu0
  %v506 = vadd.f32 0.0, %v505
  %507 = vmatmul.bf16.gmra.mxu0 %v363
  %v508 = vpop.f32.mrf.mxu0
  %v509 = vadd.f32 0.0, %v508
  %v510 = vpop.f32.mrf.mxu0
  %v511 = vadd.f32 0.0, %v510
  %512 = vmatmul.bf16.gmra.mxu0 %v364
  %v513 = vpop.f32.mrf.mxu0
  %v514 = vadd.f32 0.0, %v513
  %v515 = vpop.f32.mrf.mxu0
  %v516 = vadd.f32 0.0, %v515
  %517 = vmatmul.bf16.gmra.mxu0 %v365
  %v518 = vpop.f32.mrf.mxu0
  %v519 = vadd.f32 0.0, %v518
  %v520 = vpop.f32.mrf.mxu0
  %v521 = vadd.f32 0.0, %v520
  %522 = vmatmul.bf16.gmra.mxu0 %v366
  %v523 = vpop.f32.mrf.mxu0
  %v524 = vadd.f32 0.0, %v523
  %v525 = vpop.f32.mrf.mxu0
  %v526 = vadd.f32 0.0, %v525
  %527 = vmatmul.bf16.gmra.mxu0 %v367
  %v528 = vpop.f32.mrf.mxu0
  %v529 = vadd.f32 0.0, %v528
  %v530 = vpop.f32.mrf.mxu0
  %v531 = vadd.f32 0.0, %v530
  %532 = vmatmul.bf16.gmra.mxu0 %v368
  %v533 = vpop.f32.mrf.mxu0
  %v534 = vadd.f32 0.0, %v533
  %v535 = vpop.f32.mrf.mxu0
  %v536 = vadd.f32 0.0, %v535
  %537 = vmatmul.bf16.gmra.mxu0 %v369
  %v538 = vpop.f32.mrf.mxu0
  %v539 = vadd.f32 0.0, %v538
  %v540 = vpop.f32.mrf.mxu0
  %v541 = vadd.f32 0.0, %v540
  %542 = vmatmul.bf16.gmra.mxu0 %v370
  %v543 = vpop.f32.mrf.mxu0
  %v544 = vadd.f32 0.0, %v543
  %v545 = vpop.f32.mrf.mxu0
  %v546 = vadd.f32 0.0, %v545
  %547 = vmatmul.bf16.gmra.mxu0 %v371
  %v548 = vpop.f32.mrf.mxu0
  %v549 = vadd.f32 0.0, %v548
  %v550 = vpop.f32.mrf.mxu0
  %v551 = vadd.f32 0.0, %v550
  %552 = vmatmul.bf16.gmra.mxu0 %v372
  %v553 = vpop.f32.mrf.mxu0
  %v554 = vadd.f32 0.0, %v553
  %v555 = vpop.f32.mrf.mxu0
  %v556 = vadd.f32 0.0, %v555
  %557 = vmatmul.bf16.gmra.mxu0 %v373
  %v558 = vpop.f32.mrf.mxu0
  %v559 = vadd.f32 0.0, %v558
  %v560 = vpop.f32.mrf.mxu0
  %v561 = vadd.f32 0.0, %v560
  %562 = vmatmul.bf16.gmra.mxu0 %v374
  %v563 = vpop.f32.mrf.mxu0
  %v564 = vadd.f32 0.0, %v563
  %v565 = vpop.f32.mrf.mxu0
  %v566 = vadd.f32 0.0, %v565
  %567 = vmatmul.bf16.gmra.mxu0 %v375
  %v568 = vpop.f32.mrf.mxu0
  %v569 = vadd.f32 0.0, %v568
  %v570 = vpop.f32.mrf.mxu0
  %v571 = vadd.f32 0.0, %v570
  %572 = vmatmul.bf16.gmra.mxu0 %v376
  %v573 = vpop.f32.mrf.mxu0
  %v574 = vadd.f32 0.0, %v573
  %v575 = vpop.f32.mrf.mxu0
  %v576 = vadd.f32 0.0, %v575
  %577 = vmatmul.bf16.gmra.mxu0 %v377
  %v578 = vpop.f32.mrf.mxu0
  %v579 = vadd.f32 0.0, %v578
  %v580 = vpop.f32.mrf.mxu0
  %v581 = vadd.f32 0.0, %v580
  %582 = vmatmul.bf16.gmra.mxu0 %v378
  %v583 = vpop.f32.mrf.mxu0
  %v584 = vadd.f32 0.0, %v583
  %v585 = vpop.f32.mrf.mxu0
  %v586 = vadd.f32 0.0, %v585
  %587 = vmatmul.bf16.gmra.mxu0 %v379
  %v588 = vpop.f32.mrf.mxu0
  %v589 = vadd.f32 0.0, %v588
  %v590 = vpop.f32.mrf.mxu0
  %v591 = vadd.f32 0.0, %v590
  %592 = vmatmul.bf16.gmra.mxu0 %v380
  %v593 = vpop.f32.mrf.mxu0
  %v594 = vadd.f32 0.0, %v593
  %v595 = vpop.f32.mrf.mxu0
  %v596 = vadd.f32 0.0, %v595
  %597 = vmatmul.bf16.gmra.mxu0 %v381
  %v598 = vpop.f32.mrf.mxu0
  %v599 = vadd.f32 0.0, %v598
  %v600 = vpop.f32.mrf.mxu0
  %v601 = vadd.f32 0.0, %v600
  %602 = vmatmul.bf16.gmra.mxu0 %v382
  %v603 = vpop.f32.mrf.mxu0
  %v604 = vadd.f32 0.0, %v603
  %v605 = vpop.f32.mrf.mxu0
  %v606 = vadd.f32 0.0, %v605
  %607 = vmatmul.bf16.gmra.mxu0 %v383
  %v608 = vpop.f32.mrf.mxu0
  %v609 = vadd.f32 0.0, %v608
  %v610 = vpop.f32.mrf.mxu0
  %v611 = vadd.f32 0.0, %v610
  %612 = vmatmul.bf16.gmra.mxu0 %v384
  %v613 = vpop.f32.mrf.mxu0
  %v614 = vadd.f32 0.0, %v613
  %v615 = vpop.f32.mrf.mxu0
  %v616 = vadd.f32 0.0, %v615
  %617 = vmatmul.bf16.gmra.mxu0 %v385
  %v618 = vpop.f32.mrf.mxu0
  %v619 = vadd.f32 0.0, %v618
  %v620 = vpop.f32.mrf.mxu0
  %v621 = vadd.f32 0.0, %v620
  %622 = vmatmul.bf16.gmra.mxu0 %v386
  %v623 = vpop.f32.mrf.mxu0
  %v624 = vadd.f32 0.0, %v623
  %v625 = vpop.f32.mrf.mxu0
  %v626 = vadd.f32 0.0, %v625
  %627 = vmatmul.bf16.gmra.mxu0 %v387
  %v628 = vpop.f32.mrf.mxu0
  %v629 = vadd.f32 0.0, %v628
  %v630 = vpop.f32.mrf.mxu0
  %v631 = vadd.f32 0.0, %v630
  %632 = vmatmul.bf16.gmra.mxu0 %v388
  %v633 = vpop.f32.mrf.mxu0
  %v634 = vadd.f32 0.0, %v633
  %v635 = vpop.f32.mrf.mxu0
  %v636 = vadd.f32 0.0, %v635
  %637 = vdwg.mxu0
  %v638 = vadd.f32 %v85, %v479
  %v639 = vadd.f32 %v86, %v481
  %v640 = vadd.f32 %v87, %v484
  %v641 = vadd.f32 %v88, %v486
  %v642 = vadd.f32 %v89, %v489
  %v643 = vadd.f32 %v90, %v491
  %v644 = vadd.f32 %v91, %v494
  %v645 = vadd.f32 %v92, %v496
  %v646 = vadd.f32 %v93, %v499
  %v647 = vadd.f32 %v94, %v501
  %v648 = vadd.f32 %v95, %v504
  %v649 = vadd.f32 %v96, %v506
  %v650 = vadd.f32 %v97, %v509
  %v651 = vadd.f32 %v98, %v511
  %v652 = vadd.f32 %v99, %v514
  %v653 = vadd.f32 %v100, %v516
  %v654 = vadd.f32 %v101, %v519
  %v655 = vadd.f32 %v102, %v521
  %v656 = vadd.f32 %v103, %v524
  %v657 = vadd.f32 %v104, %v526
  %v658 = vadd.f32 %v105, %v529
  %v659 = vadd.f32 %v106, %v531
  %v660 = vadd.f32 %v107, %v534
  %v661 = vadd.f32 %v108, %v536
  %v662 = vadd.f32 %v109, %v539
  %v663 = vadd.f32 %v110, %v541
  %v664 = vadd.f32 %v111, %v544
  %v665 = vadd.f32 %v112, %v546
  %v666 = vadd.f32 %v113, %v549
  %v667 = vadd.f32 %v114, %v551
  %v668 = vadd.f32 %v115, %v554
  %v669 = vadd.f32 %v116, %v556
  %v670 = vadd.f32 %v117, %v559
  %v671 = vadd.f32 %v118, %v561
  %v672 = vadd.f32 %v119, %v564
  %v673 = vadd.f32 %v120, %v566
  %v674 = vadd.f32 %v121, %v569
  %v675 = vadd.f32 %v122, %v571
  %v676 = vadd.f32 %v123, %v574
  %v677 = vadd.f32 %v124, %v576
  %v678 = vadd.f32 %v125, %v579
  %v679 = vadd.f32 %v126, %v581
  %v680 = vadd.f32 %v127, %v584
  %v681 = vadd.f32 %v128, %v586
  %v682 = vadd.f32 %v129, %v589
  %v683 = vadd.f32 %v130, %v591
  %v684 = vadd.f32 %v131, %v594
  %v685 = vadd.f32 %v132, %v596
  %v686 = vadd.f32 %v133, %v599
  %v687 = vadd.f32 %v134, %v601
  %v688 = vadd.f32 %v135, %v604
  %v689 = vadd.f32 %v136, %v606
  %v690 = vadd.f32 %v137, %v609
  %v691 = vadd.f32 %v138, %v611
  %v692 = vadd.f32 %v139, %v614
  %v693 = vadd.f32 %v140, %v616
  %v694 = vadd.f32 %v141, %v619
  %v695 = vadd.f32 %v142, %v621
  %v696 = vadd.f32 %v143, %v624
  %v697 = vadd.f32 %v144, %v626
  %v698 = vadd.f32 %v145, %v629
  %v699 = vadd.f32 %v146, %v631
  %v700 = vadd.f32 %v147, %v634
  %v701 = vadd.f32 %v148, %v636
  %702 = vst [vmem:[#allocation2] sm:$0xff] %v638
  %703 = vst [vmem:[#allocation2 + $0x8] sm:$0xff] %v639
  %704 = vst [vmem:[#allocation2 + $0x10] sm:$0xff] %v640
  %705 = vst [vmem:[#allocation2 + $0x18] sm:$0xff] %v641
  %706 = vst [vmem:[#allocation2 + $0x20] sm:$0xff] %v642
  %707 = vst [vmem:[#allocation2 + $0x28] sm:$0xff] %v643
  %708 = vst [vmem:[#allocation2 + $0x30] sm:$0xff] %v644
  %709 = vst [vmem:[#allocation2 + $0x38] sm:$0xff] %v645
  %710 = vst [vmem:[#allocation2 + $0x40] sm:$0xff] %v646
  %711 = vst [vmem:[#allocation2 + $0x48] sm:$0xff] %v647
  %712 = vst [vmem:[#allocation2 + $0x50] sm:$0xff] %v648
  %713 = vst [vmem:[#allocation2 + $0x58] sm:$0xff] %v649
  %714 = vst [vmem:[#allocation2 + $0x60] sm:$0xff] %v650
  %715 = vst [vmem:[#allocation2 + $0x68] sm:$0xff] %v651
  %716 = vst [vmem:[#allocation2 + $0x70] sm:$0xff] %v652
  %717 = vst [vmem:[#allocation2 + $0x78] sm:$0xff] %v653
  %718 = vst [vmem:[#allocation2 + $0x80] sm:$0xff] %v654
  %719 = vst [vmem:[#allocation2 + $0x88] sm:$0xff] %v655
  %720 = vst [vmem:[#allocation2 + $0x90] sm:$0xff] %v656
  %721 = vst [vmem:[#allocation2 + $0x98] sm:$0xff] %v657
  %722 = vst [vmem:[#allocation2 + $0xa0] sm:$0xff] %v658
  %723 = vst [vmem:[#allocation2 + $0xa8] sm:$0xff] %v659
  %724 = vst [vmem:[#allocation2 + $0xb0] sm:$0xff] %v660
  %725 = vst [vmem:[#allocation2 + $0xb8] sm:$0xff] %v661
  %726 = vst [vmem:[#allocation2 + $0xc0] sm:$0xff] %v662
  %727 = vst [vmem:[#allocation2 + $0xc8] sm:$0xff] %v663
  %728 = vst [vmem:[#allocation2 + $0xd0] sm:$0xff] %v664
  %729 = vst [vmem:[#allocation2 + $0xd8] sm:$0xff] %v665
  %730 = vst [vmem:[#allocation2 + $0xe0] sm:$0xff] %v666
  %731 = vst [vmem:[#allocation2 + $0xe8] sm:$0xff] %v667
  %732 = vst [vmem:[#allocation2 + $0xf0] sm:$0xff] %v668
  %733 = vst [vmem:[#allocation2 + $0xf8] sm:$0xff] %v669
  %734 = vst [vmem:[#allocation2 + $0x100] sm:$0xff] %v670
  %735 = vst [vmem:[#allocation2 + $0x108] sm:$0xff] %v671
  %736 = vst [vmem:[#allocation2 + $0x110] sm:$0xff] %v672
  %737 = vst [vmem:[#allocation2 + $0x118] sm:$0xff] %v673
  %738 = vst [vmem:[#allocation2 + $0x120] sm:$0xff] %v674
  %739 = vst [vmem:[#allocation2 + $0x128] sm:$0xff] %v675
  %740 = vst [vmem:[#allocation2 + $0x130] sm:$0xff] %v676
  %741 = vst [vmem:[#allocation2 + $0x138] sm:$0xff] %v677
  %742 = vst [vmem:[#allocation2 + $0x140] sm:$0xff] %v678
  %743 = vst [vmem:[#allocation2 + $0x148] sm:$0xff] %v679
  %744 = vst [vmem:[#allocation2 + $0x150] sm:$0xff] %v680
  %745 = vst [vmem:[#allocation2 + $0x158] sm:$0xff] %v681
  %746 = vst [vmem:[#allocation2 + $0x160] sm:$0xff] %v682
  %747 = vst [vmem:[#allocation2 + $0x168] sm:$0xff] %v683
  %748 = vst [vmem:[#allocation2 + $0x170] sm:$0xff] %v684
  %749 = vst [vmem:[#allocation2 + $0x178] sm:$0xff] %v685
  %750 = vst [vmem:[#allocation2 + $0x180] sm:$0xff] %v686
  %751 = vst [vmem:[#allocation2 + $0x188] sm:$0xff] %v687
  %752 = vst [vmem:[#allocation2 + $0x190] sm:$0xff] %v688
  %753 = vst [vmem:[#allocation2 + $0x198] sm:$0xff] %v689
  %754 = vst [vmem:[#allocation2 + $0x1a0] sm:$0xff] %v690
  %755 = vst [vmem:[#allocation2 + $0x1a8] sm:$0xff] %v691
  %756 = vst [vmem:[#allocation2 + $0x1b0] sm:$0xff] %v692
  %757 = vst [vmem:[#allocation2 + $0x1b8] sm:$0xff] %v693
  %758 = vst [vmem:[#allocation2 + $0x1c0] sm:$0xff] %v694
  %759 = vst [vmem:[#allocation2 + $0x1c8] sm:$0xff] %v695
  %760 = vst [vmem:[#allocation2 + $0x1d0] sm:$0xff] %v696
  %761 = vst [vmem:[#allocation2 + $0x1d8] sm:$0xff] %v697
  %762 = vst [vmem:[#allocation2 + $0x1e0] sm:$0xff] %v698
  %763 = vst [vmem:[#allocation2 + $0x1e8] sm:$0xff] %v699
  %764 = vst [vmem:[#allocation2 + $0x1f0] sm:$0xff] %v700
  %765 = vst [vmem:[#allocation2 + $0x1f8] sm:$0xff] %v701
  // Predicated region
  $region22: #{cpnet_forward.15} parent=0 // pred_check
    %p766 = pneg %p17
  $region23: #{cpnet_forward.15} parent=0 // pred_check_branch
    %768 = sbr.rel (%p766) target = $region25
  $region24: #{cpnet_forward.15} parent=0 // pred_region
    %v769 = vld [vmem:[#allocation2] sm:$0xff]
    %v770 = vld [vmem:[#allocation2 + $0x8] sm:$0xff]
    %v771 = vld [vmem:[#allocation2 + $0x10] sm:$0xff]
    %v772 = vld [vmem:[#allocation2 + $0x18] sm:$0xff]
    %v773 = vld [vmem:[#allocation2 + $0x20] sm:$0xff]
    %v774 = vld [vmem:[#allocation2 + $0x28] sm:$0xff]
    %v775 = vld [vmem:[#allocation2 + $0x30] sm:$0xff]
    %v776 = vld [vmem:[#allocation2 + $0x38] sm:$0xff]
    %v777 = vld [vmem:[#allocation2 + $0x40] sm:$0xff]
    %v778 = vld [vmem:[#allocation2 + $0x48] sm:$0xff]
    %v779 = vld [vmem:[#allocation2 + $0x50] sm:$0xff]
    %v780 = vld [vmem:[#allocation2 + $0x58] sm:$0xff]
    %v781 = vld [vmem:[#allocation2 + $0x60] sm:$0xff]
    %v782 = vld [vmem:[#allocation2 + $0x68] sm:$0xff]
    %v783 = vld [vmem:[#allocation2 + $0x70] sm:$0xff]
    %v784 = vld [vmem:[#allocation2 + $0x78] sm:$0xff]
    %v785 = vld [vmem:[#allocation2 + $0x80] sm:$0xff]
    %v786 = vld [vmem:[#allocation2 + $0x88] sm:$0xff]
    %v787 = vld [vmem:[#allocation2 + $0x90] sm:$0xff]
    %v788 = vld [vmem:[#allocation2 + $0x98] sm:$0xff]
    %v789 = vld [vmem:[#allocation2 + $0xa0] sm:$0xff]
    %v790 = vld [vmem:[#allocation2 + $0xa8] sm:$0xff]
    %v791 = vld [vmem:[#allocation2 + $0xb0] sm:$0xff]
    %v792 = vld [vmem:[#allocation2 + $0xb8] sm:$0xff]
    %v793 = vld [vmem:[#allocation2 + $0xc0] sm:$0xff]
    %v794 = vld [vmem:[#allocation2 + $0xc8] sm:$0xff]
    %v795 = vld [vmem:[#allocation2 + $0xd0] sm:$0xff]
    %v796 = vld [vmem:[#allocation2 + $0xd8] sm:$0xff]
    %v797 = vld [vmem:[#allocation2 + $0xe0] sm:$0xff]
    %v798 = vld [vmem:[#allocation2 + $0xe8] sm:$0xff]
    %v799 = vld [vmem:[#allocation2 + $0xf0] sm:$0xff]
    %v800 = vld [vmem:[#allocation2 + $0xf8] sm:$0xff]
    %v801 = vld [vmem:[#allocation2 + $0x100] sm:$0xff]
    %v802 = vld [vmem:[#allocation2 + $0x108] sm:$0xff]
    %v803 = vld [vmem:[#allocation2 + $0x110] sm:$0xff]
    %v804 = vld [vmem:[#allocation2 + $0x118] sm:$0xff]
    %v805 = vld [vmem:[#allocation2 + $0x120] sm:$0xff]
    %v806 = vld [vmem:[#allocation2 + $0x128] sm:$0xff]
    %v807 = vld [vmem:[#allocation2 + $0x130] sm:$0xff]
    %v808 = vld [vmem:[#allocation2 + $0x138] sm:$0xff]
    %v809 = vld [vmem:[#allocation2 + $0x140] sm:$0xff]
    %v810 = vld [vmem:[#allocation2 + $0x148] sm:$0xff]
    %v811 = vld [vmem:[#allocation2 + $0x150] sm:$0xff]
    %v812 = vld [vmem:[#allocation2 + $0x158] sm:$0xff]
    %v813 = vld [vmem:[#allocation2 + $0x160] sm:$0xff]
    %v814 = vld [vmem:[#allocation2 + $0x168] sm:$0xff]
    %v815 = vld [vmem:[#allocation2 + $0x170] sm:$0xff]
    %v816 = vld [vmem:[#allocation2 + $0x178] sm:$0xff]
    %v817 = vld [vmem:[#allocation2 + $0x180] sm:$0xff]
    %v818 = vld [vmem:[#allocation2 + $0x188] sm:$0xff]
    %v819 = vld [vmem:[#allocation2 + $0x190] sm:$0xff]
    %v820 = vld [vmem:[#allocation2 + $0x198] sm:$0xff]
    %v821 = vld [vmem:[#allocation2 + $0x1a0] sm:$0xff]
    %v822 = vld [vmem:[#allocation2 + $0x1a8] sm:$0xff]
    %v823 = vld [vmem:[#allocation2 + $0x1b0] sm:$0xff]
    %v824 = vld [vmem:[#allocation2 + $0x1b8] sm:$0xff]
    %v825 = vld [vmem:[#allocation2 + $0x1c0] sm:$0xff]
    %v826 = vld [vmem:[#allocation2 + $0x1c8] sm:$0xff]
    %v827 = vld [vmem:[#allocation2 + $0x1d0] sm:$0xff]
    %v828 = vld [vmem:[#allocation2 + $0x1d8] sm:$0xff]
    %v829 = vld [vmem:[#allocation2 + $0x1e0] sm:$0xff]
    %v830 = vld [vmem:[#allocation2 + $0x1e8] sm:$0xff]
    %v831 = vld [vmem:[#allocation2 + $0x1f0] sm:$0xff]
    %v832 = vld [vmem:[#allocation2 + $0x1f8] sm:$0xff]
    %v833 = vld [vmem:[%s2] sm:$0x1]
    %v835 = vperm.slane %v833, 0
    %v837 = vmul.f32 %v769, %v835
    %v838 = vmul.f32 %v770, %v835
    %v839 = vmul.f32 %v771, %v835
    %v840 = vmul.f32 %v772, %v835
    %v841 = vmul.f32 %v773, %v835
    %v842 = vmul.f32 %v774, %v835
    %v843 = vmul.f32 %v775, %v835
    %v844 = vmul.f32 %v776, %v835
    %v845 = vmul.f32 %v777, %v835
    %v846 = vmul.f32 %v778, %v835
    %v847 = vmul.f32 %v779, %v835
    %v848 = vmul.f32 %v780, %v835
    %v849 = vmul.f32 %v781, %v835
    %v850 = vmul.f32 %v782, %v835
    %v851 = vmul.f32 %v783, %v835
    %v852 = vmul.f32 %v784, %v835
    %v853 = vmul.f32 %v785, %v835
    %v854 = vmul.f32 %v786, %v835
    %v855 = vmul.f32 %v787, %v835
    %v856 = vmul.f32 %v788, %v835
    %v857 = vmul.f32 %v789, %v835
    %v858 = vmul.f32 %v790, %v835
    %v859 = vmul.f32 %v791, %v835
    %v860 = vmul.f32 %v792, %v835
    %v861 = vmul.f32 %v793, %v835
    %v862 = vmul.f32 %v794, %v835
    %v863 = vmul.f32 %v795, %v835
    %v864 = vmul.f32 %v796, %v835
    %v865 = vmul.f32 %v797, %v835
    %v866 = vmul.f32 %v798, %v835
    %v867 = vmul.f32 %v799, %v835
    %v868 = vmul.f32 %v800, %v835
    %v869 = vmul.f32 %v801, %v835
    %v870 = vmul.f32 %v802, %v835
    %v871 = vmul.f32 %v803, %v835
    %v872 = vmul.f32 %v804, %v835
    %v873 = vmul.f32 %v805, %v835
    %v874 = vmul.f32 %v806, %v835
    %v875 = vmul.f32 %v807, %v835
    %v876 = vmul.f32 %v808, %v835
    %v877 = vmul.f32 %v809, %v835
    %v878 = vmul.f32 %v810, %v835
    %v879 = vmul.f32 %v811, %v835
    %v880 = vmul.f32 %v812, %v835
    %v881 = vmul.f32 %v813, %v835
    %v882 = vmul.f32 %v814, %v835
    %v883 = vmul.f32 %v815, %v835
    %v884 = vmul.f32 %v816, %v835
    %v885 = vmul.f32 %v817, %v835
    %v886 = vmul.f32 %v818, %v835
    %v887 = vmul.f32 %v819, %v835
    %v888 = vmul.f32 %v820, %v835
    %v889 = vmul.f32 %v821, %v835
    %v890 = vmul.f32 %v822, %v835
    %v891 = vmul.f32 %v823, %v835
    %v892 = vmul.f32 %v824, %v835
    %v893 = vmul.f32 %v825, %v835
    %v894 = vmul.f32 %v826, %v835
    %v895 = vmul.f32 %v827, %v835
    %v896 = vmul.f32 %v828, %v835
    %v897 = vmul.f32 %v829, %v835
    %v898 = vmul.f32 %v830, %v835
    %v899 = vmul.f32 %v831, %v835
    %v900 = vmul.f32 %v832, %v835
    %v901 = vld [vmem:[%s3] sm:$0x1]
    %v903 = vperm.slane %v901, 0
    %v905 = vadd.f32 %v837, %v903
    %v906 = vadd.f32 %v838, %v903
    %v907 = vadd.f32 %v839, %v903
    %v908 = vadd.f32 %v840, %v903
    %v909 = vadd.f32 %v841, %v903
    %v910 = vadd.f32 %v842, %v903
    %v911 = vadd.f32 %v843, %v903
    %v912 = vadd.f32 %v844, %v903
    %v913 = vadd.f32 %v845, %v903
    %v914 = vadd.f32 %v846, %v903
    %v915 = vadd.f32 %v847, %v903
    %v916 = vadd.f32 %v848, %v903
    %v917 = vadd.f32 %v849, %v903
    %v918 = vadd.f32 %v850, %v903
    %v919 = vadd.f32 %v851, %v903
    %v920 = vadd.f32 %v852, %v903
    %v921 = vadd.f32 %v853, %v903
    %v922 = vadd.f32 %v854, %v903
    %v923 = vadd.f32 %v855, %v903
    %v924 = vadd.f32 %v856, %v903
    %v925 = vadd.f32 %v857, %v903
    %v926 = vadd.f32 %v858, %v903
    %v927 = vadd.f32 %v859, %v903
    %v928 = vadd.f32 %v860, %v903
    %v929 = vadd.f32 %v861, %v903
    %v930 = vadd.f32 %v862, %v903
    %v931 = vadd.f32 %v863, %v903
    %v932 = vadd.f32 %v864, %v903
    %v933 = vadd.f32 %v865, %v903
    %v934 = vadd.f32 %v866, %v903
    %v935 = vadd.f32 %v867, %v903
    %v936 = vadd.f32 %v868, %v903
    %v937 = vadd.f32 %v869, %v903
    %v938 = vadd.f32 %v870, %v903
    %v939 = vadd.f32 %v871, %v903
    %v940 = vadd.f32 %v872, %v903
    %v941 = vadd.f32 %v873, %v903
    %v942 = vadd.f32 %v874, %v903
    %v943 = vadd.f32 %v875, %v903
    %v944 = vadd.f32 %v876, %v903
    %v945 = vadd.f32 %v877, %v903
    %v946 = vadd.f32 %v878, %v903
    %v947 = vadd.f32 %v879, %v903
    %v948 = vadd.f32 %v880, %v903
    %v949 = vadd.f32 %v881, %v903
    %v950 = vadd.f32 %v882, %v903
    %v951 = vadd.f32 %v883, %v903
    %v952 = vadd.f32 %v884, %v903
    %v953 = vadd.f32 %v885, %v903
    %v954 = vadd.f32 %v886, %v903
    %v955 = vadd.f32 %v887, %v903
    %v956 = vadd.f32 %v888, %v903
    %v957 = vadd.f32 %v889, %v903
    %v958 = vadd.f32 %v890, %v903
    %v959 = vadd.f32 %v891, %v903
    %v960 = vadd.f32 %v892, %v903
    %v961 = vadd.f32 %v893, %v903
    %v962 = vadd.f32 %v894, %v903
    %v963 = vadd.f32 %v895, %v903
    %v964 = vadd.f32 %v896, %v903
    %v965 = vadd.f32 %v897, %v903
    %v966 = vadd.f32 %v898, %v903
    %v967 = vadd.f32 %v899, %v903
    %v968 = vadd.f32 %v900, %v903
    %v969 = vmax.f32 %v905, 0.0
    %v970 = vmax.f32 %v906, 0.0
    %v971 = vmax.f32 %v907, 0.0
    %v972 = vmax.f32 %v908, 0.0
    %v973 = vmax.f32 %v909, 0.0
    %v974 = vmax.f32 %v910, 0.0
    %v975 = vmax.f32 %v911, 0.0
    %v976 = vmax.f32 %v912, 0.0
    %v977 = vmax.f32 %v913, 0.0
    %v978 = vmax.f32 %v914, 0.0
    %v979 = vmax.f32 %v915, 0.0
    %v980 = vmax.f32 %v916, 0.0
    %v981 = vmax.f32 %v917, 0.0
    %v982 = vmax.f32 %v918, 0.0
    %v983 = vmax.f32 %v919, 0.0
    %v984 = vmax.f32 %v920, 0.0
    %v985 = vmax.f32 %v921, 0.0
    %v986 = vmax.f32 %v922, 0.0
    %v987 = vmax.f32 %v923, 0.0
    %v988 = vmax.f32 %v924, 0.0
    %v989 = vmax.f32 %v925, 0.0
    %v990 = vmax.f32 %v926, 0.0
    %v991 = vmax.f32 %v927, 0.0
    %v992 = vmax.f32 %v928, 0.0
    %v993 = vmax.f32 %v929, 0.0
    %v994 = vmax.f32 %v930, 0.0
    %v995 = vmax.f32 %v931, 0.0
    %v996 = vmax.f32 %v932, 0.0
    %v997 = vmax.f32 %v933, 0.0
    %v998 = vmax.f32 %v934, 0.0
    %v999 = vmax.f32 %v935, 0.0
    %v1000 = vmax.f32 %v936, 0.0
    %v1001 = vmax.f32 %v937, 0.0
    %v1002 = vmax.f32 %v938, 0.0
    %v1003 = vmax.f32 %v939, 0.0
    %v1004 = vmax.f32 %v940, 0.0
    %v1005 = vmax.f32 %v941, 0.0
    %v1006 = vmax.f32 %v942, 0.0
    %v1007 = vmax.f32 %v943, 0.0
    %v1008 = vmax.f32 %v944, 0.0
    %v1009 = vmax.f32 %v945, 0.0
    %v1010 = vmax.f32 %v946, 0.0
    %v1011 = vmax.f32 %v947, 0.0
    %v1012 = vmax.f32 %v948, 0.0
    %v1013 = vmax.f32 %v949, 0.0
    %v1014 = vmax.f32 %v950, 0.0
    %v1015 = vmax.f32 %v951, 0.0
    %v1016 = vmax.f32 %v952, 0.0
    %v1017 = vmax.f32 %v953, 0.0
    %v1018 = vmax.f32 %v954, 0.0
    %v1019 = vmax.f32 %v955, 0.0
    %v1020 = vmax.f32 %v956, 0.0
    %v1021 = vmax.f32 %v957, 0.0
    %v1022 = vmax.f32 %v958, 0.0
    %v1023 = vmax.f32 %v959, 0.0
    %v1024 = vmax.f32 %v960, 0.0
    %v1025 = vmax.f32 %v961, 0.0
    %v1026 = vmax.f32 %v962, 0.0
    %v1027 = vmax.f32 %v963, 0.0
    %v1028 = vmax.f32 %v964, 0.0
    %v1029 = vmax.f32 %v965, 0.0
    %v1030 = vmax.f32 %v966, 0.0
    %v1031 = vmax.f32 %v967, 0.0
    %v1032 = vmax.f32 %v968, 0.0
    %v1033 = vpack.c.bf16 %v969, %v969
    %v1034 = vpack.c.bf16 %v970, %v970
    %v1035 = vpack.c.bf16 %v971, %v971
    %v1036 = vpack.c.bf16 %v972, %v972
    %v1037 = vpack.c.bf16 %v973, %v973
    %v1038 = vpack.c.bf16 %v974, %v974
    %v1039 = vpack.c.bf16 %v975, %v975
    %v1040 = vpack.c.bf16 %v976, %v976
    %v1041 = vpack.c.bf16 %v977, %v977
    %v1042 = vpack.c.bf16 %v978, %v978
    %v1043 = vpack.c.bf16 %v979, %v979
    %v1044 = vpack.c.bf16 %v980, %v980
    %v1045 = vpack.c.bf16 %v981, %v981
    %v1046 = vpack.c.bf16 %v982, %v982
    %v1047 = vpack.c.bf16 %v983, %v983
    %v1048 = vpack.c.bf16 %v984, %v984
    %v1049 = vpack.c.bf16 %v985, %v985
    %v1050 = vpack.c.bf16 %v986, %v986
    %v1051 = vpack.c.bf16 %v987, %v987
    %v1052 = vpack.c.bf16 %v988, %v988
    %v1053 = vpack.c.bf16 %v989, %v989
    %v1054 = vpack.c.bf16 %v990, %v990
    %v1055 = vpack.c.bf16 %v991, %v991
    %v1056 = vpack.c.bf16 %v992, %v992
    %v1057 = vpack.c.bf16 %v993, %v993
    %v1058 = vpack.c.bf16 %v994, %v994
    %v1059 = vpack.c.bf16 %v995, %v995
    %v1060 = vpack.c.bf16 %v996, %v996
    %v1061 = vpack.c.bf16 %v997, %v997
    %v1062 = vpack.c.bf16 %v998, %v998
    %v1063 = vpack.c.bf16 %v999, %v999
    %v1064 = vpack.c.bf16 %v1000, %v1000
    %v1065 = vpack.c.bf16 %v1001, %v1001
    %v1066 = vpack.c.bf16 %v1002, %v1002
    %v1067 = vpack.c.bf16 %v1003, %v1003
    %v1068 = vpack.c.bf16 %v1004, %v1004
    %v1069 = vpack.c.bf16 %v1005, %v1005
    %v1070 = vpack.c.bf16 %v1006, %v1006
    %v1071 = vpack.c.bf16 %v1007, %v1007
    %v1072 = vpack.c.bf16 %v1008, %v1008
    %v1073 = vpack.c.bf16 %v1009, %v1009
    %v1074 = vpack.c.bf16 %v1010, %v1010
    %v1075 = vpack.c.bf16 %v1011, %v1011
    %v1076 = vpack.c.bf16 %v1012, %v1012
    %v1077 = vpack.c.bf16 %v1013, %v1013
    %v1078 = vpack.c.bf16 %v1014, %v1014
    %v1079 = vpack.c.bf16 %v1015, %v1015
    %v1080 = vpack.c.bf16 %v1016, %v1016
    %v1081 = vpack.c.bf16 %v1017, %v1017
    %v1082 = vpack.c.bf16 %v1018, %v1018
    %v1083 = vpack.c.bf16 %v1019, %v1019
    %v1084 = vpack.c.bf16 %v1020, %v1020
    %v1085 = vpack.c.bf16 %v1021, %v1021
    %v1086 = vpack.c.bf16 %v1022, %v1022
    %v1087 = vpack.c.bf16 %v1023, %v1023
    %v1088 = vpack.c.bf16 %v1024, %v1024
    %v1089 = vpack.c.bf16 %v1025, %v1025
    %v1090 = vpack.c.bf16 %v1026, %v1026
    %v1091 = vpack.c.bf16 %v1027, %v1027
    %v1092 = vpack.c.bf16 %v1028, %v1028
    %v1093 = vpack.c.bf16 %v1029, %v1029
    %v1094 = vpack.c.bf16 %v1030, %v1030
    %v1095 = vpack.c.bf16 %v1031, %v1031
    %v1096 = vpack.c.bf16 %v1032, %v1032
    %1097 = vst [vmem:[%s4] sm:$0xf] %v1033
    %1098 = vst [vmem:[%s4 + $0x4] sm:$0xf] %v1034
    %1099 = vst [vmem:[%s4 + $0x8] sm:$0xf] %v1035
    %1100 = vst [vmem:[%s4 + $0xc] sm:$0xf] %v1036
    %1101 = vst [vmem:[%s4 + $0x10] sm:$0xf] %v1037
    %1102 = vst [vmem:[%s4 + $0x14] sm:$0xf] %v1038
    %1103 = vst [vmem:[%s4 + $0x18] sm:$0xf] %v1039
    %1104 = vst [vmem:[%s4 + $0x1c] sm:$0xf] %v1040
    %1105 = vst [vmem:[%s4 + $0x20] sm:$0xf] %v1041
    %1106 = vst [vmem:[%s4 + $0x24] sm:$0xf] %v1042
    %1107 = vst [vmem:[%s4 + $0x28] sm:$0xf] %v1043
    %1108 = vst [vmem:[%s4 + $0x2c] sm:$0xf] %v1044
    %1109 = vst [vmem:[%s4 + $0x30] sm:$0xf] %v1045
    %1110 = vst [vmem:[%s4 + $0x34] sm:$0xf] %v1046
    %1111 = vst [vmem:[%s4 + $0x38] sm:$0xf] %v1047
    %1112 = vst [vmem:[%s4 + $0x3c] sm:$0xf] %v1048
    %1113 = vst [vmem:[%s4 + $0x40] sm:$0xf] %v1049
    %1114 = vst [vmem:[%s4 + $0x44] sm:$0xf] %v1050
    %1115 = vst [vmem:[%s4 + $0x48] sm:$0xf] %v1051
    %1116 = vst [vmem:[%s4 + $0x4c] sm:$0xf] %v1052
    %1117 = vst [vmem:[%s4 + $0x50] sm:$0xf] %v1053
    %1118 = vst [vmem:[%s4 + $0x54] sm:$0xf] %v1054
    %1119 = vst [vmem:[%s4 + $0x58] sm:$0xf] %v1055
    %1120 = vst [vmem:[%s4 + $0x5c] sm:$0xf] %v1056
    %1121 = vst [vmem:[%s4 + $0x60] sm:$0xf] %v1057
    %1122 = vst [vmem:[%s4 + $0x64] sm:$0xf] %v1058
    %1123 = vst [vmem:[%s4 + $0x68] sm:$0xf] %v1059
    %1124 = vst [vmem:[%s4 + $0x6c] sm:$0xf] %v1060
    %1125 = vst [vmem:[%s4 + $0x70] sm:$0xf] %v1061
    %1126 = vst [vmem:[%s4 + $0x74] sm:$0xf] %v1062
    %1127 = vst [vmem:[%s4 + $0x78] sm:$0xf] %v1063
    %1128 = vst [vmem:[%s4 + $0x7c] sm:$0xf] %v1064
    %1129 = vst [vmem:[%s4 + $0x80] sm:$0xf] %v1065
    %1130 = vst [vmem:[%s4 + $0x84] sm:$0xf] %v1066
    %1131 = vst [vmem:[%s4 + $0x88] sm:$0xf] %v1067
    %1132 = vst [vmem:[%s4 + $0x8c] sm:$0xf] %v1068
    %1133 = vst [vmem:[%s4 + $0x90] sm:$0xf] %v1069
    %1134 = vst [vmem:[%s4 + $0x94] sm:$0xf] %v1070
    %1135 = vst [vmem:[%s4 + $0x98] sm:$0xf] %v1071
    %1136 = vst [vmem:[%s4 + $0x9c] sm:$0xf] %v1072
    %1137 = vst [vmem:[%s4 + $0xa0] sm:$0xf] %v1073
    %1138 = vst [vmem:[%s4 + $0xa4] sm:$0xf] %v1074
    %1139 = vst [vmem:[%s4 + $0xa8] sm:$0xf] %v1075
    %1140 = vst [vmem:[%s4 + $0xac] sm:$0xf] %v1076
    %1141 = vst [vmem:[%s4 + $0xb0] sm:$0xf] %v1077
    %1142 = vst [vmem:[%s4 + $0xb4] sm:$0xf] %v1078
    %1143 = vst [vmem:[%s4 + $0xb8] sm:$0xf] %v1079
    %1144 = vst [vmem:[%s4 + $0xbc] sm:$0xf] %v1080
    %1145 = vst [vmem:[%s4 + $0xc0] sm:$0xf] %v1081
    %1146 = vst [vmem:[%s4 + $0xc4] sm:$0xf] %v1082
    %1147 = vst [vmem:[%s4 + $0xc8] sm:$0xf] %v1083
    %1148 = vst [vmem:[%s4 + $0xcc] sm:$0xf] %v1084
    %1149 = vst [vmem:[%s4 + $0xd0] sm:$0xf] %v1085
    %1150 = vst [vmem:[%s4 + $0xd4] sm:$0xf] %v1086
    %1151 = vst [vmem:[%s4 + $0xd8] sm:$0xf] %v1087
    %1152 = vst [vmem:[%s4 + $0xdc] sm:$0xf] %v1088
    %1153 = vst [vmem:[%s4 + $0xe0] sm:$0xf] %v1089
    %1154 = vst [vmem:[%s4 + $0xe4] sm:$0xf] %v1090
    %1155 = vst [vmem:[%s4 + $0xe8] sm:$0xf] %v1091
    %1156 = vst [vmem:[%s4 + $0xec] sm:$0xf] %v1092
    %1157 = vst [vmem:[%s4 + $0xf0] sm:$0xf] %v1093
    %1158 = vst [vmem:[%s4 + $0xf4] sm:$0xf] %v1094
    %1159 = vst [vmem:[%s4 + $0xf8] sm:$0xf] %v1095
    %1160 = vst [vmem:[%s4 + $0xfc] sm:$0xf] %v1096
  $region25: #{cpnet_forward.15} parent=0 // pred_fallthru
    _
  // Predicated region
  $region26: #{cpnet_forward.15} parent=0 // pred_check
    _
  $region27: #{cpnet_forward.15} parent=0 // pred_check_branch
    %1162 = sbr.rel (0) target = $region29
  $region28: #{cpnet_forward.15} parent=0 // pred_region
    _
  $region29: #{cpnet_forward.15} parent=0 // pred_fallthru
    _
  // Predicated region
  $region30: #{cpnet_forward.15} parent=0 // pred_check
    _
  $region31: #{cpnet_forward.15} parent=0 // pred_check_branch
    %1164 = sbr.rel (0) target = $region33
  $region32: #{cpnet_forward.15} parent=0 // pred_region
    _
  $region33: #{cpnet_forward.15} parent=0 // pred_fallthru
    _

// kernel: cpnet_forward.16
$region0: #{cpnet_forward.16}
  #allocation0 [shape = 'u32[]', space=smem, size = 0x4, offset = 0x4, fixed_abs, tag = 'smem constant byte address 0x4 - core index']
  #allocation1 [shape = 'u32[72,128]{1,0:T(1,128)}', space=vmem, size = 0x9000, scoped, tag = 'internal scratch']
  #allocation2 [shape = 'f32[128,128]{1,0:T(8,128)}', space=vmem, size = 0x10000, scoped, tag = 'scratch operand']
  %s0 = inlined_call_operand.vmem [shape: bf16[128,256], index: 0, kind: input, shape index: {}]
  %s1 = inlined_call_operand.vmem [shape: bf16[256,128], index: 1, kind: input, shape index: {}]
  %s2 = inlined_call_operand.vmem [shape: f32[1,128], index: 2, kind: input, shape index: {}]
  %s3 = inlined_call_operand.vmem [shape: f32[1,128], index: 3, kind: input, shape index: {}]
  %s4 = inlined_call_operand.vmem [shape: bf16[128,128], index: 4, kind: output, shape index: {}]
  %s5 = sld [smem:[#allocation0]]
  $region34: #{cpnet_forward.16} parent=0
    _
  %s7 = ssub.s32 1, %s5
  %s8 = scalar_select 0, %s7, %s5
  // Predicated region
  $region2: #{cpnet_forward.16} parent=0 // pred_check
    _
  $region3: #{cpnet_forward.16} parent=0 // pred_check_branch
    %10 = sbr.rel (0) target = $region5
  $region4: #{cpnet_forward.16} parent=0 // pred_region
    _
  $region5: #{cpnet_forward.16} parent=0 // pred_fallthru
    _
  // Predicated region
  $region6: #{cpnet_forward.16} parent=0 // pred_check
    _
  $region7: #{cpnet_forward.16} parent=0 // pred_check_branch
    %12 = sbr.rel (0) target = $region9
  $region8: #{cpnet_forward.16} parent=0 // pred_region
    _
  $region9: #{cpnet_forward.16} parent=0 // pred_fallthru
    _
  // Predicated region
  $region10: #{cpnet_forward.16} parent=0 // pred_check
    _
  $region11: #{cpnet_forward.16} parent=0 // pred_check_branch
    %14 = sbr.rel (0) target = $region13
  $region12: #{cpnet_forward.16} parent=0 // pred_region
    _
  $region13: #{cpnet_forward.16} parent=0 // pred_fallthru
    _
  // Predicated region
  $region14: #{cpnet_forward.16} parent=0 // pred_check
    _
  $region15: #{cpnet_forward.16} parent=0 // pred_check_branch
    %16 = sbr.rel (0) target = $region17
  $region16: #{cpnet_forward.16} parent=0 // pred_region
    _
  $region17: #{cpnet_forward.16} parent=0 // pred_fallthru
    _
  %p17 = scmp.eq.s32.totalorder 0, 0
  // Predicated region
  $region18: #{cpnet_forward.16} parent=0 // pred_check
    %p18 = pneg %p17
  $region19: #{cpnet_forward.16} parent=0 // pred_check_branch
    %20 = sbr.rel (%p18) target = $region21
  $region20: #{cpnet_forward.16} parent=0 // pred_region
    %21 = vst [vmem:[#allocation2] sm:$0xff] 0.0
    %22 = vst [vmem:[#allocation2 + $0x8] sm:$0xff] 0.0
    %23 = vst [vmem:[#allocation2 + $0x10] sm:$0xff] 0.0
    %24 = vst [vmem:[#allocation2 + $0x18] sm:$0xff] 0.0
    %25 = vst [vmem:[#allocation2 + $0x20] sm:$0xff] 0.0
    %26 = vst [vmem:[#allocation2 + $0x28] sm:$0xff] 0.0
    %27 = vst [vmem:[#allocation2 + $0x30] sm:$0xff] 0.0
    %28 = vst [vmem:[#allocation2 + $0x38] sm:$0xff] 0.0
    %29 = vst [vmem:[#allocation2 + $0x40] sm:$0xff] 0.0
    %30 = vst [vmem:[#allocation2 + $0x48] sm:$0xff] 0.0
    %31 = vst [vmem:[#allocation2 + $0x50] sm:$0xff] 0.0
    %32 = vst [vmem:[#allocation2 + $0x58] sm:$0xff] 0.0
    %33 = vst [vmem:[#allocation2 + $0x60] sm:$0xff] 0.0
    %34 = vst [vmem:[#allocation2 + $0x68] sm:$0xff] 0.0
    %35 = vst [vmem:[#allocation2 + $0x70] sm:$0xff] 0.0
    %36 = vst [vmem:[#allocation2 + $0x78] sm:$0xff] 0.0
  $region21: #{cpnet_forward.16} parent=0 // pred_fallthru
    _
  %v37 = vld [vmem:[#allocation2] sm:$0xff]
  %v38 = vld [vmem:[#allocation2 + $0x8] sm:$0xff]
  %v39 = vld [vmem:[#allocation2 + $0x10] sm:$0xff]
  %v40 = vld [vmem:[#allocation2 + $0x18] sm:$0xff]
  %v41 = vld [vmem:[#allocation2 + $0x20] sm:$0xff]
  %v42 = vld [vmem:[#allocation2 + $0x28] sm:$0xff]
  %v43 = vld [vmem:[#allocation2 + $0x30] sm:$0xff]
  %v44 = vld [vmem:[#allocation2 + $0x38] sm:$0xff]
  %v45 = vld [vmem:[#allocation2 + $0x40] sm:$0xff]
  %v46 = vld [vmem:[#allocation2 + $0x48] sm:$0xff]
  %v47 = vld [vmem:[#allocation2 + $0x50] sm:$0xff]
  %v48 = vld [vmem:[#allocation2 + $0x58] sm:$0xff]
  %v49 = vld [vmem:[#allocation2 + $0x60] sm:$0xff]
  %v50 = vld [vmem:[#allocation2 + $0x68] sm:$0xff]
  %v51 = vld [vmem:[#allocation2 + $0x70] sm:$0xff]
  %v52 = vld [vmem:[#allocation2 + $0x78] sm:$0xff]
  %v53 = vld [vmem:[%s0] sm:$0xff]
  %v54 = vld [vmem:[%s0 + $0x8] sm:$0xff]
  %v55 = vld [vmem:[%s0 + $0x10] sm:$0xff]
  %v56 = vld [vmem:[%s0 + $0x18] sm:$0xff]
  %v57 = vld [vmem:[%s0 + $0x20] sm:$0xff]
  %v58 = vld [vmem:[%s0 + $0x28] sm:$0xff]
  %v59 = vld [vmem:[%s0 + $0x30] sm:$0xff]
  %v60 = vld [vmem:[%s0 + $0x38] sm:$0xff]
  %v61 = vld [vmem:[%s0 + $0x40] sm:$0xff]
  %v62 = vld [vmem:[%s0 + $0x48] sm:$0xff]
  %v63 = vld [vmem:[%s0 + $0x50] sm:$0xff]
  %v64 = vld [vmem:[%s0 + $0x58] sm:$0xff]
  %v65 = vld [vmem:[%s0 + $0x60] sm:$0xff]
  %v66 = vld [vmem:[%s0 + $0x68] sm:$0xff]
  %v67 = vld [vmem:[%s0 + $0x70] sm:$0xff]
  %v68 = vld [vmem:[%s0 + $0x78] sm:$0xff]
  %v69 = vld [vmem:[%s1] sm:$0xf]
  %v70 = vld [vmem:[%s1 + $0x4] sm:$0xf]
  %v71 = vld [vmem:[%s1 + $0x8] sm:$0xf]
  %v72 = vld [vmem:[%s1 + $0xc] sm:$0xf]
  %v73 = vld [vmem:[%s1 + $0x10] sm:$0xf]
  %v74 = vld [vmem:[%s1 + $0x14] sm:$0xf]
  %v75 = vld [vmem:[%s1 + $0x18] sm:$0xf]
  %v76 = vld [vmem:[%s1 + $0x1c] sm:$0xf]
  %v77 = vld [vmem:[%s1 + $0x20] sm:$0xf]
  %v78 = vld [vmem:[%s1 + $0x24] sm:$0xf]
  %v79 = vld [vmem:[%s1 + $0x28] sm:$0xf]
  %v80 = vld [vmem:[%s1 + $0x2c] sm:$0xf]
  %v81 = vld [vmem:[%s1 + $0x30] sm:$0xf]
  %v82 = vld [vmem:[%s1 + $0x34] sm:$0xf]
  %v83 = vld [vmem:[%s1 + $0x38] sm:$0xf]
  %v84 = vld [vmem:[%s1 + $0x3c] sm:$0xf]
  %v85 = vld [vmem:[%s1 + $0x40] sm:$0xf]
  %v86 = vld [vmem:[%s1 + $0x44] sm:$0xf]
  %v87 = vld [vmem:[%s1 + $0x48] sm:$0xf]
  %v88 = vld [vmem:[%s1 + $0x4c] sm:$0xf]
  %v89 = vld [vmem:[%s1 + $0x50] sm:$0xf]
  %v90 = vld [vmem:[%s1 + $0x54] sm:$0xf]
  %v91 = vld [vmem:[%s1 + $0x58] sm:$0xf]
  %v92 = vld [vmem:[%s1 + $0x5c] sm:$0xf]
  %v93 = vld [vmem:[%s1 + $0x60] sm:$0xf]
  %v94 = vld [vmem:[%s1 + $0x64] sm:$0xf]
  %v95 = vld [vmem:[%s1 + $0x68] sm:$0xf]
  %v96 = vld [vmem:[%s1 + $0x6c] sm:$0xf]
  %v97 = vld [vmem:[%s1 + $0x70] sm:$0xf]
  %v98 = vld [vmem:[%s1 + $0x74] sm:$0xf]
  %v99 = vld [vmem:[%s1 + $0x78] sm:$0xf]
  %v100 = vld [vmem:[%s1 + $0x7c] sm:$0xf]
  %v117 = vunpack.c.l.b16 %v53
  %v118 = vunpack.c.h.b16 %v53
  %v119 = vunpack.c.l.b16 %v54
  %v120 = vunpack.c.h.b16 %v54
  %v121 = vunpack.c.l.b16 %v55
  %v122 = vunpack.c.h.b16 %v55
  %v123 = vunpack.c.l.b16 %v56
  %v124 = vunpack.c.h.b16 %v56
  %v125 = vunpack.c.l.b16 %v57
  %v126 = vunpack.c.h.b16 %v57
  %v127 = vunpack.c.l.b16 %v58
  %v128 = vunpack.c.h.b16 %v58
  %v129 = vunpack.c.l.b16 %v59
  %v130 = vunpack.c.h.b16 %v59
  %v131 = vunpack.c.l.b16 %v60
  %v132 = vunpack.c.h.b16 %v60
  %v133 = vunpack.c.l.b16 %v61
  %v134 = vunpack.c.h.b16 %v61
  %v135 = vunpack.c.l.b16 %v62
  %v136 = vunpack.c.h.b16 %v62
  %v137 = vunpack.c.l.b16 %v63
  %v138 = vunpack.c.h.b16 %v63
  %v139 = vunpack.c.l.b16 %v64
  %v140 = vunpack.c.h.b16 %v64
  %v141 = vunpack.c.l.b16 %v65
  %v142 = vunpack.c.h.b16 %v65
  %v143 = vunpack.c.l.b16 %v66
  %v144 = vunpack.c.h.b16 %v66
  %v145 = vunpack.c.l.b16 %v67
  %v146 = vunpack.c.h.b16 %v67
  %v147 = vunpack.c.l.b16 %v68
  %v148 = vunpack.c.h.b16 %v68
  %v149 = vpack.c.b16 %v119, %v117
  %v150 = vpack.c.b16 %v120, %v118
  %v151 = vpack.c.b16 %v123, %v121
  %v152 = vpack.c.b16 %v124, %v122
  %v153 = vpack.c.b16 %v127, %v125
  %v154 = vpack.c.b16 %v128, %v126
  %v155 = vpack.c.b16 %v131, %v129
  %v156 = vpack.c.b16 %v132, %v130
  %v157 = vpack.c.b16 %v135, %v133
  %v158 = vpack.c.b16 %v136, %v134
  %v159 = vpack.c.b16 %v139, %v137
  %v160 = vpack.c.b16 %v140, %v138
  %v161 = vpack.c.b16 %v143, %v141
  %v162 = vpack.c.b16 %v144, %v142
  %v163 = vpack.c.b16 %v147, %v145
  %v164 = vpack.c.b16 %v148, %v146
  %v213 = vunpack.c.l.b16 %v69
  %v214 = vunpack.c.l.b16 %v70
  %v215 = vunpack.c.l.b16 %v71
  %v216 = vunpack.c.l.b16 %v72
  %v217 = vunpack.c.l.b16 %v73
  %v218 = vunpack.c.l.b16 %v74
  %v219 = vunpack.c.l.b16 %v75
  %v220 = vunpack.c.l.b16 %v76
  %v221 = vunpack.c.l.b16 %v77
  %v222 = vunpack.c.l.b16 %v78
  %v223 = vunpack.c.l.b16 %v79
  %v224 = vunpack.c.l.b16 %v80
  %v225 = vunpack.c.l.b16 %v81
  %v226 = vunpack.c.l.b16 %v82
  %v227 = vunpack.c.l.b16 %v83
  %v228 = vunpack.c.l.b16 %v84
  %v229 = vunpack.c.l.b16 %v85
  %v230 = vunpack.c.l.b16 %v86
  %v231 = vunpack.c.l.b16 %v87
  %v232 = vunpack.c.l.b16 %v88
  %v233 = vunpack.c.l.b16 %v89
  %v234 = vunpack.c.l.b16 %v90
  %v235 = vunpack.c.l.b16 %v91
  %v236 = vunpack.c.l.b16 %v92
  %v237 = vunpack.c.l.b16 %v93
  %v238 = vunpack.c.l.b16 %v94
  %v239 = vunpack.c.l.b16 %v95
  %v240 = vunpack.c.l.b16 %v96
  %v241 = vunpack.c.l.b16 %v97
  %v242 = vunpack.c.l.b16 %v98
  %v243 = vunpack.c.l.b16 %v99
  %v244 = vunpack.c.l.b16 %v100
  %v245 = vpack.c.b16 %v214, %v213
  %v246 = vpack.c.b16 %v216, %v215
  %v247 = vpack.c.b16 %v218, %v217
  %v248 = vpack.c.b16 %v220, %v219
  %v249 = vpack.c.b16 %v222, %v221
  %v250 = vpack.c.b16 %v224, %v223
  %v251 = vpack.c.b16 %v226, %v225
  %v252 = vpack.c.b16 %v228, %v227
  %v253 = vpack.c.b16 %v230, %v229
  %v254 = vpack.c.b16 %v232, %v231
  %v255 = vpack.c.b16 %v234, %v233
  %v256 = vpack.c.b16 %v236, %v235
  %v257 = vpack.c.b16 %v238, %v237
  %v258 = vpack.c.b16 %v240, %v239
  %v259 = vpack.c.b16 %v242, %v241
  %v260 = vpack.c.b16 %v244, %v243
  %277 = vmatpush.bf16.msra.mxu0 %v252
  %278 = vmatpush.bf16.msra.mxu0 %v251
  %279 = vmatpush.bf16.msra.mxu0 %v250
  %280 = vmatpush.bf16.msra.mxu0 %v249
  %281 = vmatpush.bf16.msra.mxu0 %v248
  %282 = vmatpush.bf16.msra.mxu0 %v247
  %283 = vmatpush.bf16.msra.mxu0 %v246
  %284 = vmatpush.bf16.msra.mxu0 %v245
  %285 = vmatmul.bf16.gmra.mxu0 %v149
  %v286 = vpop.f32.mrf.mxu0
  %v287 = vadd.f32 0.0, %v286
  %v288 = vpop.f32.mrf.mxu0
  %v289 = vadd.f32 0.0, %v288
  %290 = vmatmul.bf16.gmra.mxu0 %v151
  %v291 = vpop.f32.mrf.mxu0
  %v292 = vadd.f32 0.0, %v291
  %v293 = vpop.f32.mrf.mxu0
  %v294 = vadd.f32 0.0, %v293
  %295 = vmatmul.bf16.gmra.mxu0 %v153
  %v296 = vpop.f32.mrf.mxu0
  %v297 = vadd.f32 0.0, %v296
  %v298 = vpop.f32.mrf.mxu0
  %v299 = vadd.f32 0.0, %v298
  %300 = vmatmul.bf16.gmra.mxu0 %v155
  %v301 = vpop.f32.mrf.mxu0
  %v302 = vadd.f32 0.0, %v301
  %v303 = vpop.f32.mrf.mxu0
  %v304 = vadd.f32 0.0, %v303
  %305 = vmatmul.bf16.gmra.mxu0 %v157
  %v306 = vpop.f32.mrf.mxu0
  %v307 = vadd.f32 0.0, %v306
  %v308 = vpop.f32.mrf.mxu0
  %v309 = vadd.f32 0.0, %v308
  %310 = vmatmul.bf16.gmra.mxu0 %v159
  %v311 = vpop.f32.mrf.mxu0
  %v312 = vadd.f32 0.0, %v311
  %v313 = vpop.f32.mrf.mxu0
  %v314 = vadd.f32 0.0, %v313
  %315 = vmatmul.bf16.gmra.mxu0 %v161
  %v316 = vpop.f32.mrf.mxu0
  %v317 = vadd.f32 0.0, %v316
  %v318 = vpop.f32.mrf.mxu0
  %v319 = vadd.f32 0.0, %v318
  %320 = vmatmul.bf16.gmra.mxu0 %v163
  %v321 = vpop.f32.mrf.mxu0
  %v322 = vadd.f32 0.0, %v321
  %v323 = vpop.f32.mrf.mxu0
  %v324 = vadd.f32 0.0, %v323
  %325 = vdwg.mxu0
  %326 = vmatpush.bf16.msra.mxu0 %v260
  %327 = vmatpush.bf16.msra.mxu0 %v259
  %328 = vmatpush.bf16.msra.mxu0 %v258
  %329 = vmatpush.bf16.msra.mxu0 %v257
  %330 = vmatpush.bf16.msra.mxu0 %v256
  %331 = vmatpush.bf16.msra.mxu0 %v255
  %332 = vmatpush.bf16.msra.mxu0 %v254
  %333 = vmatpush.bf16.msra.mxu0 %v253
  %334 = vmatmul.bf16.gmra.mxu0 %v150
  %v335 = vpop.f32.mrf.mxu0
  %v336 = vadd.f32 %v287, %v335
  %v337 = vpop.f32.mrf.mxu0
  %v338 = vadd.f32 %v289, %v337
  %339 = vmatmul.bf16.gmra.mxu0 %v152
  %v340 = vpop.f32.mrf.mxu0
  %v341 = vadd.f32 %v292, %v340
  %v342 = vpop.f32.mrf.mxu0
  %v343 = vadd.f32 %v294, %v342
  %344 = vmatmul.bf16.gmra.mxu0 %v154
  %v345 = vpop.f32.mrf.mxu0
  %v346 = vadd.f32 %v297, %v345
  %v347 = vpop.f32.mrf.mxu0
  %v348 = vadd.f32 %v299, %v347
  %349 = vmatmul.bf16.gmra.mxu0 %v156
  %v350 = vpop.f32.mrf.mxu0
  %v351 = vadd.f32 %v302, %v350
  %v352 = vpop.f32.mrf.mxu0
  %v353 = vadd.f32 %v304, %v352
  %354 = vmatmul.bf16.gmra.mxu0 %v158
  %v355 = vpop.f32.mrf.mxu0
  %v356 = vadd.f32 %v307, %v355
  %v357 = vpop.f32.mrf.mxu0
  %v358 = vadd.f32 %v309, %v357
  %359 = vmatmul.bf16.gmra.mxu0 %v160
  %v360 = vpop.f32.mrf.mxu0
  %v361 = vadd.f32 %v312, %v360
  %v362 = vpop.f32.mrf.mxu0
  %v363 = vadd.f32 %v314, %v362
  %364 = vmatmul.bf16.gmra.mxu0 %v162
  %v365 = vpop.f32.mrf.mxu0
  %v366 = vadd.f32 %v317, %v365
  %v367 = vpop.f32.mrf.mxu0
  %v368 = vadd.f32 %v319, %v367
  %369 = vmatmul.bf16.gmra.mxu0 %v164
  %v370 = vpop.f32.mrf.mxu0
  %v371 = vadd.f32 %v322, %v370
  %v372 = vpop.f32.mrf.mxu0
  %v373 = vadd.f32 %v324, %v372
  %374 = vdwg.mxu0
  %v375 = vadd.f32 %v37, %v336
  %v376 = vadd.f32 %v38, %v338
  %v377 = vadd.f32 %v39, %v341
  %v378 = vadd.f32 %v40, %v343
  %v379 = vadd.f32 %v41, %v346
  %v380 = vadd.f32 %v42, %v348
  %v381 = vadd.f32 %v43, %v351
  %v382 = vadd.f32 %v44, %v353
  %v383 = vadd.f32 %v45, %v356
  %v384 = vadd.f32 %v46, %v358
  %v385 = vadd.f32 %v47, %v361
  %v386 = vadd.f32 %v48, %v363
  %v387 = vadd.f32 %v49, %v366
  %v388 = vadd.f32 %v50, %v368
  %v389 = vadd.f32 %v51, %v371
  %v390 = vadd.f32 %v52, %v373
  %391 = vst [vmem:[#allocation2] sm:$0xff] %v375
  %392 = vst [vmem:[#allocation2 + $0x8] sm:$0xff] %v376
  %393 = vst [vmem:[#allocation2 + $0x10] sm:$0xff] %v377
  %394 = vst [vmem:[#allocation2 + $0x18] sm:$0xff] %v378
  %395 = vst [vmem:[#allocation2 + $0x20] sm:$0xff] %v379
  %396 = vst [vmem:[#allocation2 + $0x28] sm:$0xff] %v380
  %397 = vst [vmem:[#allocation2 + $0x30] sm:$0xff] %v381
  %398 = vst [vmem:[#allocation2 + $0x38] sm:$0xff] %v382
  %399 = vst [vmem:[#allocation2 + $0x40] sm:$0xff] %v383
  %400 = vst [vmem:[#allocation2 + $0x48] sm:$0xff] %v384
  %401 = vst [vmem:[#allocation2 + $0x50] sm:$0xff] %v385
  %402 = vst [vmem:[#allocation2 + $0x58] sm:$0xff] %v386
  %403 = vst [vmem:[#allocation2 + $0x60] sm:$0xff] %v387
  %404 = vst [vmem:[#allocation2 + $0x68] sm:$0xff] %v388
  %405 = vst [vmem:[#allocation2 + $0x70] sm:$0xff] %v389
  %406 = vst [vmem:[#allocation2 + $0x78] sm:$0xff] %v390
  // Predicated region
  $region22: #{cpnet_forward.16} parent=0 // pred_check
    %p407 = pneg %p17
  $region23: #{cpnet_forward.16} parent=0 // pred_check_branch
    %409 = sbr.rel (%p407) target = $region25
  $region24: #{cpnet_forward.16} parent=0 // pred_region
    %v410 = vld [vmem:[#allocation2] sm:$0xff]
    %v411 = vld [vmem:[#allocation2 + $0x8] sm:$0xff]
    %v412 = vld [vmem:[#allocation2 + $0x10] sm:$0xff]
    %v413 = vld [vmem:[#allocation2 + $0x18] sm:$0xff]
    %v414 = vld [vmem:[#allocation2 + $0x20] sm:$0xff]
    %v415 = vld [vmem:[#allocation2 + $0x28] sm:$0xff]
    %v416 = vld [vmem:[#allocation2 + $0x30] sm:$0xff]
    %v417 = vld [vmem:[#allocation2 + $0x38] sm:$0xff]
    %v418 = vld [vmem:[#allocation2 + $0x40] sm:$0xff]
    %v419 = vld [vmem:[#allocation2 + $0x48] sm:$0xff]
    %v420 = vld [vmem:[#allocation2 + $0x50] sm:$0xff]
    %v421 = vld [vmem:[#allocation2 + $0x58] sm:$0xff]
    %v422 = vld [vmem:[#allocation2 + $0x60] sm:$0xff]
    %v423 = vld [vmem:[#allocation2 + $0x68] sm:$0xff]
    %v424 = vld [vmem:[#allocation2 + $0x70] sm:$0xff]
    %v425 = vld [vmem:[#allocation2 + $0x78] sm:$0xff]
    %v426 = vld [vmem:[%s2] sm:$0x1]
    %v428 = vperm.slane %v426, 0
    %v430 = vmul.f32 %v410, %v428
    %v431 = vmul.f32 %v411, %v428
    %v432 = vmul.f32 %v412, %v428
    %v433 = vmul.f32 %v413, %v428
    %v434 = vmul.f32 %v414, %v428
    %v435 = vmul.f32 %v415, %v428
    %v436 = vmul.f32 %v416, %v428
    %v437 = vmul.f32 %v417, %v428
    %v438 = vmul.f32 %v418, %v428
    %v439 = vmul.f32 %v419, %v428
    %v440 = vmul.f32 %v420, %v428
    %v441 = vmul.f32 %v421, %v428
    %v442 = vmul.f32 %v422, %v428
    %v443 = vmul.f32 %v423, %v428
    %v444 = vmul.f32 %v424, %v428
    %v445 = vmul.f32 %v425, %v428
    %v446 = vld [vmem:[%s3] sm:$0x1]
    %v448 = vperm.slane %v446, 0
    %v450 = vadd.f32 %v430, %v448
    %v451 = vadd.f32 %v431, %v448
    %v452 = vadd.f32 %v432, %v448
    %v453 = vadd.f32 %v433, %v448
    %v454 = vadd.f32 %v434, %v448
    %v455 = vadd.f32 %v435, %v448
    %v456 = vadd.f32 %v436, %v448
    %v457 = vadd.f32 %v437, %v448
    %v458 = vadd.f32 %v438, %v448
    %v459 = vadd.f32 %v439, %v448
    %v460 = vadd.f32 %v440, %v448
    %v461 = vadd.f32 %v441, %v448
    %v462 = vadd.f32 %v442, %v448
    %v463 = vadd.f32 %v443, %v448
    %v464 = vadd.f32 %v444, %v448
    %v465 = vadd.f32 %v445, %v448
    %v466 = vmax.f32 %v450, 0.0
    %v467 = vmax.f32 %v451, 0.0
    %v468 = vmax.f32 %v452, 0.0
    %v469 = vmax.f32 %v453, 0.0
    %v470 = vmax.f32 %v454, 0.0
    %v471 = vmax.f32 %v455, 0.0
    %v472 = vmax.f32 %v456, 0.0
    %v473 = vmax.f32 %v457, 0.0
    %v474 = vmax.f32 %v458, 0.0
    %v475 = vmax.f32 %v459, 0.0
    %v476 = vmax.f32 %v460, 0.0
    %v477 = vmax.f32 %v461, 0.0
    %v478 = vmax.f32 %v462, 0.0
    %v479 = vmax.f32 %v463, 0.0
    %v480 = vmax.f32 %v464, 0.0
    %v481 = vmax.f32 %v465, 0.0
    %v482 = vpack.c.bf16 %v466, %v466
    %v483 = vpack.c.bf16 %v467, %v467
    %v484 = vpack.c.bf16 %v468, %v468
    %v485 = vpack.c.bf16 %v469, %v469
    %v486 = vpack.c.bf16 %v470, %v470
    %v487 = vpack.c.bf16 %v471, %v471
    %v488 = vpack.c.bf16 %v472, %v472
    %v489 = vpack.c.bf16 %v473, %v473
    %v490 = vpack.c.bf16 %v474, %v474
    %v491 = vpack.c.bf16 %v475, %v475
    %v492 = vpack.c.bf16 %v476, %v476
    %v493 = vpack.c.bf16 %v477, %v477
    %v494 = vpack.c.bf16 %v478, %v478
    %v495 = vpack.c.bf16 %v479, %v479
    %v496 = vpack.c.bf16 %v480, %v480
    %v497 = vpack.c.bf16 %v481, %v481
    %498 = vst [vmem:[%s4] sm:$0xf] %v482
    %499 = vst [vmem:[%s4 + $0x4] sm:$0xf] %v483
    %500 = vst [vmem:[%s4 + $0x8] sm:$0xf] %v484
    %501 = vst [vmem:[%s4 + $0xc] sm:$0xf] %v485
    %502 = vst [vmem:[%s4 + $0x10] sm:$0xf] %v486
    %503 = vst [vmem:[%s4 + $0x14] sm:$0xf] %v487
    %504 = vst [vmem:[%s4 + $0x18] sm:$0xf] %v488
    %505 = vst [vmem:[%s4 + $0x1c] sm:$0xf] %v489
    %506 = vst [vmem:[%s4 + $0x20] sm:$0xf] %v490
    %507 = vst [vmem:[%s4 + $0x24] sm:$0xf] %v491
    %508 = vst [vmem:[%s4 + $0x28] sm:$0xf] %v492
    %509 = vst [vmem:[%s4 + $0x2c] sm:$0xf] %v493
    %510 = vst [vmem:[%s4 + $0x30] sm:$0xf] %v494
    %511 = vst [vmem:[%s4 + $0x34] sm:$0xf] %v495
    %512 = vst [vmem:[%s4 + $0x38] sm:$0xf] %v496
    %513 = vst [vmem:[%s4 + $0x3c] sm:$0xf] %v497
  $region25: #{cpnet_forward.16} parent=0 // pred_fallthru
    _
  // Predicated region
  $region26: #{cpnet_forward.16} parent=0 // pred_check
    _
  $region27: #{cpnet_forward.16} parent=0 // pred_check_branch
    %515 = sbr.rel (0) target = $region29
  $region28: #{cpnet_forward.16} parent=0 // pred_region
    _
  $region29: #{cpnet_forward.16} parent=0 // pred_fallthru
    _
  // Predicated region
  $region30: #{cpnet_forward.16} parent=0 // pred_check
    _
  $region31: #{cpnet_forward.16} parent=0 // pred_check_branch
    %517 = sbr.rel (0) target = $region33
  $region32: #{cpnet_forward.16} parent=0 // pred_region
    _
  $region33: #{cpnet_forward.16} parent=0 // pred_fallthru
    _

// kernel: cpnet_forward.18
$region0: #{cpnet_forward.18}
  #allocation0 [shape = 'u32[]', space=smem, size = 0x4, offset = 0x4, fixed_abs, tag = 'smem constant byte address 0x4 - core index']
  #allocation1 [shape = 'u32[72,128]{1,0:T(1,128)}', space=vmem, size = 0x9000, scoped, tag = 'internal scratch']
  #allocation2 [shape = 'f32[32,128]{1,0:T(8,128)}', space=vmem, size = 0x4000, scoped, tag = 'scratch operand']
  %s0 = inlined_call_operand.vmem [shape: bf16[32,128], index: 0, kind: input, shape index: {}]
  %s1 = inlined_call_operand.vmem [shape: bf16[128,128], index: 1, kind: input, shape index: {}]
  %s2 = inlined_call_operand.vmem [shape: f32[1,128], index: 2, kind: input, shape index: {}]
  %s3 = inlined_call_operand.vmem [shape: f32[1,128], index: 3, kind: input, shape index: {}]
  %s4 = inlined_call_operand.vmem [shape: bf16[32,128], index: 4, kind: output, shape index: {}]
  %s5 = sld [smem:[#allocation0]]
  $region34: #{cpnet_forward.18} parent=0
    _
  %s7 = ssub.s32 1, %s5
  %s8 = scalar_select 0, %s7, %s5
  // Predicated region
  $region2: #{cpnet_forward.18} parent=0 // pred_check
    _
  $region3: #{cpnet_forward.18} parent=0 // pred_check_branch
    %10 = sbr.rel (0) target = $region5
  $region4: #{cpnet_forward.18} parent=0 // pred_region
    _
  $region5: #{cpnet_forward.18} parent=0 // pred_fallthru
    _
  // Predicated region
  $region6: #{cpnet_forward.18} parent=0 // pred_check
    _
  $region7: #{cpnet_forward.18} parent=0 // pred_check_branch
    %12 = sbr.rel (0) target = $region9
  $region8: #{cpnet_forward.18} parent=0 // pred_region
    _
  $region9: #{cpnet_forward.18} parent=0 // pred_fallthru
    _
  // Predicated region
  $region10: #{cpnet_forward.18} parent=0 // pred_check
    _
  $region11: #{cpnet_forward.18} parent=0 // pred_check_branch
    %14 = sbr.rel (0) target = $region13
  $region12: #{cpnet_forward.18} parent=0 // pred_region
    _
  $region13: #{cpnet_forward.18} parent=0 // pred_fallthru
    _
  // Predicated region
  $region14: #{cpnet_forward.18} parent=0 // pred_check
    _
  $region15: #{cpnet_forward.18} parent=0 // pred_check_branch
    %16 = sbr.rel (0) target = $region17
  $region16: #{cpnet_forward.18} parent=0 // pred_region
    _
  $region17: #{cpnet_forward.18} parent=0 // pred_fallthru
    _
  %p17 = scmp.eq.s32.totalorder 0, 0
  // Predicated region
  $region18: #{cpnet_forward.18} parent=0 // pred_check
    %p18 = pneg %p17
  $region19: #{cpnet_forward.18} parent=0 // pred_check_branch
    %20 = sbr.rel (%p18) target = $region21
  $region20: #{cpnet_forward.18} parent=0 // pred_region
    %21 = vst [vmem:[#allocation2] sm:$0xff] 0.0
    %22 = vst [vmem:[#allocation2 + $0x8] sm:$0xff] 0.0
    %23 = vst [vmem:[#allocation2 + $0x10] sm:$0xff] 0.0
    %24 = vst [vmem:[#allocation2 + $0x18] sm:$0xff] 0.0
  $region21: #{cpnet_forward.18} parent=0 // pred_fallthru
    _
  %v25 = vld [vmem:[#allocation2] sm:$0xff]
  %v26 = vld [vmem:[#allocation2 + $0x8] sm:$0xff]
  %v27 = vld [vmem:[#allocation2 + $0x10] sm:$0xff]
  %v28 = vld [vmem:[#allocation2 + $0x18] sm:$0xff]
  %v29 = vld [vmem:[%s0] sm:$0xf]
  %v30 = vld [vmem:[%s0 + $0x4] sm:$0xf]
  %v31 = vld [vmem:[%s0 + $0x8] sm:$0xf]
  %v32 = vld [vmem:[%s0 + $0xc] sm:$0xf]
  %v33 = vld [vmem:[%s1] sm:$0xf]
  %v34 = vld [vmem:[%s1 + $0x4] sm:$0xf]
  %v35 = vld [vmem:[%s1 + $0x8] sm:$0xf]
  %v36 = vld [vmem:[%s1 + $0xc] sm:$0xf]
  %v37 = vld [vmem:[%s1 + $0x10] sm:$0xf]
  %v38 = vld [vmem:[%s1 + $0x14] sm:$0xf]
  %v39 = vld [vmem:[%s1 + $0x18] sm:$0xf]
  %v40 = vld [vmem:[%s1 + $0x1c] sm:$0xf]
  %v41 = vld [vmem:[%s1 + $0x20] sm:$0xf]
  %v42 = vld [vmem:[%s1 + $0x24] sm:$0xf]
  %v43 = vld [vmem:[%s1 + $0x28] sm:$0xf]
  %v44 = vld [vmem:[%s1 + $0x2c] sm:$0xf]
  %v45 = vld [vmem:[%s1 + $0x30] sm:$0xf]
  %v46 = vld [vmem:[%s1 + $0x34] sm:$0xf]
  %v47 = vld [vmem:[%s1 + $0x38] sm:$0xf]
  %v48 = vld [vmem:[%s1 + $0x3c] sm:$0xf]
  %v53 = vunpack.c.l.b16 %v29
  %v54 = vunpack.c.l.b16 %v30
  %v55 = vunpack.c.l.b16 %v31
  %v56 = vunpack.c.l.b16 %v32
  %v57 = vpack.c.b16 %v54, %v53
  %v58 = vpack.c.b16 %v56, %v55
  %v77 = vunpack.c.l.b16 %v33
  %v78 = vunpack.c.l.b16 %v34
  %v79 = vunpack.c.l.b16 %v35
  %v80 = vunpack.c.l.b16 %v36
  %v81 = vunpack.c.l.b16 %v37
  %v82 = vunpack.c.l.b16 %v38
  %v83 = vunpack.c.l.b16 %v39
  %v84 = vunpack.c.l.b16 %v40
  %v85 = vunpack.c.l.b16 %v41
  %v86 = vunpack.c.l.b16 %v42
  %v87 = vunpack.c.l.b16 %v43
  %v88 = vunpack.c.l.b16 %v44
  %v89 = vunpack.c.l.b16 %v45
  %v90 = vunpack.c.l.b16 %v46
  %v91 = vunpack.c.l.b16 %v47
  %v92 = vunpack.c.l.b16 %v48
  %v93 = vpack.c.b16 %v78, %v77
  %v94 = vpack.c.b16 %v80, %v79
  %v95 = vpack.c.b16 %v82, %v81
  %v96 = vpack.c.b16 %v84, %v83
  %v97 = vpack.c.b16 %v86, %v85
  %v98 = vpack.c.b16 %v88, %v87
  %v99 = vpack.c.b16 %v90, %v89
  %v100 = vpack.c.b16 %v92, %v91
  %109 = vmatpush.bf16.msra.mxu0 %v100
  %110 = vmatpush.bf16.msra.mxu0 %v99
  %111 = vmatpush.bf16.msra.mxu0 %v98
  %112 = vmatpush.bf16.msra.mxu0 %v97
  %113 = vmatpush.bf16.msra.mxu0 %v96
  %114 = vmatpush.bf16.msra.mxu0 %v95
  %115 = vmatpush.bf16.msra.mxu0 %v94
  %116 = vmatpush.bf16.msra.mxu0 %v93
  %117 = vmatmul.bf16.gmra.mxu0 %v57
  %v118 = vpop.f32.mrf.mxu0
  %v119 = vadd.f32 0.0, %v118
  %v120 = vpop.f32.mrf.mxu0
  %v121 = vadd.f32 0.0, %v120
  %122 = vmatmul.bf16.gmra.mxu0 %v58
  %v123 = vpop.f32.mrf.mxu0
  %v124 = vadd.f32 0.0, %v123
  %v125 = vpop.f32.mrf.mxu0
  %v126 = vadd.f32 0.0, %v125
  %127 = vdwg.mxu0
  %v128 = vadd.f32 %v25, %v119
  %v129 = vadd.f32 %v26, %v121
  %v130 = vadd.f32 %v27, %v124
  %v131 = vadd.f32 %v28, %v126
  %132 = vst [vmem:[#allocation2] sm:$0xff] %v128
  %133 = vst [vmem:[#allocation2 + $0x8] sm:$0xff] %v129
  %134 = vst [vmem:[#allocation2 + $0x10] sm:$0xff] %v130
  %135 = vst [vmem:[#allocation2 + $0x18] sm:$0xff] %v131
  // Predicated region
  $region22: #{cpnet_forward.18} parent=0 // pred_check
    %p136 = pneg %p17
  $region23: #{cpnet_forward.18} parent=0 // pred_check_branch
    %138 = sbr.rel (%p136) target = $region25
  $region24: #{cpnet_forward.18} parent=0 // pred_region
    %v139 = vld [vmem:[#allocation2] sm:$0xff]
    %v140 = vld [vmem:[#allocation2 + $0x8] sm:$0xff]
    %v141 = vld [vmem:[#allocation2 + $0x10] sm:$0xff]
    %v142 = vld [vmem:[#allocation2 + $0x18] sm:$0xff]
    %v143 = vld [vmem:[%s2] sm:$0x1]
    %v145 = vperm.slane %v143, 0
    %v147 = vmul.f32 %v139, %v145
    %v148 = vmul.f32 %v140, %v145
    %v149 = vmul.f32 %v141, %v145
    %v150 = vmul.f32 %v142, %v145
    %v151 = vld [vmem:[%s3] sm:$0x1]
    %v153 = vperm.slane %v151, 0
    %v155 = vadd.f32 %v147, %v153
    %v156 = vadd.f32 %v148, %v153
    %v157 = vadd.f32 %v149, %v153
    %v158 = vadd.f32 %v150, %v153
    %v159 = vmax.f32 %v155, 0.0
    %v160 = vmax.f32 %v156, 0.0
    %v161 = vmax.f32 %v157, 0.0
    %v162 = vmax.f32 %v158, 0.0
    %v163 = vpack.c.bf16 %v159, %v159
    %v164 = vpack.c.bf16 %v160, %v160
    %v165 = vpack.c.bf16 %v161, %v161
    %v166 = vpack.c.bf16 %v162, %v162
    %167 = vst [vmem:[%s4] sm:$0xf] %v163
    %168 = vst [vmem:[%s4 + $0x4] sm:$0xf] %v164
    %169 = vst [vmem:[%s4 + $0x8] sm:$0xf] %v165
    %170 = vst [vmem:[%s4 + $0xc] sm:$0xf] %v166
  $region25: #{cpnet_forward.18} parent=0 // pred_fallthru
    _
  // Predicated region
  $region26: #{cpnet_forward.18} parent=0 // pred_check
    _
  $region27: #{cpnet_forward.18} parent=0 // pred_check_branch
    %172 = sbr.rel (0) target = $region29
  $region28: #{cpnet_forward.18} parent=0 // pred_region
    _
  $region29: #{cpnet_forward.18} parent=0 // pred_fallthru
    _
  // Predicated region
  $region30: #{cpnet_forward.18} parent=0 // pred_check
    _
  $region31: #{cpnet_forward.18} parent=0 // pred_check_branch
    %174 = sbr.rel (0) target = $region33
  $region32: #{cpnet_forward.18} parent=0 // pred_region
    _
  $region33: #{cpnet_forward.18} parent=0 // pred_fallthru
    _

// kernel: cpnet_forward.17
$region0: #{cpnet_forward.17}
  #allocation0 [shape = 'u32[]', space=smem, size = 0x4, offset = 0x4, fixed_abs, tag = 'smem constant byte address 0x4 - core index']
  #allocation1 [shape = 'u32[72,128]{1,0:T(1,128)}', space=vmem, size = 0x9000, scoped, tag = 'internal scratch']
  #allocation2 [shape = 'f32[32,128]{1,0:T(8,128)}', space=vmem, size = 0x4000, scoped, tag = 'scratch operand']
  %s0 = inlined_call_operand.vmem [shape: bf16[32,512], index: 0, kind: input, shape index: {}]
  %s1 = inlined_call_operand.vmem [shape: bf16[512,128], index: 1, kind: input, shape index: {}]
  %s2 = inlined_call_operand.vmem [shape: f32[1,128], index: 2, kind: input, shape index: {}]
  %s3 = inlined_call_operand.vmem [shape: f32[1,128], index: 3, kind: input, shape index: {}]
  %s4 = inlined_call_operand.vmem [shape: bf16[32,128], index: 4, kind: output, shape index: {}]
  %s5 = sld [smem:[#allocation0]]
  $region34: #{cpnet_forward.17} parent=0
    _
  %s7 = ssub.s32 1, %s5
  %s8 = scalar_select 0, %s7, %s5
  // Predicated region
  $region2: #{cpnet_forward.17} parent=0 // pred_check
    _
  $region3: #{cpnet_forward.17} parent=0 // pred_check_branch
    %10 = sbr.rel (0) target = $region5
  $region4: #{cpnet_forward.17} parent=0 // pred_region
    _
  $region5: #{cpnet_forward.17} parent=0 // pred_fallthru
    _
  // Predicated region
  $region6: #{cpnet_forward.17} parent=0 // pred_check
    _
  $region7: #{cpnet_forward.17} parent=0 // pred_check_branch
    %12 = sbr.rel (0) target = $region9
  $region8: #{cpnet_forward.17} parent=0 // pred_region
    _
  $region9: #{cpnet_forward.17} parent=0 // pred_fallthru
    _
  // Predicated region
  $region10: #{cpnet_forward.17} parent=0 // pred_check
    _
  $region11: #{cpnet_forward.17} parent=0 // pred_check_branch
    %14 = sbr.rel (0) target = $region13
  $region12: #{cpnet_forward.17} parent=0 // pred_region
    _
  $region13: #{cpnet_forward.17} parent=0 // pred_fallthru
    _
  // Predicated region
  $region14: #{cpnet_forward.17} parent=0 // pred_check
    _
  $region15: #{cpnet_forward.17} parent=0 // pred_check_branch
    %16 = sbr.rel (0) target = $region17
  $region16: #{cpnet_forward.17} parent=0 // pred_region
    _
  $region17: #{cpnet_forward.17} parent=0 // pred_fallthru
    _
  %p17 = scmp.eq.s32.totalorder 0, 0
  // Predicated region
  $region18: #{cpnet_forward.17} parent=0 // pred_check
    %p18 = pneg %p17
  $region19: #{cpnet_forward.17} parent=0 // pred_check_branch
    %20 = sbr.rel (%p18) target = $region21
  $region20: #{cpnet_forward.17} parent=0 // pred_region
    %21 = vst [vmem:[#allocation2] sm:$0xff] 0.0
    %22 = vst [vmem:[#allocation2 + $0x8] sm:$0xff] 0.0
    %23 = vst [vmem:[#allocation2 + $0x10] sm:$0xff] 0.0
    %24 = vst [vmem:[#allocation2 + $0x18] sm:$0xff] 0.0
  $region21: #{cpnet_forward.17} parent=0 // pred_fallthru
    _
  %v25 = vld [vmem:[#allocation2] sm:$0xff]
  %v26 = vld [vmem:[#allocation2 + $0x8] sm:$0xff]
  %v27 = vld [vmem:[#allocation2 + $0x10] sm:$0xff]
  %v28 = vld [vmem:[#allocation2 + $0x18] sm:$0xff]
  %v29 = vld [vmem:[%s0] sm:$0xff]
  %v30 = vld [vmem:[%s0 + $0x8] sm:$0xff]
  %v31 = vld [vmem:[%s0 + $0x10] sm:$0xff]
  %v32 = vld [vmem:[%s0 + $0x18] sm:$0xff]
  %v33 = vld [vmem:[%s0 + $0x20] sm:$0xff]
  %v34 = vld [vmem:[%s0 + $0x28] sm:$0xff]
  %v35 = vld [vmem:[%s0 + $0x30] sm:$0xff]
  %v36 = vld [vmem:[%s0 + $0x38] sm:$0xff]
  %v37 = vld [vmem:[%s1] sm:$0xf]
  %v38 = vld [vmem:[%s1 + $0x4] sm:$0xf]
  %v39 = vld [vmem:[%s1 + $0x8] sm:$0xf]
  %v40 = vld [vmem:[%s1 + $0xc] sm:$0xf]
  %v41 = vld [vmem:[%s1 + $0x10] sm:$0xf]
  %v42 = vld [vmem:[%s1 + $0x14] sm:$0xf]
  %v43 = vld [vmem:[%s1 + $0x18] sm:$0xf]
  %v44 = vld [vmem:[%s1 + $0x1c] sm:$0xf]
  %v45 = vld [vmem:[%s1 + $0x20] sm:$0xf]
  %v46 = vld [vmem:[%s1 + $0x24] sm:$0xf]
  %v47 = vld [vmem:[%s1 + $0x28] sm:$0xf]
  %v48 = vld [vmem:[%s1 + $0x2c] sm:$0xf]
  %v49 = vld [vmem:[%s1 + $0x30] sm:$0xf]
  %v50 = vld [vmem:[%s1 + $0x34] sm:$0xf]
  %v51 = vld [vmem:[%s1 + $0x38] sm:$0xf]
  %v52 = vld [vmem:[%s1 + $0x3c] sm:$0xf]
  %v53 = vld [vmem:[%s1 + $0x40] sm:$0xf]
  %v54 = vld [vmem:[%s1 + $0x44] sm:$0xf]
  %v55 = vld [vmem:[%s1 + $0x48] sm:$0xf]
  %v56 = vld [vmem:[%s1 + $0x4c] sm:$0xf]
  %v57 = vld [vmem:[%s1 + $0x50] sm:$0xf]
  %v58 = vld [vmem:[%s1 + $0x54] sm:$0xf]
  %v59 = vld [vmem:[%s1 + $0x58] sm:$0xf]
  %v60 = vld [vmem:[%s1 + $0x5c] sm:$0xf]
  %v61 = vld [vmem:[%s1 + $0x60] sm:$0xf]
  %v62 = vld [vmem:[%s1 + $0x64] sm:$0xf]
  %v63 = vld [vmem:[%s1 + $0x68] sm:$0xf]
  %v64 = vld [vmem:[%s1 + $0x6c] sm:$0xf]
  %v65 = vld [vmem:[%s1 + $0x70] sm:$0xf]
  %v66 = vld [vmem:[%s1 + $0x74] sm:$0xf]
  %v67 = vld [vmem:[%s1 + $0x78] sm:$0xf]
  %v68 = vld [vmem:[%s1 + $0x7c] sm:$0xf]
  %v69 = vld [vmem:[%s1 + $0x80] sm:$0xf]
  %v70 = vld [vmem:[%s1 + $0x84] sm:$0xf]
  %v71 = vld [vmem:[%s1 + $0x88] sm:$0xf]
  %v72 = vld [vmem:[%s1 + $0x8c] sm:$0xf]
  %v73 = vld [vmem:[%s1 + $0x90] sm:$0xf]
  %v74 = vld [vmem:[%s1 + $0x94] sm:$0xf]
  %v75 = vld [vmem:[%s1 + $0x98] sm:$0xf]
  %v76 = vld [vmem:[%s1 + $0x9c] sm:$0xf]
  %v77 = vld [vmem:[%s1 + $0xa0] sm:$0xf]
  %v78 = vld [vmem:[%s1 + $0xa4] sm:$0xf]
  %v79 = vld [vmem:[%s1 + $0xa8] sm:$0xf]
  %v80 = vld [vmem:[%s1 + $0xac] sm:$0xf]
  %v81 = vld [vmem:[%s1 + $0xb0] sm:$0xf]
  %v82 = vld [vmem:[%s1 + $0xb4] sm:$0xf]
  %v83 = vld [vmem:[%s1 + $0xb8] sm:$0xf]
  %v84 = vld [vmem:[%s1 + $0xbc] sm:$0xf]
  %v85 = vld [vmem:[%s1 + $0xc0] sm:$0xf]
  %v86 = vld [vmem:[%s1 + $0xc4] sm:$0xf]
  %v87 = vld [vmem:[%s1 + $0xc8] sm:$0xf]
  %v88 = vld [vmem:[%s1 + $0xcc] sm:$0xf]
  %v89 = vld [vmem:[%s1 + $0xd0] sm:$0xf]
  %v90 = vld [vmem:[%s1 + $0xd4] sm:$0xf]
  %v91 = vld [vmem:[%s1 + $0xd8] sm:$0xf]
  %v92 = vld [vmem:[%s1 + $0xdc] sm:$0xf]
  %v93 = vld [vmem:[%s1 + $0xe0] sm:$0xf]
  %v94 = vld [vmem:[%s1 + $0xe4] sm:$0xf]
  %v95 = vld [vmem:[%s1 + $0xe8] sm:$0xf]
  %v96 = vld [vmem:[%s1 + $0xec] sm:$0xf]
  %v97 = vld [vmem:[%s1 + $0xf0] sm:$0xf]
  %v98 = vld [vmem:[%s1 + $0xf4] sm:$0xf]
  %v99 = vld [vmem:[%s1 + $0xf8] sm:$0xf]
  %v100 = vld [vmem:[%s1 + $0xfc] sm:$0xf]
  %v109 = vunpack.c.l.b16 %v29
  %v110 = vunpack.c.h.b16 %v29
  %v111 = vunpack.c.l.b16 %v30
  %v112 = vunpack.c.h.b16 %v30
  %v113 = vunpack.c.l.b16 %v31
  %v114 = vunpack.c.h.b16 %v31
  %v115 = vunpack.c.l.b16 %v32
  %v116 = vunpack.c.h.b16 %v32
  %v117 = vunpack.c.l.b16 %v33
  %v118 = vunpack.c.h.b16 %v33
  %v119 = vunpack.c.l.b16 %v34
  %v120 = vunpack.c.h.b16 %v34
  %v121 = vunpack.c.l.b16 %v35
  %v122 = vunpack.c.h.b16 %v35
  %v123 = vunpack.c.l.b16 %v36
  %v124 = vunpack.c.h.b16 %v36
  %v125 = vpack.c.b16 %v113, %v109
  %v126 = vpack.c.b16 %v114, %v110
  %v127 = vpack.c.b16 %v115, %v111
  %v128 = vpack.c.b16 %v116, %v112
  %v129 = vpack.c.b16 %v121, %v117
  %v130 = vpack.c.b16 %v122, %v118
  %v131 = vpack.c.b16 %v123, %v119
  %v132 = vpack.c.b16 %v124, %v120
  %v205 = vunpack.c.l.b16 %v37
  %v206 = vunpack.c.l.b16 %v38
  %v207 = vunpack.c.l.b16 %v39
  %v208 = vunpack.c.l.b16 %v40
  %v209 = vunpack.c.l.b16 %v41
  %v210 = vunpack.c.l.b16 %v42
  %v211 = vunpack.c.l.b16 %v43
  %v212 = vunpack.c.l.b16 %v44
  %v213 = vunpack.c.l.b16 %v45
  %v214 = vunpack.c.l.b16 %v46
  %v215 = vunpack.c.l.b16 %v47
  %v216 = vunpack.c.l.b16 %v48
  %v217 = vunpack.c.l.b16 %v49
  %v218 = vunpack.c.l.b16 %v50
  %v219 = vunpack.c.l.b16 %v51
  %v220 = vunpack.c.l.b16 %v52
  %v221 = vunpack.c.l.b16 %v53
  %v222 = vunpack.c.l.b16 %v54
  %v223 = vunpack.c.l.b16 %v55
  %v224 = vunpack.c.l.b16 %v56
  %v225 = vunpack.c.l.b16 %v57
  %v226 = vunpack.c.l.b16 %v58
  %v227 = vunpack.c.l.b16 %v59
  %v228 = vunpack.c.l.b16 %v60
  %v229 = vunpack.c.l.b16 %v61
  %v230 = vunpack.c.l.b16 %v62
  %v231 = vunpack.c.l.b16 %v63
  %v232 = vunpack.c.l.b16 %v64
  %v233 = vunpack.c.l.b16 %v65
  %v234 = vunpack.c.l.b16 %v66
  %v235 = vunpack.c.l.b16 %v67
  %v236 = vunpack.c.l.b16 %v68
  %v237 = vunpack.c.l.b16 %v69
  %v238 = vunpack.c.l.b16 %v70
  %v239 = vunpack.c.l.b16 %v71
  %v240 = vunpack.c.l.b16 %v72
  %v241 = vunpack.c.l.b16 %v73
  %v242 = vunpack.c.l.b16 %v74
  %v243 = vunpack.c.l.b16 %v75
  %v244 = vunpack.c.l.b16 %v76
  %v245 = vunpack.c.l.b16 %v77
  %v246 = vunpack.c.l.b16 %v78
  %v247 = vunpack.c.l.b16 %v79
  %v248 = vunpack.c.l.b16 %v80
  %v249 = vunpack.c.l.b16 %v81
  %v250 = vunpack.c.l.b16 %v82
  %v251 = vunpack.c.l.b16 %v83
  %v252 = vunpack.c.l.b16 %v84
  %v253 = vunpack.c.l.b16 %v85
  %v254 = vunpack.c.l.b16 %v86
  %v255 = vunpack.c.l.b16 %v87
  %v256 = vunpack.c.l.b16 %v88
  %v257 = vunpack.c.l.b16 %v89
  %v258 = vunpack.c.l.b16 %v90
  %v259 = vunpack.c.l.b16 %v91
  %v260 = vunpack.c.l.b16 %v92
  %v261 = vunpack.c.l.b16 %v93
  %v262 = vunpack.c.l.b16 %v94
  %v263 = vunpack.c.l.b16 %v95
  %v264 = vunpack.c.l.b16 %v96
  %v265 = vunpack.c.l.b16 %v97
  %v266 = vunpack.c.l.b16 %v98
  %v267 = vunpack.c.l.b16 %v99
  %v268 = vunpack.c.l.b16 %v100
  %v269 = vpack.c.b16 %v206, %v205
  %v270 = vpack.c.b16 %v208, %v207
  %v271 = vpack.c.b16 %v210, %v209
  %v272 = vpack.c.b16 %v212, %v211
  %v273 = vpack.c.b16 %v214, %v213
  %v274 = vpack.c.b16 %v216, %v215
  %v275 = vpack.c.b16 %v218, %v217
  %v276 = vpack.c.b16 %v220, %v219
  %v277 = vpack.c.b16 %v222, %v221
  %v278 = vpack.c.b16 %v224, %v223
  %v279 = vpack.c.b16 %v226, %v225
  %v280 = vpack.c.b16 %v228, %v227
  %v281 = vpack.c.b16 %v230, %v229
  %v282 = vpack.c.b16 %v232, %v231
  %v283 = vpack.c.b16 %v234, %v233
  %v284 = vpack.c.b16 %v236, %v235
  %v285 = vpack.c.b16 %v238, %v237
  %v286 = vpack.c.b16 %v240, %v239
  %v287 = vpack.c.b16 %v242, %v241
  %v288 = vpack.c.b16 %v244, %v243
  %v289 = vpack.c.b16 %v246, %v245
  %v290 = vpack.c.b16 %v248, %v247
  %v291 = vpack.c.b16 %v250, %v249
  %v292 = vpack.c.b16 %v252, %v251
  %v293 = vpack.c.b16 %v254, %v253
  %v294 = vpack.c.b16 %v256, %v255
  %v295 = vpack.c.b16 %v258, %v257
  %v296 = vpack.c.b16 %v260, %v259
  %v297 = vpack.c.b16 %v262, %v261
  %v298 = vpack.c.b16 %v264, %v263
  %v299 = vpack.c.b16 %v266, %v265
  %v300 = vpack.c.b16 %v268, %v267
  %333 = vmatpush.bf16.msra.mxu0 %v276
  %334 = vmatpush.bf16.msra.mxu0 %v275
  %335 = vmatpush.bf16.msra.mxu0 %v274
  %336 = vmatpush.bf16.msra.mxu0 %v273
  %337 = vmatpush.bf16.msra.mxu0 %v272
  %338 = vmatpush.bf16.msra.mxu0 %v271
  %339 = vmatpush.bf16.msra.mxu0 %v270
  %340 = vmatpush.bf16.msra.mxu0 %v269
  %341 = vmatmul.bf16.gmra.mxu0 %v125
  %v342 = vpop.f32.mrf.mxu0
  %v343 = vadd.f32 0.0, %v342
  %v344 = vpop.f32.mrf.mxu0
  %v345 = vadd.f32 0.0, %v344
  %346 = vmatmul.bf16.gmra.mxu0 %v129
  %v347 = vpop.f32.mrf.mxu0
  %v348 = vadd.f32 0.0, %v347
  %v349 = vpop.f32.mrf.mxu0
  %v350 = vadd.f32 0.0, %v349
  %351 = vdwg.mxu0
  %352 = vmatpush.bf16.msra.mxu0 %v284
  %353 = vmatpush.bf16.msra.mxu0 %v283
  %354 = vmatpush.bf16.msra.mxu0 %v282
  %355 = vmatpush.bf16.msra.mxu0 %v281
  %356 = vmatpush.bf16.msra.mxu0 %v280
  %357 = vmatpush.bf16.msra.mxu0 %v279
  %358 = vmatpush.bf16.msra.mxu0 %v278
  %359 = vmatpush.bf16.msra.mxu0 %v277
  %360 = vmatmul.bf16.gmra.mxu0 %v126
  %v361 = vpop.f32.mrf.mxu0
  %v362 = vadd.f32 %v343, %v361
  %v363 = vpop.f32.mrf.mxu0
  %v364 = vadd.f32 %v345, %v363
  %365 = vmatmul.bf16.gmra.mxu0 %v130
  %v366 = vpop.f32.mrf.mxu0
  %v367 = vadd.f32 %v348, %v366
  %v368 = vpop.f32.mrf.mxu0
  %v369 = vadd.f32 %v350, %v368
  %370 = vdwg.mxu0
  %371 = vmatpush.bf16.msra.mxu0 %v292
  %372 = vmatpush.bf16.msra.mxu0 %v291
  %373 = vmatpush.bf16.msra.mxu0 %v290
  %374 = vmatpush.bf16.msra.mxu0 %v289
  %375 = vmatpush.bf16.msra.mxu0 %v288
  %376 = vmatpush.bf16.msra.mxu0 %v287
  %377 = vmatpush.bf16.msra.mxu0 %v286
  %378 = vmatpush.bf16.msra.mxu0 %v285
  %379 = vmatmul.bf16.gmra.mxu0 %v127
  %v380 = vpop.f32.mrf.mxu0
  %v381 = vadd.f32 %v362, %v380
  %v382 = vpop.f32.mrf.mxu0
  %v383 = vadd.f32 %v364, %v382
  %384 = vmatmul.bf16.gmra.mxu0 %v131
  %v385 = vpop.f32.mrf.mxu0
  %v386 = vadd.f32 %v367, %v385
  %v387 = vpop.f32.mrf.mxu0
  %v388 = vadd.f32 %v369, %v387
  %389 = vdwg.mxu0
  %390 = vmatpush.bf16.msra.mxu0 %v300
  %391 = vmatpush.bf16.msra.mxu0 %v299
  %392 = vmatpush.bf16.msra.mxu0 %v298
  %393 = vmatpush.bf16.msra.mxu0 %v297
  %394 = vmatpush.bf16.msra.mxu0 %v296
  %395 = vmatpush.bf16.msra.mxu0 %v295
  %396 = vmatpush.bf16.msra.mxu0 %v294
  %397 = vmatpush.bf16.msra.mxu0 %v293
  %398 = vmatmul.bf16.gmra.mxu0 %v128
  %v399 = vpop.f32.mrf.mxu0
  %v400 = vadd.f32 %v381, %v399
  %v401 = vpop.f32.mrf.mxu0
  %v402 = vadd.f32 %v383, %v401
  %403 = vmatmul.bf16.gmra.mxu0 %v132
  %v404 = vpop.f32.mrf.mxu0
  %v405 = vadd.f32 %v386, %v404
  %v406 = vpop.f32.mrf.mxu0
  %v407 = vadd.f32 %v388, %v406
  %408 = vdwg.mxu0
  %v409 = vadd.f32 %v25, %v400
  %v410 = vadd.f32 %v26, %v402
  %v411 = vadd.f32 %v27, %v405
  %v412 = vadd.f32 %v28, %v407
  %413 = vst [vmem:[#allocation2] sm:$0xff] %v409
  %414 = vst [vmem:[#allocation2 + $0x8] sm:$0xff] %v410
  %415 = vst [vmem:[#allocation2 + $0x10] sm:$0xff] %v411
  %416 = vst [vmem:[#allocation2 + $0x18] sm:$0xff] %v412
  // Predicated region
  $region22: #{cpnet_forward.17} parent=0 // pred_check
    %p417 = pneg %p17
  $region23: #{cpnet_forward.17} parent=0 // pred_check_branch
    %419 = sbr.rel (%p417) target = $region25
  $region24: #{cpnet_forward.17} parent=0 // pred_region
    %v420 = vld [vmem:[#allocation2] sm:$0xff]
    %v421 = vld [vmem:[#allocation2 + $0x8] sm:$0xff]
    %v422 = vld [vmem:[#allocation2 + $0x10] sm:$0xff]
    %v423 = vld [vmem:[#allocation2 + $0x18] sm:$0xff]
    %v424 = vld [vmem:[%s2] sm:$0x1]
    %v426 = vperm.slane %v424, 0
    %v428 = vmul.f32 %v420, %v426
    %v429 = vmul.f32 %v421, %v426
    %v430 = vmul.f32 %v422, %v426
    %v431 = vmul.f32 %v423, %v426
    %v432 = vld [vmem:[%s3] sm:$0x1]
    %v434 = vperm.slane %v432, 0
    %v436 = vadd.f32 %v428, %v434
    %v437 = vadd.f32 %v429, %v434
    %v438 = vadd.f32 %v430, %v434
    %v439 = vadd.f32 %v431, %v434
    %v440 = vmax.f32 %v436, 0.0
    %v441 = vmax.f32 %v437, 0.0
    %v442 = vmax.f32 %v438, 0.0
    %v443 = vmax.f32 %v439, 0.0
    %v444 = vpack.c.bf16 %v440, %v440
    %v445 = vpack.c.bf16 %v441, %v441
    %v446 = vpack.c.bf16 %v442, %v442
    %v447 = vpack.c.bf16 %v443, %v443
    %448 = vst [vmem:[%s4] sm:$0xf] %v444
    %449 = vst [vmem:[%s4 + $0x4] sm:$0xf] %v445
    %450 = vst [vmem:[%s4 + $0x8] sm:$0xf] %v446
    %451 = vst [vmem:[%s4 + $0xc] sm:$0xf] %v447
  $region25: #{cpnet_forward.17} parent=0 // pred_fallthru
    _
  // Predicated region
  $region26: #{cpnet_forward.17} parent=0 // pred_check
    _
  $region27: #{cpnet_forward.17} parent=0 // pred_check_branch
    %453 = sbr.rel (0) target = $region29
  $region28: #{cpnet_forward.17} parent=0 // pred_region
    _
  $region29: #{cpnet_forward.17} parent=0 // pred_fallthru
    _
  // Predicated region
  $region30: #{cpnet_forward.17} parent=0 // pred_check
    _
  $region31: #{cpnet_forward.17} parent=0 // pred_check_branch
    %455 = sbr.rel (0) target = $region33
  $region32: #{cpnet_forward.17} parent=0 // pred_region
    _
  $region33: #{cpnet_forward.17} parent=0 // pred_fallthru
    _

// kernel: cpnet_forward.22
$region0: #{cpnet_forward.22}
  #allocation0 [shape = 'u32[]', space=smem, size = 0x4, offset = 0x4, fixed_abs, tag = 'smem constant byte address 0x4 - core index']
  #allocation1 [shape = 'u32[72,128]{1,0:T(1,128)}', space=vmem, size = 0x9000, scoped, tag = 'internal scratch']
  #allocation2 [shape = 'f32[32,128]{1,0:T(8,128)}', space=vmem, size = 0x4000, scoped, tag = 'scratch operand']
  %s0 = inlined_call_operand.vmem [shape: bf16[32,128], index: 0, kind: input, shape index: {}]
  %s1 = inlined_call_operand.vmem [shape: bf16[128,128], index: 1, kind: input, shape index: {}]
  %s2 = inlined_call_operand.vmem [shape: f32[1,128], index: 2, kind: input, shape index: {}]
  %s3 = inlined_call_operand.vmem [shape: f32[1,128], index: 3, kind: input, shape index: {}]
  %s4 = inlined_call_operand.vmem [shape: bf16[32,128], index: 4, kind: output, shape index: {0}]
  %s5 = inlined_call_operand.vmem [shape: bf16[32,128], index: 5, kind: output, shape index: {1}]
  %6 = xla_tuple %s4, %s5
  %s7 = sld [smem:[#allocation0]]
  $region42: #{cpnet_forward.22} parent=0
    _
  %s9 = ssub.s32 1, %s7
  %s10 = scalar_select 0, %s9, %s7
  // Predicated region
  $region2: #{cpnet_forward.22} parent=0 // pred_check
    _
  $region3: #{cpnet_forward.22} parent=0 // pred_check_branch
    %12 = sbr.rel (0) target = $region5
  $region4: #{cpnet_forward.22} parent=0 // pred_region
    _
  $region5: #{cpnet_forward.22} parent=0 // pred_fallthru
    _
  // Predicated region
  $region6: #{cpnet_forward.22} parent=0 // pred_check
    _
  $region7: #{cpnet_forward.22} parent=0 // pred_check_branch
    %14 = sbr.rel (0) target = $region9
  $region8: #{cpnet_forward.22} parent=0 // pred_region
    _
  $region9: #{cpnet_forward.22} parent=0 // pred_fallthru
    _
  // Predicated region
  $region10: #{cpnet_forward.22} parent=0 // pred_check
    _
  $region11: #{cpnet_forward.22} parent=0 // pred_check_branch
    %16 = sbr.rel (0) target = $region13
  $region12: #{cpnet_forward.22} parent=0 // pred_region
    _
  $region13: #{cpnet_forward.22} parent=0 // pred_fallthru
    _
  // Predicated region
  $region14: #{cpnet_forward.22} parent=0 // pred_check
    _
  $region15: #{cpnet_forward.22} parent=0 // pred_check_branch
    %18 = sbr.rel (0) target = $region17
  $region16: #{cpnet_forward.22} parent=0 // pred_region
    _
  $region17: #{cpnet_forward.22} parent=0 // pred_fallthru
    _
  %p19 = scmp.eq.s32.totalorder 0, 0
  // Predicated region
  $region18: #{cpnet_forward.22} parent=0 // pred_check
    %p20 = pneg %p19
  $region19: #{cpnet_forward.22} parent=0 // pred_check_branch
    %22 = sbr.rel (%p20) target = $region21
  $region20: #{cpnet_forward.22} parent=0 // pred_region
    %23 = vst [vmem:[#allocation2] sm:$0xff] 0.0
    %24 = vst [vmem:[#allocation2 + $0x8] sm:$0xff] 0.0
    %25 = vst [vmem:[#allocation2 + $0x10] sm:$0xff] 0.0
    %26 = vst [vmem:[#allocation2 + $0x18] sm:$0xff] 0.0
  $region21: #{cpnet_forward.22} parent=0 // pred_fallthru
    _
  %v27 = vld [vmem:[#allocation2] sm:$0xff]
  %v28 = vld [vmem:[#allocation2 + $0x8] sm:$0xff]
  %v29 = vld [vmem:[#allocation2 + $0x10] sm:$0xff]
  %v30 = vld [vmem:[#allocation2 + $0x18] sm:$0xff]
  %v31 = vld [vmem:[%s0] sm:$0xf]
  %v32 = vld [vmem:[%s0 + $0x4] sm:$0xf]
  %v33 = vld [vmem:[%s0 + $0x8] sm:$0xf]
  %v34 = vld [vmem:[%s0 + $0xc] sm:$0xf]
  %v35 = vld [vmem:[%s1] sm:$0xf]
  %v36 = vld [vmem:[%s1 + $0x4] sm:$0xf]
  %v37 = vld [vmem:[%s1 + $0x8] sm:$0xf]
  %v38 = vld [vmem:[%s1 + $0xc] sm:$0xf]
  %v39 = vld [vmem:[%s1 + $0x10] sm:$0xf]
  %v40 = vld [vmem:[%s1 + $0x14] sm:$0xf]
  %v41 = vld [vmem:[%s1 + $0x18] sm:$0xf]
  %v42 = vld [vmem:[%s1 + $0x1c] sm:$0xf]
  %v43 = vld [vmem:[%s1 + $0x20] sm:$0xf]
  %v44 = vld [vmem:[%s1 + $0x24] sm:$0xf]
  %v45 = vld [vmem:[%s1 + $0x28] sm:$0xf]
  %v46 = vld [vmem:[%s1 + $0x2c] sm:$0xf]
  %v47 = vld [vmem:[%s1 + $0x30] sm:$0xf]
  %v48 = vld [vmem:[%s1 + $0x34] sm:$0xf]
  %v49 = vld [vmem:[%s1 + $0x38] sm:$0xf]
  %v50 = vld [vmem:[%s1 + $0x3c] sm:$0xf]
  %v55 = vunpack.c.l.b16 %v31
  %v56 = vunpack.c.l.b16 %v32
  %v57 = vunpack.c.l.b16 %v33
  %v58 = vunpack.c.l.b16 %v34
  %v59 = vpack.c.b16 %v56, %v55
  %v60 = vpack.c.b16 %v58, %v57
  %v79 = vunpack.c.l.b16 %v35
  %v80 = vunpack.c.l.b16 %v36
  %v81 = vunpack.c.l.b16 %v37
  %v82 = vunpack.c.l.b16 %v38
  %v83 = vunpack.c.l.b16 %v39
  %v84 = vunpack.c.l.b16 %v40
  %v85 = vunpack.c.l.b16 %v41
  %v86 = vunpack.c.l.b16 %v42
  %v87 = vunpack.c.l.b16 %v43
  %v88 = vunpack.c.l.b16 %v44
  %v89 = vunpack.c.l.b16 %v45
  %v90 = vunpack.c.l.b16 %v46
  %v91 = vunpack.c.l.b16 %v47
  %v92 = vunpack.c.l.b16 %v48
  %v93 = vunpack.c.l.b16 %v49
  %v94 = vunpack.c.l.b16 %v50
  %v95 = vpack.c.b16 %v80, %v79
  %v96 = vpack.c.b16 %v82, %v81
  %v97 = vpack.c.b16 %v84, %v83
  %v98 = vpack.c.b16 %v86, %v85
  %v99 = vpack.c.b16 %v88, %v87
  %v100 = vpack.c.b16 %v90, %v89
  %v101 = vpack.c.b16 %v92, %v91
  %v102 = vpack.c.b16 %v94, %v93
  %111 = vmatpush.bf16.msra.mxu0 %v102
  %112 = vmatpush.bf16.msra.mxu0 %v101
  %113 = vmatpush.bf16.msra.mxu0 %v100
  %114 = vmatpush.bf16.msra.mxu0 %v99
  %115 = vmatpush.bf16.msra.mxu0 %v98
  %116 = vmatpush.bf16.msra.mxu0 %v97
  %117 = vmatpush.bf16.msra.mxu0 %v96
  %118 = vmatpush.bf16.msra.mxu0 %v95
  %119 = vmatmul.bf16.gmra.mxu0 %v59
  %v120 = vpop.f32.mrf.mxu0
  %v121 = vadd.f32 0.0, %v120
  %v122 = vpop.f32.mrf.mxu0
  %v123 = vadd.f32 0.0, %v122
  %124 = vmatmul.bf16.gmra.mxu0 %v60
  %v125 = vpop.f32.mrf.mxu0
  %v126 = vadd.f32 0.0, %v125
  %v127 = vpop.f32.mrf.mxu0
  %v128 = vadd.f32 0.0, %v127
  %129 = vdwg.mxu0
  %v130 = vadd.f32 %v27, %v121
  %v131 = vadd.f32 %v28, %v123
  %v132 = vadd.f32 %v29, %v126
  %v133 = vadd.f32 %v30, %v128
  %134 = vst [vmem:[#allocation2] sm:$0xff] %v130
  %135 = vst [vmem:[#allocation2 + $0x8] sm:$0xff] %v131
  %136 = vst [vmem:[#allocation2 + $0x10] sm:$0xff] %v132
  %137 = vst [vmem:[#allocation2 + $0x18] sm:$0xff] %v133
  // Predicated region
  $region22: #{cpnet_forward.22} parent=0 // pred_check
    %p138 = pneg %p19
  $region23: #{cpnet_forward.22} parent=0 // pred_check_branch
    %140 = sbr.rel (%p138) target = $region25
  $region24: #{cpnet_forward.22} parent=0 // pred_region
    %v141 = vld [vmem:[#allocation2] sm:$0xff]
    %v142 = vld [vmem:[#allocation2 + $0x8] sm:$0xff]
    %v143 = vld [vmem:[#allocation2 + $0x10] sm:$0xff]
    %v144 = vld [vmem:[#allocation2 + $0x18] sm:$0xff]
    %v145 = vld [vmem:[%s2] sm:$0x1]
    %v147 = vperm.slane %v145, 0
    %v149 = vmul.f32 %v141, %v147
    %v150 = vmul.f32 %v142, %v147
    %v151 = vmul.f32 %v143, %v147
    %v152 = vmul.f32 %v144, %v147
    %v153 = vld [vmem:[%s3] sm:$0x1]
    %v155 = vperm.slane %v153, 0
    %v157 = vadd.f32 %v149, %v155
    %v158 = vadd.f32 %v150, %v155
    %v159 = vadd.f32 %v151, %v155
    %v160 = vadd.f32 %v152, %v155
    %v161 = vpack.c.bf16 %v157, %v157
    %v162 = vpack.c.bf16 %v158, %v158
    %v163 = vpack.c.bf16 %v159, %v159
    %v164 = vpack.c.bf16 %v160, %v160
    %165 = vst [vmem:[%s4] sm:$0xf] %v161
    %166 = vst [vmem:[%s4 + $0x4] sm:$0xf] %v162
    %167 = vst [vmem:[%s4 + $0x8] sm:$0xf] %v163
    %168 = vst [vmem:[%s4 + $0xc] sm:$0xf] %v164
    %v169 = vxor.u32 %v157, 2147483648
    %v170 = vxor.u32 %v158, 2147483648
    %v171 = vxor.u32 %v159, 2147483648
    %v172 = vxor.u32 %v160, 2147483648
    %v173 = vmul.f32 %v169, 1.442695
    %v174 = vpow.pop %v173
    %v175 = vmul.f32 %v170, 1.442695
    %v176 = vpow.pop %v175
    %v177 = vmul.f32 %v171, 1.442695
    %v178 = vpow.pop %v177
    %v179 = vmul.f32 %v172, 1.442695
    %v180 = vpow.pop %v179
    %v181 = vadd.f32 %v174, 1.0
    %v182 = vadd.f32 %v176, 1.0
    %v183 = vadd.f32 %v178, 1.0
    %v184 = vadd.f32 %v180, 1.0
    %v185 = vrcp.pop %v181
    %v186 = vmul.f32 %v181, %v185
    %v187 = vsub.f32 1.0, %v186
    %v188 = vmul.f32 %v185, %v187
    %v189 = vadd.f32 %v185, %v188
    %vm190 = vweird.f32 %v181
    %vm191 = vweird.f32 %v185
    %vm192 = vmor %vm190, %vm191
    %v193 = vsel %vm192, %v185, %v189
    %v194 = vand.u32 2147483647, %v181
    %vm195 = vcmp.eq.f32.partialorder %v194, 8.507059e+37
    %v196 = vand.u32 %v181, 2147483648
    %v197 = vor.u32 1.1754944e-38, %v196
    %v198 = vsel %vm195, %v197, %v193
    %v199 = vmul.f32 1.0, %v198
    %v200 = vrcp.pop %v182
    %v201 = vmul.f32 %v182, %v200
    %v202 = vsub.f32 1.0, %v201
    %v203 = vmul.f32 %v200, %v202
    %v204 = vadd.f32 %v200, %v203
    %vm205 = vweird.f32 %v182
    %vm206 = vweird.f32 %v200
    %vm207 = vmor %vm205, %vm206
    %v208 = vsel %vm207, %v200, %v204
    %v209 = vand.u32 2147483647, %v182
    %vm210 = vcmp.eq.f32.partialorder %v209, 8.507059e+37
    %v211 = vand.u32 %v182, 2147483648
    %v212 = vor.u32 1.1754944e-38, %v211
    %v213 = vsel %vm210, %v212, %v208
    %v214 = vmul.f32 1.0, %v213
    %v215 = vrcp.pop %v183
    %v216 = vmul.f32 %v183, %v215
    %v217 = vsub.f32 1.0, %v216
    %v218 = vmul.f32 %v215, %v217
    %v219 = vadd.f32 %v215, %v218
    %vm220 = vweird.f32 %v183
    %vm221 = vweird.f32 %v215
    %vm222 = vmor %vm220, %vm221
    %v223 = vsel %vm222, %v215, %v219
    %v224 = vand.u32 2147483647, %v183
    %vm225 = vcmp.eq.f32.partialorder %v224, 8.507059e+37
    %v226 = vand.u32 %v183, 2147483648
    %v227 = vor.u32 1.1754944e-38, %v226
    %v228 = vsel %vm225, %v227, %v223
    %v229 = vmul.f32 1.0, %v228
    %v230 = vrcp.pop %v184
    %v231 = vmul.f32 %v184, %v230
    %v232 = vsub.f32 1.0, %v231
    %v233 = vmul.f32 %v230, %v232
    %v234 = vadd.f32 %v230, %v233
    %vm235 = vweird.f32 %v184
    %vm236 = vweird.f32 %v230
    %vm237 = vmor %vm235, %vm236
    %v238 = vsel %vm237, %v230, %v234
    %v239 = vand.u32 2147483647, %v184
    %vm240 = vcmp.eq.f32.partialorder %v239, 8.507059e+37
    %v241 = vand.u32 %v184, 2147483648
    %v242 = vor.u32 1.1754944e-38, %v241
    %v243 = vsel %vm240, %v242, %v238
    %v244 = vmul.f32 1.0, %v243
    %v245 = vpack.c.bf16 %v199, %v199
    %v246 = vpack.c.bf16 %v214, %v214
    %v247 = vpack.c.bf16 %v229, %v229
    %v248 = vpack.c.bf16 %v244, %v244
    %249 = vst [vmem:[%s5] sm:$0xf] %v245
    %250 = vst [vmem:[%s5 + $0x4] sm:$0xf] %v246
    %251 = vst [vmem:[%s5 + $0x8] sm:$0xf] %v247
    %252 = vst [vmem:[%s5 + $0xc] sm:$0xf] %v248
  $region25: #{cpnet_forward.22} parent=0 // pred_fallthru
    _
  // Predicated region
  $region26: #{cpnet_forward.22} parent=0 // pred_check
    _
  $region27: #{cpnet_forward.22} parent=0 // pred_check_branch
    %254 = sbr.rel (0) target = $region29
  $region28: #{cpnet_forward.22} parent=0 // pred_region
    _
  $region29: #{cpnet_forward.22} parent=0 // pred_fallthru
    _
  // Predicated region
  $region30: #{cpnet_forward.22} parent=0 // pred_check
    _
  $region31: #{cpnet_forward.22} parent=0 // pred_check_branch
    %256 = sbr.rel (0) target = $region33
  $region32: #{cpnet_forward.22} parent=0 // pred_region
    _
  $region33: #{cpnet_forward.22} parent=0 // pred_fallthru
    _
  // Predicated region
  $region34: #{cpnet_forward.22} parent=0 // pred_check
    _
  $region35: #{cpnet_forward.22} parent=0 // pred_check_branch
    %258 = sbr.rel (0) target = $region37
  $region36: #{cpnet_forward.22} parent=0 // pred_region
    _
  $region37: #{cpnet_forward.22} parent=0 // pred_fallthru
    _
  // Predicated region
  $region38: #{cpnet_forward.22} parent=0 // pred_check
    _
  $region39: #{cpnet_forward.22} parent=0 // pred_check_branch
    %260 = sbr.rel (0) target = $region41
  $region40: #{cpnet_forward.22} parent=0 // pred_region
    _
  $region41: #{cpnet_forward.22} parent=0 // pred_fallthru
    _

// kernel: cpnet_forward.23
$region0: #{cpnet_forward.23}
  #allocation0 [shape = 'u32[]', space=smem, size = 0x4, offset = 0x4, fixed_abs, tag = 'smem constant byte address 0x4 - core index']
  #allocation1 [shape = 'u32[72,128]{1,0:T(1,128)}', space=vmem, size = 0x9000, scoped, tag = 'internal scratch']
  #allocation2 [shape = 'f32[32,128]{1,0:T(8,128)}', space=vmem, size = 0x4000, scoped, tag = 'scratch operand']
  %s0 = inlined_call_operand.vmem [shape: bf16[32,128], index: 0, kind: input, shape index: {}]
  %s1 = inlined_call_operand.vmem [shape: bf16[128,128], index: 1, kind: input, shape index: {}]
  %s2 = inlined_call_operand.vmem [shape: f32[1,128], index: 2, kind: input, shape index: {}]
  %s3 = inlined_call_operand.vmem [shape: f32[1,128], index: 3, kind: input, shape index: {}]
  %s4 = inlined_call_operand.vmem [shape: bf16[32,128], index: 4, kind: output, shape index: {}]
  %s5 = sld [smem:[#allocation0]]
  $region34: #{cpnet_forward.23} parent=0
    _
  %s7 = ssub.s32 1, %s5
  %s8 = scalar_select 0, %s7, %s5
  // Predicated region
  $region2: #{cpnet_forward.23} parent=0 // pred_check
    _
  $region3: #{cpnet_forward.23} parent=0 // pred_check_branch
    %10 = sbr.rel (0) target = $region5
  $region4: #{cpnet_forward.23} parent=0 // pred_region
    _
  $region5: #{cpnet_forward.23} parent=0 // pred_fallthru
    _
  // Predicated region
  $region6: #{cpnet_forward.23} parent=0 // pred_check
    _
  $region7: #{cpnet_forward.23} parent=0 // pred_check_branch
    %12 = sbr.rel (0) target = $region9
  $region8: #{cpnet_forward.23} parent=0 // pred_region
    _
  $region9: #{cpnet_forward.23} parent=0 // pred_fallthru
    _
  // Predicated region
  $region10: #{cpnet_forward.23} parent=0 // pred_check
    _
  $region11: #{cpnet_forward.23} parent=0 // pred_check_branch
    %14 = sbr.rel (0) target = $region13
  $region12: #{cpnet_forward.23} parent=0 // pred_region
    _
  $region13: #{cpnet_forward.23} parent=0 // pred_fallthru
    _
  // Predicated region
  $region14: #{cpnet_forward.23} parent=0 // pred_check
    _
  $region15: #{cpnet_forward.23} parent=0 // pred_check_branch
    %16 = sbr.rel (0) target = $region17
  $region16: #{cpnet_forward.23} parent=0 // pred_region
    _
  $region17: #{cpnet_forward.23} parent=0 // pred_fallthru
    _
  %p17 = scmp.eq.s32.totalorder 0, 0
  // Predicated region
  $region18: #{cpnet_forward.23} parent=0 // pred_check
    %p18 = pneg %p17
  $region19: #{cpnet_forward.23} parent=0 // pred_check_branch
    %20 = sbr.rel (%p18) target = $region21
  $region20: #{cpnet_forward.23} parent=0 // pred_region
    %21 = vst [vmem:[#allocation2] sm:$0xff] 0.0
    %22 = vst [vmem:[#allocation2 + $0x8] sm:$0xff] 0.0
    %23 = vst [vmem:[#allocation2 + $0x10] sm:$0xff] 0.0
    %24 = vst [vmem:[#allocation2 + $0x18] sm:$0xff] 0.0
  $region21: #{cpnet_forward.23} parent=0 // pred_fallthru
    _
  %v25 = vld [vmem:[#allocation2] sm:$0xff]
  %v26 = vld [vmem:[#allocation2 + $0x8] sm:$0xff]
  %v27 = vld [vmem:[#allocation2 + $0x10] sm:$0xff]
  %v28 = vld [vmem:[#allocation2 + $0x18] sm:$0xff]
  %v29 = vld [vmem:[%s0] sm:$0xf]
  %v30 = vld [vmem:[%s0 + $0x4] sm:$0xf]
  %v31 = vld [vmem:[%s0 + $0x8] sm:$0xf]
  %v32 = vld [vmem:[%s0 + $0xc] sm:$0xf]
  %v33 = vld [vmem:[%s1] sm:$0xf]
  %v34 = vld [vmem:[%s1 + $0x4] sm:$0xf]
  %v35 = vld [vmem:[%s1 + $0x8] sm:$0xf]
  %v36 = vld [vmem:[%s1 + $0xc] sm:$0xf]
  %v37 = vld [vmem:[%s1 + $0x10] sm:$0xf]
  %v38 = vld [vmem:[%s1 + $0x14] sm:$0xf]
  %v39 = vld [vmem:[%s1 + $0x18] sm:$0xf]
  %v40 = vld [vmem:[%s1 + $0x1c] sm:$0xf]
  %v41 = vld [vmem:[%s1 + $0x20] sm:$0xf]
  %v42 = vld [vmem:[%s1 + $0x24] sm:$0xf]
  %v43 = vld [vmem:[%s1 + $0x28] sm:$0xf]
  %v44 = vld [vmem:[%s1 + $0x2c] sm:$0xf]
  %v45 = vld [vmem:[%s1 + $0x30] sm:$0xf]
  %v46 = vld [vmem:[%s1 + $0x34] sm:$0xf]
  %v47 = vld [vmem:[%s1 + $0x38] sm:$0xf]
  %v48 = vld [vmem:[%s1 + $0x3c] sm:$0xf]
  %v53 = vunpack.c.l.b16 %v29
  %v54 = vunpack.c.l.b16 %v30
  %v55 = vunpack.c.l.b16 %v31
  %v56 = vunpack.c.l.b16 %v32
  %v57 = vpack.c.b16 %v54, %v53
  %v58 = vpack.c.b16 %v56, %v55
  %v77 = vunpack.c.l.b16 %v33
  %v78 = vunpack.c.l.b16 %v34
  %v79 = vunpack.c.l.b16 %v35
  %v80 = vunpack.c.l.b16 %v36
  %v81 = vunpack.c.l.b16 %v37
  %v82 = vunpack.c.l.b16 %v38
  %v83 = vunpack.c.l.b16 %v39
  %v84 = vunpack.c.l.b16 %v40
  %v85 = vunpack.c.l.b16 %v41
  %v86 = vunpack.c.l.b16 %v42
  %v87 = vunpack.c.l.b16 %v43
  %v88 = vunpack.c.l.b16 %v44
  %v89 = vunpack.c.l.b16 %v45
  %v90 = vunpack.c.l.b16 %v46
  %v91 = vunpack.c.l.b16 %v47
  %v92 = vunpack.c.l.b16 %v48
  %v93 = vpack.c.b16 %v78, %v77
  %v94 = vpack.c.b16 %v80, %v79
  %v95 = vpack.c.b16 %v82, %v81
  %v96 = vpack.c.b16 %v84, %v83
  %v97 = vpack.c.b16 %v86, %v85
  %v98 = vpack.c.b16 %v88, %v87
  %v99 = vpack.c.b16 %v90, %v89
  %v100 = vpack.c.b16 %v92, %v91
  %109 = vmatpush.bf16.msra.mxu0 %v100
  %110 = vmatpush.bf16.msra.mxu0 %v99
  %111 = vmatpush.bf16.msra.mxu0 %v98
  %112 = vmatpush.bf16.msra.mxu0 %v97
  %113 = vmatpush.bf16.msra.mxu0 %v96
  %114 = vmatpush.bf16.msra.mxu0 %v95
  %115 = vmatpush.bf16.msra.mxu0 %v94
  %116 = vmatpush.bf16.msra.mxu0 %v93
  %117 = vmatmul.bf16.gmra.mxu0 %v57
  %v118 = vpop.f32.mrf.mxu0
  %v119 = vadd.f32 0.0, %v118
  %v120 = vpop.f32.mrf.mxu0
  %v121 = vadd.f32 0.0, %v120
  %122 = vmatmul.bf16.gmra.mxu0 %v58
  %v123 = vpop.f32.mrf.mxu0
  %v124 = vadd.f32 0.0, %v123
  %v125 = vpop.f32.mrf.mxu0
  %v126 = vadd.f32 0.0, %v125
  %127 = vdwg.mxu0
  %v128 = vadd.f32 %v25, %v119
  %v129 = vadd.f32 %v26, %v121
  %v130 = vadd.f32 %v27, %v124
  %v131 = vadd.f32 %v28, %v126
  %132 = vst [vmem:[#allocation2] sm:$0xff] %v128
  %133 = vst [vmem:[#allocation2 + $0x8] sm:$0xff] %v129
  %134 = vst [vmem:[#allocation2 + $0x10] sm:$0xff] %v130
  %135 = vst [vmem:[#allocation2 + $0x18] sm:$0xff] %v131
  // Predicated region
  $region22: #{cpnet_forward.23} parent=0 // pred_check
    %p136 = pneg %p17
  $region23: #{cpnet_forward.23} parent=0 // pred_check_branch
    %138 = sbr.rel (%p136) target = $region25
  $region24: #{cpnet_forward.23} parent=0 // pred_region
    %v139 = vld [vmem:[#allocation2] sm:$0xff]
    %v140 = vld [vmem:[#allocation2 + $0x8] sm:$0xff]
    %v141 = vld [vmem:[#allocation2 + $0x10] sm:$0xff]
    %v142 = vld [vmem:[#allocation2 + $0x18] sm:$0xff]
    %v143 = vld [vmem:[%s2] sm:$0x1]
    %v145 = vperm.slane %v143, 0
    %v147 = vmul.f32 %v139, %v145
    %v148 = vmul.f32 %v140, %v145
    %v149 = vmul.f32 %v141, %v145
    %v150 = vmul.f32 %v142, %v145
    %v151 = vld [vmem:[%s3] sm:$0x1]
    %v153 = vperm.slane %v151, 0
    %v155 = vadd.f32 %v147, %v153
    %v156 = vadd.f32 %v148, %v153
    %v157 = vadd.f32 %v149, %v153
    %v158 = vadd.f32 %v150, %v153
    %v159 = vxor.u32 %v155, 2147483648
    %v160 = vxor.u32 %v156, 2147483648
    %v161 = vxor.u32 %v157, 2147483648
    %v162 = vxor.u32 %v158, 2147483648
    %v163 = vmul.f32 %v159, 1.442695
    %v164 = vpow.pop %v163
    %v165 = vmul.f32 %v160, 1.442695
    %v166 = vpow.pop %v165
    %v167 = vmul.f32 %v161, 1.442695
    %v168 = vpow.pop %v167
    %v169 = vmul.f32 %v162, 1.442695
    %v170 = vpow.pop %v169
    %v171 = vadd.f32 %v164, 1.0
    %v172 = vadd.f32 %v166, 1.0
    %v173 = vadd.f32 %v168, 1.0
    %v174 = vadd.f32 %v170, 1.0
    %v175 = vrcp.pop %v171
    %v176 = vmul.f32 %v171, %v175
    %v177 = vsub.f32 1.0, %v176
    %v178 = vmul.f32 %v175, %v177
    %v179 = vadd.f32 %v175, %v178
    %vm180 = vweird.f32 %v171
    %vm181 = vweird.f32 %v175
    %vm182 = vmor %vm180, %vm181
    %v183 = vsel %vm182, %v175, %v179
    %v184 = vand.u32 2147483647, %v171
    %vm185 = vcmp.eq.f32.partialorder %v184, 8.507059e+37
    %v186 = vand.u32 %v171, 2147483648
    %v187 = vor.u32 1.1754944e-38, %v186
    %v188 = vsel %vm185, %v187, %v183
    %v189 = vmul.f32 1.0, %v188
    %v190 = vrcp.pop %v172
    %v191 = vmul.f32 %v172, %v190
    %v192 = vsub.f32 1.0, %v191
    %v193 = vmul.f32 %v190, %v192
    %v194 = vadd.f32 %v190, %v193
    %vm195 = vweird.f32 %v172
    %vm196 = vweird.f32 %v190
    %vm197 = vmor %vm195, %vm196
    %v198 = vsel %vm197, %v190, %v194
    %v199 = vand.u32 2147483647, %v172
    %vm200 = vcmp.eq.f32.partialorder %v199, 8.507059e+37
    %v201 = vand.u32 %v172, 2147483648
    %v202 = vor.u32 1.1754944e-38, %v201
    %v203 = vsel %vm200, %v202, %v198
    %v204 = vmul.f32 1.0, %v203
    %v205 = vrcp.pop %v173
    %v206 = vmul.f32 %v173, %v205
    %v207 = vsub.f32 1.0, %v206
    %v208 = vmul.f32 %v205, %v207
    %v209 = vadd.f32 %v205, %v208
    %vm210 = vweird.f32 %v173
    %vm211 = vweird.f32 %v205
    %vm212 = vmor %vm210, %vm211
    %v213 = vsel %vm212, %v205, %v209
    %v214 = vand.u32 2147483647, %v173
    %vm215 = vcmp.eq.f32.partialorder %v214, 8.507059e+37
    %v216 = vand.u32 %v173, 2147483648
    %v217 = vor.u32 1.1754944e-38, %v216
    %v218 = vsel %vm215, %v217, %v213
    %v219 = vmul.f32 1.0, %v218
    %v220 = vrcp.pop %v174
    %v221 = vmul.f32 %v174, %v220
    %v222 = vsub.f32 1.0, %v221
    %v223 = vmul.f32 %v220, %v222
    %v224 = vadd.f32 %v220, %v223
    %vm225 = vweird.f32 %v174
    %vm226 = vweird.f32 %v220
    %vm227 = vmor %vm225, %vm226
    %v228 = vsel %vm227, %v220, %v224
    %v229 = vand.u32 2147483647, %v174
    %vm230 = vcmp.eq.f32.partialorder %v229, 8.507059e+37
    %v231 = vand.u32 %v174, 2147483648
    %v232 = vor.u32 1.1754944e-38, %v231
    %v233 = vsel %vm230, %v232, %v228
    %v234 = vmul.f32 1.0, %v233
    %v235 = vpack.c.bf16 %v189, %v189
    %v236 = vpack.c.bf16 %v204, %v204
    %v237 = vpack.c.bf16 %v219, %v219
    %v238 = vpack.c.bf16 %v234, %v234
    %239 = vst [vmem:[%s4] sm:$0xf] %v235
    %240 = vst [vmem:[%s4 + $0x4] sm:$0xf] %v236
    %241 = vst [vmem:[%s4 + $0x8] sm:$0xf] %v237
    %242 = vst [vmem:[%s4 + $0xc] sm:$0xf] %v238
  $region25: #{cpnet_forward.23} parent=0 // pred_fallthru
    _
  // Predicated region
  $region26: #{cpnet_forward.23} parent=0 // pred_check
    _
  $region27: #{cpnet_forward.23} parent=0 // pred_check_branch
    %244 = sbr.rel (0) target = $region29
  $region28: #{cpnet_forward.23} parent=0 // pred_region
    _
  $region29: #{cpnet_forward.23} parent=0 // pred_fallthru
    _
  // Predicated region
  $region30: #{cpnet_forward.23} parent=0 // pred_check
    _
  $region31: #{cpnet_forward.23} parent=0 // pred_check_branch
    %246 = sbr.rel (0) target = $region33
  $region32: #{cpnet_forward.23} parent=0 // pred_region
    _
  $region33: #{cpnet_forward.23} parent=0 // pred_fallthru
    _

// kernel: cpnet_forward.24
$region0: #{cpnet_forward.24}
  #allocation0 [shape = 'u32[]', space=smem, size = 0x4, offset = 0x4, fixed_abs, tag = 'smem constant byte address 0x4 - core index']
  #allocation1 [shape = 'u32[72,128]{1,0:T(1,128)}', space=vmem, size = 0x9000, scoped, tag = 'internal scratch']
  #allocation2 [shape = 'f32[32,32]{1,0:T(8,128)}', space=vmem, size = 0x4000, scoped, tag = 'scratch operand']
  %s0 = inlined_call_operand.vmem [shape: bf16[2,16,128], index: 0, kind: input, shape index: {}]
  %s1 = inlined_call_operand.vmem [shape: bf16[2,16,128], index: 1, kind: input, shape index: {}]
  %s2 = inlined_call_operand.vmem [shape: bf16[2,128,32], index: 2, kind: input, shape index: {}]
  %s3 = inlined_call_operand.vmem [shape: bf16[2,16,32], index: 3, kind: output, shape index: {0}]
  %s4 = inlined_call_operand.vmem [shape: bf16[2,16,32], index: 4, kind: output, shape index: {1}]
  %5 = xla_tuple %s3, %s4
  %s6 = sld [smem:[#allocation0]]
  $region61: #{cpnet_forward.24} parent=0
    _
  %s8 = ssub.s32 1, %s6
  %s9 = scalar_select 0, %s8, %s6
  loop: start=0, step=1, limit=4
  $region2: #{cpnet_forward.24} parent=0 // loop_pre_header
    _
  $region3: #{cpnet_forward.24} parent=0 // loop_header
    %s11 = sphi 0, %s15
    %p12 = scmp.ge.s32.totalorder %s11, 4
    %s18 = sphi 0, %s37
    %s19 = sphi 0, %s33
    %s20 = sphi 0, %s29
    %s21 = sphi 0, %s18
    %s22 = sphi 0, %s19
    %s23 = sphi 0, %s20
    %s24 = sphi 0, %s21
    %s25 = sphi 0, %s22
    %s26 = sphi 0, %s23
    %s44 = sphi 0, %s46
    %s47 = sphi 0, %s44
    %s48 = sphi 0, %s47
    %s64 = sphi 0, %s48
    %s74 = sphi 0, %s76
    %s77 = sphi 0, %s74
    %s78 = sphi 0, %s77
    %s94 = sphi 0, %s78
    %s100 = sphi 0, %s102
    %s103 = sphi 0, %s100
    %s104 = sphi 0, %s103
    %s120 = sphi 0, %s104
    %s128 = sphi 0, %s130
    %s131 = sphi 0, %s128
    %s132 = sphi 0, %s131
    %s148 = sphi 0, %s132
    %s156 = sphi 0, %s158
    %s159 = sphi 0, %s156
    %s160 = sphi 0, %s159
    %s176 = sphi 0, %s160
  $region4: #{cpnet_forward.24} parent=0 // loop_header_branch
    %14 = sbr.rel (%p12) target = $region8
  $region5: #{cpnet_forward.24} parent=0 // loop_body
    %s16 = ssub.s32 %s11, 1
    %s17 = ssub.s32 %s11, 2
    %s27 = sadd.s32 1, %s20
    %p28 = scmp.ge.s32.totalorder %s27, 1
    %s29 = scalar_select %p28, 0, %s27
    %s30 = sadd.s32 1, %s19
    %s31 = scalar_select %p28, %s30, %s19
    %p32 = scmp.ge.s32.totalorder %s31, 1
    %s33 = scalar_select %p32, 0, %s31
    %s34 = sadd.s32 1, %s18
    %s35 = scalar_select %p32, %s34, %s18
    %p36 = scmp.ge.s32.totalorder %s35, 2
    %s37 = scalar_select %p36, 0, %s35
    %s38 = ssub.s32 %s18, %s37
    %s39 = ssub.s32 %s19, %s33
    %s40 = sor.u32 %s38, %s39
    %s41 = ssub.s32 %s20, %s29
    %s42 = sor.u32 %s40, %s41
    %p43 = scmp.eq.s32.totalorder %s42, 0
    %s45 = sadd.s32 %s44, 1
    %s46 = scalar_select %p43, %s44, %s45
    %p49 = pneg %p43
    %p50 = scmp.eq.s32.totalorder %s11, 1
    %p51 = por %p49, %p50
    %p52 = scmp.ne.s32.totalorder %s44, %s47
    %p53 = scmp.eq.s32.totalorder %s11, 0
    %p54 = por %p52, %p53
    %p55 = scmp.ne.s32.totalorder %s44, %s47
    %p56 = scmp.eq.s32.totalorder %s16, 1
    %p57 = por %p55, %p56
    %p58 = scmp.ne.s32.totalorder %s47, %s48
    %p59 = scmp.eq.s32.totalorder %s16, 0
    %p60 = por %p58, %p59
    %p61 = scmp.ne.s32.totalorder %s47, %s48
    %p62 = scmp.eq.s32.totalorder %s17, 1
    %p63 = por %p61, %p62
    %p65 = scmp.ne.s32.totalorder %s48, %s64
    %p66 = scmp.eq.s32.totalorder %s17, 0
    %p67 = por %p65, %p66
    %s68 = ssub.s32 %s18, %s37
    %s69 = ssub.s32 %s19, %s33
    %s70 = sor.u32 %s68, %s69
    %s71 = ssub.s32 %s20, %s29
    %s72 = sor.u32 %s70, %s71
    %p73 = scmp.eq.s32.totalorder %s72, 0
    %s75 = sadd.s32 %s74, 1
    %s76 = scalar_select %p73, %s74, %s75
    %p79 = pneg %p73
    %p80 = scmp.eq.s32.totalorder %s11, 1
    %p81 = por %p79, %p80
    %p82 = scmp.ne.s32.totalorder %s74, %s77
    %p83 = scmp.eq.s32.totalorder %s11, 0
    %p84 = por %p82, %p83
    %p85 = scmp.ne.s32.totalorder %s74, %s77
    %p86 = scmp.eq.s32.totalorder %s16, 1
    %p87 = por %p85, %p86
    %p88 = scmp.ne.s32.totalorder %s77, %s78
    %p89 = scmp.eq.s32.totalorder %s16, 0
    %p90 = por %p88, %p89
    %p91 = scmp.ne.s32.totalorder %s77, %s78
    %p92 = scmp.eq.s32.totalorder %s17, 1
    %p93 = por %p91, %p92
    %p95 = scmp.ne.s32.totalorder %s78, %s94
    %p96 = scmp.eq.s32.totalorder %s17, 0
    %p97 = por %p95, %p96
    %s98 = ssub.s32 %s18, %s37
    %p99 = scmp.eq.s32.totalorder %s98, 0
    %s101 = sadd.s32 %s100, 1
    %s102 = scalar_select %p99, %s100, %s101
    %p105 = pneg %p99
    %p106 = scmp.eq.s32.totalorder %s11, 1
    %p107 = por %p105, %p106
    %p108 = scmp.ne.s32.totalorder %s100, %s103
    %p109 = scmp.eq.s32.totalorder %s11, 0
    %p110 = por %p108, %p109
    %p111 = scmp.ne.s32.totalorder %s100, %s103
    %p112 = scmp.eq.s32.totalorder %s16, 1
    %p113 = por %p111, %p112
    %p114 = scmp.ne.s32.totalorder %s103, %s104
    %p115 = scmp.eq.s32.totalorder %s16, 0
    %p116 = por %p114, %p115
    %p117 = scmp.ne.s32.totalorder %s103, %s104
    %p118 = scmp.eq.s32.totalorder %s17, 1
    %p119 = por %p117, %p118
    %p121 = scmp.ne.s32.totalorder %s104, %s120
    %p122 = scmp.eq.s32.totalorder %s17, 0
    %p123 = por %p121, %p122
    %s124 = ssub.s32 %s18, %s37
    %s125 = ssub.s32 %s19, %s33
    %s126 = sor.u32 %s124, %s125
    %p127 = scmp.eq.s32.totalorder %s126, 0
    %s129 = sadd.s32 %s128, 1
    %s130 = scalar_select %p127, %s128, %s129
    %p133 = pneg %p127
    %p134 = scmp.eq.s32.totalorder %s11, 1
    %p135 = por %p133, %p134
    %p136 = scmp.ne.s32.totalorder %s128, %s131
    %p137 = scmp.eq.s32.totalorder %s11, 0
    %p138 = por %p136, %p137
    %p139 = scmp.ne.s32.totalorder %s128, %s131
    %p140 = scmp.eq.s32.totalorder %s16, 1
    %p141 = por %p139, %p140
    %p142 = scmp.ne.s32.totalorder %s131, %s132
    %p143 = scmp.eq.s32.totalorder %s16, 0
    %p144 = por %p142, %p143
    %p145 = scmp.ne.s32.totalorder %s131, %s132
    %p146 = scmp.eq.s32.totalorder %s17, 1
    %p147 = por %p145, %p146
    %p149 = scmp.ne.s32.totalorder %s132, %s148
    %p150 = scmp.eq.s32.totalorder %s17, 0
    %p151 = por %p149, %p150
    %s152 = ssub.s32 %s18, %s37
    %s153 = ssub.s32 %s19, %s33
    %s154 = sor.u32 %s152, %s153
    %p155 = scmp.eq.s32.totalorder %s154, 0
    %s157 = sadd.s32 %s156, 1
    %s158 = scalar_select %p155, %s156, %s157
    %p161 = pneg %p155
    %p162 = scmp.eq.s32.totalorder %s11, 1
    %p163 = por %p161, %p162
    %p164 = scmp.ne.s32.totalorder %s156, %s159
    %p165 = scmp.eq.s32.totalorder %s11, 0
    %p166 = por %p164, %p165
    %p167 = scmp.ne.s32.totalorder %s156, %s159
    %p168 = scmp.eq.s32.totalorder %s16, 1
    %p169 = por %p167, %p168
    %p170 = scmp.ne.s32.totalorder %s159, %s160
    %p171 = scmp.eq.s32.totalorder %s16, 0
    %p172 = por %p170, %p171
    %p173 = scmp.ne.s32.totalorder %s159, %s160
    %p174 = scmp.eq.s32.totalorder %s17, 1
    %p175 = por %p173, %p174
    %p177 = scmp.ne.s32.totalorder %s160, %s176
    %p178 = scmp.eq.s32.totalorder %s17, 0
    %p179 = por %p177, %p178
    %p180 = scmp.le.s32.totalorder 1, %s11
    %p181 = scmp.lt.s32.totalorder %s11, 3
    %p182 = pnand %p180, %p181
    %p183 = pneg %p182
    // Predicated region
    $region9: #{cpnet_forward.24} parent=5 // pred_check
      _
    $region10: #{cpnet_forward.24} parent=5 // pred_check_branch
      %185 = sbr.rel (%p182) target = $region12
    $region11: #{cpnet_forward.24} parent=5 // pred_region
      %s186 = ssub.s32 %s11, 1
    $region12: #{cpnet_forward.24} parent=5 // pred_fallthru
      _
    %p187 = scmp.lt.s32.totalorder %s11, 2
    // Predicated region
    $region13: #{cpnet_forward.24} parent=5 // pred_check
      %p188 = pneg %p187
    $region14: #{cpnet_forward.24} parent=5 // pred_check_branch
      %190 = sbr.rel (%p188) target = $region16
    $region15: #{cpnet_forward.24} parent=5 // pred_region
      // Predicated region
      $region17: #{cpnet_forward.24} parent=15 // pred_check
        %p191 = pneg %p54
      $region18: #{cpnet_forward.24} parent=15 // pred_check_branch
        %193 = sbr.rel (%p191) target = $region20
      $region19: #{cpnet_forward.24} parent=15 // pred_region
        %s194 = smul.u32 2, %s19
        %p195 = scmp.lt.s32.totalorder %s18, 1
        %s196 = scalar_select %p195, %s18, 1
        %p197 = scmp.lt.s32.totalorder %s194, 1
        %s198 = scalar_select %p197, %s194, 1
        %p199 = scmp.lt.s32.totalorder %s20, 0
        %s200 = scalar_select %p199, %s20, 0
        %s201 = sadd.s32 %s200, %s198
        %s202 = smul.addr %s196, 2
        %s203 = sadd.s32 %s201, %s202
        %s204 = smul.addr %s203, 4
        %s205 = scalar_lea.vmem %s0, %s204
        %s206 = smul.u32 2, %s19
      $region20: #{cpnet_forward.24} parent=15 // pred_fallthru
        _
      // Predicated region
      $region21: #{cpnet_forward.24} parent=15 // pred_check
        %p207 = pneg %p84
      $region22: #{cpnet_forward.24} parent=15 // pred_check_branch
        %209 = sbr.rel (%p207) target = $region24
      $region23: #{cpnet_forward.24} parent=15 // pred_region
        %s210 = smul.u32 2, %s19
        %p211 = scmp.lt.s32.totalorder %s18, 1
        %s212 = scalar_select %p211, %s18, 1
        %p213 = scmp.lt.s32.totalorder %s210, 1
        %s214 = scalar_select %p213, %s210, 1
        %p215 = scmp.lt.s32.totalorder %s20, 0
        %s216 = scalar_select %p215, %s20, 0
        %s217 = sadd.s32 %s216, %s214
        %s218 = smul.addr %s212, 2
        %s219 = sadd.s32 %s217, %s218
        %s220 = smul.addr %s219, 4
        %s221 = scalar_lea.vmem %s1, %s220
        %s222 = smul.u32 2, %s19
      $region24: #{cpnet_forward.24} parent=15 // pred_fallthru
        _
      // Predicated region
      $region25: #{cpnet_forward.24} parent=15 // pred_check
        %p223 = pneg %p110
      $region26: #{cpnet_forward.24} parent=15 // pred_check_branch
        %225 = sbr.rel (%p223) target = $region28
      $region27: #{cpnet_forward.24} parent=15 // pred_region
        %p226 = scmp.lt.s32.totalorder %s18, 1
        %s227 = scalar_select %p226, %s18, 1
        %s228 = smul.addr %s227, 16
        %s229 = smul.addr %s228, 4
        %s230 = scalar_lea.vmem %s2, %s229
      $region28: #{cpnet_forward.24} parent=15 // pred_fallthru
        _
    $region16: #{cpnet_forward.24} parent=5 // pred_fallthru
      _
    %p231 = scmp.le.s32.totalorder 1, %s11
    %p232 = scmp.lt.s32.totalorder %s11, 3
    %p233 = pnand %p231, %p232
    %p234 = pneg %p233
    // Predicated region
    $region29: #{cpnet_forward.24} parent=5 // pred_check
      _
    $region30: #{cpnet_forward.24} parent=5 // pred_check_branch
      %236 = sbr.rel (%p233) target = $region32
    $region31: #{cpnet_forward.24} parent=5 // pred_region
      %s237 = ssub.s32 %s11, 1
      %s238 = smul.u32 2, %s22
      %p239 = scmp.lt.s32.totalorder %s21, 1
      %s240 = scalar_select %p239, %s21, 1
      %p241 = scmp.lt.s32.totalorder %s238, 1
      %s242 = scalar_select %p241, %s238, 1
      %p243 = scmp.lt.s32.totalorder %s23, 0
      %s244 = scalar_select %p243, %s23, 0
      %s245 = sadd.s32 %s244, %s242
      %s246 = smul.addr %s240, 2
      %s247 = sadd.s32 %s245, %s246
      %s248 = smul.addr %s247, 4
      %s249 = scalar_lea.vmem %s0, %s248
      %p250 = pneg %p60
      %p251 = pneg %p57
      %s252 = smul.u32 2, %s22
      %p253 = scmp.lt.s32.totalorder %s21, 1
      %s254 = scalar_select %p253, %s21, 1
      %p255 = scmp.lt.s32.totalorder %s252, 1
      %s256 = scalar_select %p255, %s252, 1
      %p257 = scmp.lt.s32.totalorder %s23, 0
      %s258 = scalar_select %p257, %s23, 0
      %s259 = sadd.s32 %s258, %s256
      %s260 = smul.addr %s254, 2
      %s261 = sadd.s32 %s259, %s260
      %s262 = smul.addr %s261, 4
      %s263 = scalar_lea.vmem %s1, %s262
      %p264 = pneg %p90
      %p265 = pneg %p87
      %p266 = scmp.lt.s32.totalorder %s21, 1
      %s267 = scalar_select %p266, %s21, 1
      %s268 = smul.addr %s267, 16
      %s269 = smul.addr %s268, 4
      %s270 = scalar_lea.vmem %s2, %s269
      %p271 = pneg %p116
      %p272 = pneg %p113
      %p273 = pneg %p144
      %p274 = pneg %p141
      %s275 = smul.u32 2, %s22
      %p276 = scmp.lt.s32.totalorder %s21, 1
      %s277 = scalar_select %p276, %s21, 1
      %p278 = scmp.lt.s32.totalorder %s275, 1
      %s279 = scalar_select %p278, %s275, 1
      %s280 = smul.addr %s277, 2
      %s281 = sadd.s32 %s279, %s280
      %s282 = smul.addr %s281, 4
      %s283 = scalar_lea.vmem %s3, %s282
      %p284 = pneg %p172
      %p285 = pneg %p169
      %s286 = smul.u32 2, %s22
      %p287 = scmp.lt.s32.totalorder %s21, 1
      %s288 = scalar_select %p287, %s21, 1
      %p289 = scmp.lt.s32.totalorder %s286, 1
      %s290 = scalar_select %p289, %s286, 1
      %s291 = smul.addr %s288, 2
      %s292 = sadd.s32 %s290, %s291
      %s293 = smul.addr %s292, 4
      %s294 = scalar_lea.vmem %s4, %s293
      %s295 = smul.u32 2, %s22
      %p296 = scmp.lt.s32.totalorder %s21, 1
      %s297 = scalar_select %p296, %s21, 1
      %p298 = scmp.lt.s32.totalorder %s295, 1
      %s299 = scalar_select %p298, %s295, 1
      %p300 = scmp.lt.s32.totalorder %s23, 0
      %s301 = scalar_select %p300, %s23, 0
      %s302 = sadd.s32 %s301, %s299
      %s303 = smul.addr %s297, 2
      %s304 = sadd.s32 %s302, %s303
      %s305 = smul.addr %s304, 4
      %s306 = scalar_lea.vmem %s0, %s305
      %s307 = smul.u32 2, %s22
      %s308 = smul.u32 2, %s22
      %p309 = scmp.lt.s32.totalorder %s21, 1
      %s310 = scalar_select %p309, %s21, 1
      %p311 = scmp.lt.s32.totalorder %s308, 1
      %s312 = scalar_select %p311, %s308, 1
      %p313 = scmp.lt.s32.totalorder %s23, 0
      %s314 = scalar_select %p313, %s23, 0
      %s315 = sadd.s32 %s314, %s312
      %s316 = smul.addr %s310, 2
      %s317 = sadd.s32 %s315, %s316
      %s318 = smul.addr %s317, 4
      %s319 = scalar_lea.vmem %s1, %s318
      %s320 = smul.u32 2, %s22
      %p321 = scmp.lt.s32.totalorder %s21, 1
      %s322 = scalar_select %p321, %s21, 1
      %s323 = smul.addr %s322, 16
      %s324 = smul.addr %s323, 4
      %s325 = scalar_lea.vmem %s2, %s324
      %s326 = smul.u32 2, %s22
      %p327 = scmp.lt.s32.totalorder %s21, 1
      %s328 = scalar_select %p327, %s21, 1
      %p329 = scmp.lt.s32.totalorder %s326, 1
      %s330 = scalar_select %p329, %s326, 1
      %s331 = smul.addr %s328, 2
      %s332 = sadd.s32 %s330, %s331
      %s333 = smul.addr %s332, 4
      %s334 = scalar_lea.vmem %s3, %s333
      %s335 = smul.u32 2, %s22
      %s336 = smul.u32 2, %s22
      %p337 = scmp.lt.s32.totalorder %s21, 1
      %s338 = scalar_select %p337, %s21, 1
      %p339 = scmp.lt.s32.totalorder %s336, 1
      %s340 = scalar_select %p339, %s336, 1
      %s341 = smul.addr %s338, 2
      %s342 = sadd.s32 %s340, %s341
      %s343 = smul.addr %s342, 4
      %s344 = scalar_lea.vmem %s4, %s343
      %s345 = smul.u32 2, %s22
      %p346 = scmp.eq.s32.totalorder %s23, 0
      // Predicated region
      $region33: #{cpnet_forward.24} parent=31 // pred_check
        %p347 = pneg %p346
      $region34: #{cpnet_forward.24} parent=31 // pred_check_branch
        %349 = sbr.rel (%p347) target = $region36
      $region35: #{cpnet_forward.24} parent=31 // pred_region
        %vm350 = vcmask 261120
        %351 = vst.msk [vmem:[#allocation2] sm:$0xff] %vm350, 0.0
        %352 = vst.msk [vmem:[#allocation2 + $0x8] sm:$0xff] %vm350, 0.0
        %353 = vst.msk [vmem:[#allocation2 + $0x10] sm:$0xff] %vm350, 0.0
        %354 = vst.msk [vmem:[#allocation2 + $0x18] sm:$0xff] %vm350, 0.0
      $region36: #{cpnet_forward.24} parent=31 // pred_fallthru
        _
      %v355 = vld [vmem:[%s306] sm:$0xf]
      %v356 = vld [vmem:[%s306 + $0x4] sm:$0xf]
      %v357 = vld [vmem:[%s319] sm:$0xf]
      %v358 = vld [vmem:[%s319 + $0x4] sm:$0xf]
      %v361 = vunpack.c.l.b16 %v355
      %v362 = vunpack.c.l.b16 %v356
      %v363 = vpack.c.b16 %v362, %v361
      %v367 = vunpack.c.l.b16 %v357
      %v368 = vunpack.c.l.b16 %v358
      %v369 = vpack.c.b16 %v368, %v367
      %s371 = smul.u32 %s23, 128
      %s372 = sshra.s32 %s371, 3
      %s373 = sand.u32 %s371, 7
      %s374 = smul.addr %s372, 4
      %s375 = scalar_lea.vmem %s325, %s374
      %v376 = vld [vmem:[%s375] sm:$0xf]
      %v377 = vld [vmem:[%s375 + $0x4] sm:$0xf]
      %v378 = vld [vmem:[%s375 + $0x8] sm:$0xf]
      %v379 = vld [vmem:[%s375 + $0xc] sm:$0xf]
      %v380 = vld [vmem:[%s375 + $0x10] sm:$0xf]
      %v381 = vld [vmem:[%s375 + $0x14] sm:$0xf]
      %v382 = vld [vmem:[%s375 + $0x18] sm:$0xf]
      %v383 = vld [vmem:[%s375 + $0x1c] sm:$0xf]
      %v384 = vld [vmem:[%s375 + $0x20] sm:$0xf]
      %v385 = vld [vmem:[%s375 + $0x24] sm:$0xf]
      %v386 = vld [vmem:[%s375 + $0x28] sm:$0xf]
      %v387 = vld [vmem:[%s375 + $0x2c] sm:$0xf]
      %v388 = vld [vmem:[%s375 + $0x30] sm:$0xf]
      %v389 = vld [vmem:[%s375 + $0x34] sm:$0xf]
      %v390 = vld [vmem:[%s375 + $0x38] sm:$0xf]
      %v391 = vld [vmem:[%s375 + $0x3c] sm:$0xf]
      %v392 = vld [vmem:[#allocation2] sm:$0xff]
      %v393 = vld [vmem:[#allocation2 + $0x8] sm:$0xff]
      %v394 = vld [vmem:[#allocation2 + $0x10] sm:$0xff]
      %v395 = vld [vmem:[#allocation2 + $0x18] sm:$0xff]
      %v412 = vunpack.c.l.b16 %v376
      %v413 = vunpack.c.l.b16 %v377
      %v414 = vunpack.c.l.b16 %v378
      %v415 = vunpack.c.l.b16 %v379
      %v416 = vunpack.c.l.b16 %v380
      %v417 = vunpack.c.l.b16 %v381
      %v418 = vunpack.c.l.b16 %v382
      %v419 = vunpack.c.l.b16 %v383
      %v420 = vunpack.c.l.b16 %v384
      %v421 = vunpack.c.l.b16 %v385
      %v422 = vunpack.c.l.b16 %v386
      %v423 = vunpack.c.l.b16 %v387
      %v424 = vunpack.c.l.b16 %v388
      %v425 = vunpack.c.l.b16 %v389
      %v426 = vunpack.c.l.b16 %v390
      %v427 = vunpack.c.l.b16 %v391
      %v428 = vpack.c.b16 %v413, %v412
      %v429 = vpack.c.b16 %v415, %v414
      %v430 = vpack.c.b16 %v417, %v416
      %v431 = vpack.c.b16 %v419, %v418
      %v432 = vpack.c.b16 %v421, %v420
      %v433 = vpack.c.b16 %v423, %v422
      %v434 = vpack.c.b16 %v425, %v424
      %v435 = vpack.c.b16 %v427, %v426
      %444 = vmatpush.bf16.msra.mxu0 %v435
      %445 = vmatpush.bf16.msra.mxu0 %v434
      %446 = vmatpush.bf16.msra.mxu0 %v433
      %447 = vmatpush.bf16.msra.mxu0 %v432
      %448 = vmatpush.bf16.msra.mxu0 %v431
      %449 = vmatpush.bf16.msra.mxu0 %v430
      %450 = vmatpush.bf16.msra.mxu0 %v429
      %451 = vmatpush.bf16.msra.mxu0 %v428
      %452 = vmatmul.bf16.gmra.mxu0 %v363
      %v453 = vpop.f32.mrf.mxu0
      %v454 = vadd.f32 0.0, %v453
      %v455 = vpop.f32.mrf.mxu0
      %v456 = vadd.f32 0.0, %v455
      %457 = vmatmul.bf16.gmra.mxu0 %v369
      %v458 = vpop.f32.mrf.mxu0
      %v459 = vadd.f32 0.0, %v458
      %v460 = vpop.f32.mrf.mxu0
      %v461 = vadd.f32 0.0, %v460
      %462 = vdwg.mxu0
      %v463 = vadd.f32 %v392, %v454
      %v464 = vadd.f32 %v393, %v456
      %v465 = vadd.f32 %v394, %v459
      %v466 = vadd.f32 %v395, %v461
      %vm467 = vcmask 261120
      %468 = vst.msk [vmem:[#allocation2] sm:$0xff] %vm467, %v463
      %469 = vst.msk [vmem:[#allocation2 + $0x8] sm:$0xff] %vm467, %v464
      %470 = vst.msk [vmem:[#allocation2 + $0x10] sm:$0xff] %vm467, %v465
      %471 = vst.msk [vmem:[#allocation2 + $0x18] sm:$0xff] %vm467, %v466
      // Predicated region
      $region37: #{cpnet_forward.24} parent=31 // pred_check
        %p472 = pneg %p346
      $region38: #{cpnet_forward.24} parent=31 // pred_check_branch
        %474 = sbr.rel (%p472) target = $region40
      $region39: #{cpnet_forward.24} parent=31 // pred_region
        %v475 = vld [vmem:[#allocation2] sm:$0xff]
        %v476 = vld [vmem:[#allocation2 + $0x8] sm:$0xff]
        %v477 = vld [vmem:[#allocation2 + $0x10] sm:$0xff]
        %v478 = vld [vmem:[#allocation2 + $0x18] sm:$0xff]
        %v479 = vmul.f32 %v475, 0.0625
        %v480 = vmul.f32 %v476, 0.0625
        %v481 = vmul.f32 %v477, 0.0625
        %v482 = vmul.f32 %v478, 0.0625
        %v483 = vpack.c.bf16 %v479, %v479
        %v484 = vpack.c.bf16 %v480, %v480
        %vm485 = vcmask 257024
        %486 = vst.msk [vmem:[%s334] sm:$0xf] %vm485, %v483
        %487 = vst.msk [vmem:[%s334 + $0x4] sm:$0xf] %vm485, %v484
        %v488 = vpack.c.bf16 %v481, %v481
        %v489 = vpack.c.bf16 %v482, %v482
        %490 = vst.msk [vmem:[%s344] sm:$0xf] %vm485, %v488
        %491 = vst.msk [vmem:[%s344 + $0x4] sm:$0xf] %vm485, %v489
      $region40: #{cpnet_forward.24} parent=31 // pred_fallthru
        _
      %s492 = smul.u32 2, %s22
      %p493 = scmp.lt.s32.totalorder %s21, 1
      %s494 = scalar_select %p493, %s21, 1
      %p495 = scmp.lt.s32.totalorder %s492, 1
      %s496 = scalar_select %p495, %s492, 1
      %s497 = smul.addr %s494, 2
      %s498 = sadd.s32 %s496, %s497
      %s499 = smul.addr %s498, 4
      %s500 = scalar_lea.vmem %s3, %s499
      %s501 = smul.u32 2, %s22
      %p502 = scmp.lt.s32.totalorder %s21, 1
      %s503 = scalar_select %p502, %s21, 1
      %p504 = scmp.lt.s32.totalorder %s501, 1
      %s505 = scalar_select %p504, %s501, 1
      %s506 = smul.addr %s503, 2
      %s507 = sadd.s32 %s505, %s506
      %s508 = smul.addr %s507, 4
      %s509 = scalar_lea.vmem %s4, %s508
      // Predicated region
      $region41: #{cpnet_forward.24} parent=31 // pred_check
        %p510 = pneg %p141
      $region42: #{cpnet_forward.24} parent=31 // pred_check_branch
        %512 = sbr.rel (%p510) target = $region44
      $region43: #{cpnet_forward.24} parent=31 // pred_region
        %s513 = smul.u32 2, %s22
      $region44: #{cpnet_forward.24} parent=31 // pred_fallthru
        _
      // Predicated region
      $region45: #{cpnet_forward.24} parent=31 // pred_check
        %p514 = pneg %p169
      $region46: #{cpnet_forward.24} parent=31 // pred_check_branch
        %516 = sbr.rel (%p514) target = $region48
      $region47: #{cpnet_forward.24} parent=31 // pred_region
        %s517 = smul.u32 2, %s22
      $region48: #{cpnet_forward.24} parent=31 // pred_fallthru
        _
    $region32: #{cpnet_forward.24} parent=5 // pred_fallthru
      _
    %p518 = scmp.le.s32.totalorder 2, %s11
    // Predicated region
    $region49: #{cpnet_forward.24} parent=5 // pred_check
      %p519 = pneg %p518
    $region50: #{cpnet_forward.24} parent=5 // pred_check_branch
      %521 = sbr.rel (%p519) target = $region52
    $region51: #{cpnet_forward.24} parent=5 // pred_region
      %s522 = ssub.s32 %s11, 2
      // Predicated region
      $region53: #{cpnet_forward.24} parent=51 // pred_check
        %p523 = pneg %p147
      $region54: #{cpnet_forward.24} parent=51 // pred_check_branch
        %525 = sbr.rel (%p523) target = $region56
      $region55: #{cpnet_forward.24} parent=51 // pred_region
        %s526 = smul.u32 2, %s25
        %p527 = scmp.lt.s32.totalorder %s24, 1
        %s528 = scalar_select %p527, %s24, 1
        %p529 = scmp.lt.s32.totalorder %s526, 1
        %s530 = scalar_select %p529, %s526, 1
        %s531 = smul.addr %s528, 2
        %s532 = sadd.s32 %s530, %s531
        %s533 = smul.addr %s532, 4
        %s534 = scalar_lea.vmem %s3, %s533
      $region56: #{cpnet_forward.24} parent=51 // pred_fallthru
        _
      // Predicated region
      $region57: #{cpnet_forward.24} parent=51 // pred_check
        %p535 = pneg %p175
      $region58: #{cpnet_forward.24} parent=51 // pred_check_branch
        %537 = sbr.rel (%p535) target = $region60
      $region59: #{cpnet_forward.24} parent=51 // pred_region
        %s538 = smul.u32 2, %s25
        %p539 = scmp.lt.s32.totalorder %s24, 1
        %s540 = scalar_select %p539, %s24, 1
        %p541 = scmp.lt.s32.totalorder %s538, 1
        %s542 = scalar_select %p541, %s538, 1
        %s543 = smul.addr %s540, 2
        %s544 = sadd.s32 %s542, %s543
        %s545 = smul.addr %s544, 4
        %s546 = scalar_lea.vmem %s4, %s545
      $region60: #{cpnet_forward.24} parent=51 // pred_fallthru
        _
    $region52: #{cpnet_forward.24} parent=5 // pred_fallthru
      _
  $region6: #{cpnet_forward.24} parent=0 // loop_footer
    %s15 = sadd.s32 1, %s11
  $region7: #{cpnet_forward.24} parent=0 // loop_footer_branch
    %10 = sbr.rel target = $region3
  $region8: #{cpnet_forward.24} parent=0 // loop_exit
    _

// kernel: cpnet_forward.28
$region0: #{cpnet_forward.28}
  #allocation0 [shape = 'u32[]', space=smem, size = 0x4, offset = 0x4, fixed_abs, tag = 'smem constant byte address 0x4 - core index']
  #allocation1 [shape = 'u32[72,128]{1,0:T(1,128)}', space=vmem, size = 0x9000, scoped, tag = 'internal scratch']
  #allocation2 [shape = 'f32[32,128]{1,0:T(8,128)}', space=vmem, size = 0x4000, scoped, tag = 'scratch operand']
  %s0 = inlined_call_operand.vmem [shape: bf16[32,128], index: 0, kind: input, shape index: {}]
  %s1 = inlined_call_operand.vmem [shape: bf16[128,128], index: 1, kind: input, shape index: {}]
  %s2 = inlined_call_operand.vmem [shape: f32[1,128], index: 2, kind: input, shape index: {}]
  %s3 = inlined_call_operand.vmem [shape: f32[1,128], index: 3, kind: input, shape index: {}]
  %s4 = inlined_call_operand.vmem [shape: f32[32,128], index: 4, kind: output, shape index: {}]
  %s5 = sld [smem:[#allocation0]]
  $region34: #{cpnet_forward.28} parent=0
    _
  %s7 = ssub.s32 1, %s5
  %s8 = scalar_select 0, %s7, %s5
  // Predicated region
  $region2: #{cpnet_forward.28} parent=0 // pred_check
    _
  $region3: #{cpnet_forward.28} parent=0 // pred_check_branch
    %10 = sbr.rel (0) target = $region5
  $region4: #{cpnet_forward.28} parent=0 // pred_region
    _
  $region5: #{cpnet_forward.28} parent=0 // pred_fallthru
    _
  // Predicated region
  $region6: #{cpnet_forward.28} parent=0 // pred_check
    _
  $region7: #{cpnet_forward.28} parent=0 // pred_check_branch
    %12 = sbr.rel (0) target = $region9
  $region8: #{cpnet_forward.28} parent=0 // pred_region
    _
  $region9: #{cpnet_forward.28} parent=0 // pred_fallthru
    _
  // Predicated region
  $region10: #{cpnet_forward.28} parent=0 // pred_check
    _
  $region11: #{cpnet_forward.28} parent=0 // pred_check_branch
    %14 = sbr.rel (0) target = $region13
  $region12: #{cpnet_forward.28} parent=0 // pred_region
    _
  $region13: #{cpnet_forward.28} parent=0 // pred_fallthru
    _
  // Predicated region
  $region14: #{cpnet_forward.28} parent=0 // pred_check
    _
  $region15: #{cpnet_forward.28} parent=0 // pred_check_branch
    %16 = sbr.rel (0) target = $region17
  $region16: #{cpnet_forward.28} parent=0 // pred_region
    _
  $region17: #{cpnet_forward.28} parent=0 // pred_fallthru
    _
  %p17 = scmp.eq.s32.totalorder 0, 0
  // Predicated region
  $region18: #{cpnet_forward.28} parent=0 // pred_check
    %p18 = pneg %p17
  $region19: #{cpnet_forward.28} parent=0 // pred_check_branch
    %20 = sbr.rel (%p18) target = $region21
  $region20: #{cpnet_forward.28} parent=0 // pred_region
    %21 = vst [vmem:[#allocation2] sm:$0xff] 0.0
    %22 = vst [vmem:[#allocation2 + $0x8] sm:$0xff] 0.0
    %23 = vst [vmem:[#allocation2 + $0x10] sm:$0xff] 0.0
    %24 = vst [vmem:[#allocation2 + $0x18] sm:$0xff] 0.0
  $region21: #{cpnet_forward.28} parent=0 // pred_fallthru
    _
  %v25 = vld [vmem:[#allocation2] sm:$0xff]
  %v26 = vld [vmem:[#allocation2 + $0x8] sm:$0xff]
  %v27 = vld [vmem:[#allocation2 + $0x10] sm:$0xff]
  %v28 = vld [vmem:[#allocation2 + $0x18] sm:$0xff]
  %v29 = vld [vmem:[%s0] sm:$0xf]
  %v30 = vld [vmem:[%s0 + $0x4] sm:$0xf]
  %v31 = vld [vmem:[%s0 + $0x8] sm:$0xf]
  %v32 = vld [vmem:[%s0 + $0xc] sm:$0xf]
  %v33 = vld [vmem:[%s1] sm:$0xf]
  %v34 = vld [vmem:[%s1 + $0x4] sm:$0xf]
  %v35 = vld [vmem:[%s1 + $0x8] sm:$0xf]
  %v36 = vld [vmem:[%s1 + $0xc] sm:$0xf]
  %v37 = vld [vmem:[%s1 + $0x10] sm:$0xf]
  %v38 = vld [vmem:[%s1 + $0x14] sm:$0xf]
  %v39 = vld [vmem:[%s1 + $0x18] sm:$0xf]
  %v40 = vld [vmem:[%s1 + $0x1c] sm:$0xf]
  %v41 = vld [vmem:[%s1 + $0x20] sm:$0xf]
  %v42 = vld [vmem:[%s1 + $0x24] sm:$0xf]
  %v43 = vld [vmem:[%s1 + $0x28] sm:$0xf]
  %v44 = vld [vmem:[%s1 + $0x2c] sm:$0xf]
  %v45 = vld [vmem:[%s1 + $0x30] sm:$0xf]
  %v46 = vld [vmem:[%s1 + $0x34] sm:$0xf]
  %v47 = vld [vmem:[%s1 + $0x38] sm:$0xf]
  %v48 = vld [vmem:[%s1 + $0x3c] sm:$0xf]
  %v53 = vunpack.c.l.b16 %v29
  %v54 = vunpack.c.l.b16 %v30
  %v55 = vunpack.c.l.b16 %v31
  %v56 = vunpack.c.l.b16 %v32
  %v57 = vpack.c.b16 %v54, %v53
  %v58 = vpack.c.b16 %v56, %v55
  %v77 = vunpack.c.l.b16 %v33
  %v78 = vunpack.c.l.b16 %v34
  %v79 = vunpack.c.l.b16 %v35
  %v80 = vunpack.c.l.b16 %v36
  %v81 = vunpack.c.l.b16 %v37
  %v82 = vunpack.c.l.b16 %v38
  %v83 = vunpack.c.l.b16 %v39
  %v84 = vunpack.c.l.b16 %v40
  %v85 = vunpack.c.l.b16 %v41
  %v86 = vunpack.c.l.b16 %v42
  %v87 = vunpack.c.l.b16 %v43
  %v88 = vunpack.c.l.b16 %v44
  %v89 = vunpack.c.l.b16 %v45
  %v90 = vunpack.c.l.b16 %v46
  %v91 = vunpack.c.l.b16 %v47
  %v92 = vunpack.c.l.b16 %v48
  %v93 = vpack.c.b16 %v78, %v77
  %v94 = vpack.c.b16 %v80, %v79
  %v95 = vpack.c.b16 %v82, %v81
  %v96 = vpack.c.b16 %v84, %v83
  %v97 = vpack.c.b16 %v86, %v85
  %v98 = vpack.c.b16 %v88, %v87
  %v99 = vpack.c.b16 %v90, %v89
  %v100 = vpack.c.b16 %v92, %v91
  %109 = vmatpush.bf16.msra.mxu0 %v100
  %110 = vmatpush.bf16.msra.mxu0 %v99
  %111 = vmatpush.bf16.msra.mxu0 %v98
  %112 = vmatpush.bf16.msra.mxu0 %v97
  %113 = vmatpush.bf16.msra.mxu0 %v96
  %114 = vmatpush.bf16.msra.mxu0 %v95
  %115 = vmatpush.bf16.msra.mxu0 %v94
  %116 = vmatpush.bf16.msra.mxu0 %v93
  %117 = vmatmul.bf16.gmra.mxu0 %v57
  %v118 = vpop.f32.mrf.mxu0
  %v119 = vadd.f32 0.0, %v118
  %v120 = vpop.f32.mrf.mxu0
  %v121 = vadd.f32 0.0, %v120
  %122 = vmatmul.bf16.gmra.mxu0 %v58
  %v123 = vpop.f32.mrf.mxu0
  %v124 = vadd.f32 0.0, %v123
  %v125 = vpop.f32.mrf.mxu0
  %v126 = vadd.f32 0.0, %v125
  %127 = vdwg.mxu0
  %v128 = vadd.f32 %v25, %v119
  %v129 = vadd.f32 %v26, %v121
  %v130 = vadd.f32 %v27, %v124
  %v131 = vadd.f32 %v28, %v126
  %132 = vst [vmem:[#allocation2] sm:$0xff] %v128
  %133 = vst [vmem:[#allocation2 + $0x8] sm:$0xff] %v129
  %134 = vst [vmem:[#allocation2 + $0x10] sm:$0xff] %v130
  %135 = vst [vmem:[#allocation2 + $0x18] sm:$0xff] %v131
  // Predicated region
  $region22: #{cpnet_forward.28} parent=0 // pred_check
    %p136 = pneg %p17
  $region23: #{cpnet_forward.28} parent=0 // pred_check_branch
    %138 = sbr.rel (%p136) target = $region25
  $region24: #{cpnet_forward.28} parent=0 // pred_region
    %v139 = vld [vmem:[#allocation2] sm:$0xff]
    %v140 = vld [vmem:[#allocation2 + $0x8] sm:$0xff]
    %v141 = vld [vmem:[#allocation2 + $0x10] sm:$0xff]
    %v142 = vld [vmem:[#allocation2 + $0x18] sm:$0xff]
    %v143 = vld [vmem:[%s2] sm:$0x1]
    %v145 = vperm.slane %v143, 0
    %v147 = vmul.f32 %v139, %v145
    %v148 = vmul.f32 %v140, %v145
    %v149 = vmul.f32 %v141, %v145
    %v150 = vmul.f32 %v142, %v145
    %v151 = vld [vmem:[%s3] sm:$0x1]
    %v153 = vperm.slane %v151, 0
    %v155 = vadd.f32 %v147, %v153
    %v156 = vadd.f32 %v148, %v153
    %v157 = vadd.f32 %v149, %v153
    %v158 = vadd.f32 %v150, %v153
    %159 = vst [vmem:[%s4] sm:$0xff] %v155
    %160 = vst [vmem:[%s4 + $0x8] sm:$0xff] %v156
    %161 = vst [vmem:[%s4 + $0x10] sm:$0xff] %v157
    %162 = vst [vmem:[%s4 + $0x18] sm:$0xff] %v158
  $region25: #{cpnet_forward.28} parent=0 // pred_fallthru
    _
  // Predicated region
  $region26: #{cpnet_forward.28} parent=0 // pred_check
    _
  $region27: #{cpnet_forward.28} parent=0 // pred_check_branch
    %164 = sbr.rel (0) target = $region29
  $region28: #{cpnet_forward.28} parent=0 // pred_region
    _
  $region29: #{cpnet_forward.28} parent=0 // pred_fallthru
    _
  // Predicated region
  $region30: #{cpnet_forward.28} parent=0 // pred_check
    _
  $region31: #{cpnet_forward.28} parent=0 // pred_check_branch
    %166 = sbr.rel (0) target = $region33
  $region32: #{cpnet_forward.28} parent=0 // pred_region
    _
  $region33: #{cpnet_forward.28} parent=0 // pred_fallthru
    _

// kernel: cpnet_forward.27
$region0: #{cpnet_forward.27}
  #allocation0 [shape = 'u32[]', space=smem, size = 0x4, offset = 0x4, fixed_abs, tag = 'smem constant byte address 0x4 - core index']
  #allocation1 [shape = 'u32[72,128]{1,0:T(1,128)}', space=vmem, size = 0x9000, scoped, tag = 'internal scratch']
  #allocation2 [shape = 'f32[32,128]{1,0:T(8,128)}', space=vmem, size = 0x4000, scoped, tag = 'scratch operand']
  %s0 = inlined_call_operand.vmem [shape: bf16[32,2048], index: 0, kind: input, shape index: {}]
  %s1 = inlined_call_operand.vmem [shape: bf16[2048,128], index: 1, kind: input, shape index: {}]
  %s2 = inlined_call_operand.vmem [shape: f32[1,128], index: 2, kind: input, shape index: {}]
  %s3 = inlined_call_operand.vmem [shape: f32[1,128], index: 3, kind: input, shape index: {}]
  %s4 = inlined_call_operand.vmem [shape: bf16[32,128], index: 4, kind: output, shape index: {}]
  %s5 = sld [smem:[#allocation0]]
  $region80: #{cpnet_forward.27} parent=0
    _
  %s7 = ssub.s32 1, %s5
  %s8 = scalar_select 0, %s7, %s5
  $region1: #{cpnet_forward.27} parent=0
    #allocation3 [shape = 'u8[131072]{0}', space=vmem, size = 0x20000, scoped, tag = 'input window, operand 0']
    loop: start=0, step=1, limit=4
    $region2: #{cpnet_forward.27} parent=1 // loop_pre_header
      _
    $region3: #{cpnet_forward.27} parent=1 // loop_header
      %s10 = sphi 0, %s14
      %p11 = scmp.ge.s32.totalorder %s10, 4
      %s17 = sphi 0, %s36
      %s18 = sphi 0, %s32
      %s19 = sphi 0, %s28
      %s20 = sphi 0, %s17
      %s21 = sphi 0, %s18
      %s22 = sphi 0, %s19
      %s23 = sphi 0, %s20
      %s24 = sphi 0, %s21
      %s25 = sphi 0, %s22
      %s41 = sphi 0, %s43
      %s44 = sphi 0, %s41
      %s45 = sphi 0, %s44
      %s61 = sphi 0, %s45
      %s69 = sphi 0, %s71
      %s72 = sphi 0, %s69
      %s73 = sphi 0, %s72
      %s89 = sphi 0, %s73
      %s95 = sphi 0, %s97
      %s98 = sphi 0, %s95
      %s99 = sphi 0, %s98
      %s115 = sphi 0, %s99
      %s121 = sphi 0, %s123
      %s124 = sphi 0, %s121
      %s125 = sphi 0, %s124
      %s141 = sphi 0, %s125
      %s149 = sphi 0, %s151
      %s152 = sphi 0, %s149
      %s153 = sphi 0, %s152
      %s169 = sphi 0, %s153
    $region4: #{cpnet_forward.27} parent=1 // loop_header_branch
      %13 = sbr.rel (%p11) target = $region8
    $region5: #{cpnet_forward.27} parent=1 // loop_body
      %s15 = ssub.s32 %s10, 1
      %s16 = ssub.s32 %s10, 2
      %s26 = sadd.s32 1, %s19
      %p27 = scmp.ge.s32.totalorder %s26, 2
      %s28 = scalar_select %p27, 0, %s26
      %s29 = sadd.s32 1, %s18
      %s30 = scalar_select %p27, %s29, %s18
      %p31 = scmp.ge.s32.totalorder %s30, 1
      %s32 = scalar_select %p31, 0, %s30
      %s33 = sadd.s32 1, %s17
      %s34 = scalar_select %p31, %s33, %s17
      %p35 = scmp.ge.s32.totalorder %s34, 1
      %s36 = scalar_select %p35, 0, %s34
      %s37 = ssub.s32 %s17, %s36
      %s38 = ssub.s32 %s19, %s28
      %s39 = sor.u32 %s37, %s38
      %p40 = scmp.eq.s32.totalorder %s39, 0
      %s42 = sadd.s32 %s41, 1
      %s43 = scalar_select %p40, %s41, %s42
      %p46 = pneg %p40
      %p47 = scmp.eq.s32.totalorder %s10, 1
      %p48 = por %p46, %p47
      %p49 = scmp.ne.s32.totalorder %s41, %s44
      %p50 = scmp.eq.s32.totalorder %s10, 0
      %p51 = por %p49, %p50
      %p52 = scmp.ne.s32.totalorder %s41, %s44
      %p53 = scmp.eq.s32.totalorder %s15, 1
      %p54 = por %p52, %p53
      %p55 = scmp.ne.s32.totalorder %s44, %s45
      %p56 = scmp.eq.s32.totalorder %s15, 0
      %p57 = por %p55, %p56
      %p58 = scmp.ne.s32.totalorder %s44, %s45
      %p59 = scmp.eq.s32.totalorder %s16, 1
      %p60 = por %p58, %p59
      %p62 = scmp.ne.s32.totalorder %s45, %s61
      %p63 = scmp.eq.s32.totalorder %s16, 0
      %p64 = por %p62, %p63
      %s65 = ssub.s32 %s19, %s28
      %s66 = ssub.s32 %s18, %s32
      %s67 = sor.u32 %s65, %s66
      %p68 = scmp.eq.s32.totalorder %s67, 0
      %s70 = sadd.s32 %s69, 1
      %s71 = scalar_select %p68, %s69, %s70
      %p74 = pneg %p68
      %p75 = scmp.eq.s32.totalorder %s10, 1
      %p76 = por %p74, %p75
      %p77 = scmp.ne.s32.totalorder %s69, %s72
      %p78 = scmp.eq.s32.totalorder %s10, 0
      %p79 = por %p77, %p78
      %p80 = scmp.ne.s32.totalorder %s69, %s72
      %p81 = scmp.eq.s32.totalorder %s15, 1
      %p82 = por %p80, %p81
      %p83 = scmp.ne.s32.totalorder %s72, %s73
      %p84 = scmp.eq.s32.totalorder %s15, 0
      %p85 = por %p83, %p84
      %p86 = scmp.ne.s32.totalorder %s72, %s73
      %p87 = scmp.eq.s32.totalorder %s16, 1
      %p88 = por %p86, %p87
      %p90 = scmp.ne.s32.totalorder %s73, %s89
      %p91 = scmp.eq.s32.totalorder %s16, 0
      %p92 = por %p90, %p91
      %s93 = ssub.s32 %s18, %s32
      %p94 = scmp.eq.s32.totalorder %s93, 0
      %s96 = sadd.s32 %s95, 1
      %s97 = scalar_select %p94, %s95, %s96
      %p100 = pneg %p94
      %p101 = scmp.eq.s32.totalorder %s10, 1
      %p102 = por %p100, %p101
      %p103 = scmp.ne.s32.totalorder %s95, %s98
      %p104 = scmp.eq.s32.totalorder %s10, 0
      %p105 = por %p103, %p104
      %p106 = scmp.ne.s32.totalorder %s95, %s98
      %p107 = scmp.eq.s32.totalorder %s15, 1
      %p108 = por %p106, %p107
      %p109 = scmp.ne.s32.totalorder %s98, %s99
      %p110 = scmp.eq.s32.totalorder %s15, 0
      %p111 = por %p109, %p110
      %p112 = scmp.ne.s32.totalorder %s98, %s99
      %p113 = scmp.eq.s32.totalorder %s16, 1
      %p114 = por %p112, %p113
      %p116 = scmp.ne.s32.totalorder %s99, %s115
      %p117 = scmp.eq.s32.totalorder %s16, 0
      %p118 = por %p116, %p117
      %s119 = ssub.s32 %s18, %s32
      %p120 = scmp.eq.s32.totalorder %s119, 0
      %s122 = sadd.s32 %s121, 1
      %s123 = scalar_select %p120, %s121, %s122
      %p126 = pneg %p120
      %p127 = scmp.eq.s32.totalorder %s10, 1
      %p128 = por %p126, %p127
      %p129 = scmp.ne.s32.totalorder %s121, %s124
      %p130 = scmp.eq.s32.totalorder %s10, 0
      %p131 = por %p129, %p130
      %p132 = scmp.ne.s32.totalorder %s121, %s124
      %p133 = scmp.eq.s32.totalorder %s15, 1
      %p134 = por %p132, %p133
      %p135 = scmp.ne.s32.totalorder %s124, %s125
      %p136 = scmp.eq.s32.totalorder %s15, 0
      %p137 = por %p135, %p136
      %p138 = scmp.ne.s32.totalorder %s124, %s125
      %p139 = scmp.eq.s32.totalorder %s16, 1
      %p140 = por %p138, %p139
      %p142 = scmp.ne.s32.totalorder %s125, %s141
      %p143 = scmp.eq.s32.totalorder %s16, 0
      %p144 = por %p142, %p143
      %s145 = ssub.s32 %s17, %s36
      %s146 = ssub.s32 %s18, %s32
      %s147 = sor.u32 %s145, %s146
      %p148 = scmp.eq.s32.totalorder %s147, 0
      %s150 = sadd.s32 %s149, 1
      %s151 = scalar_select %p148, %s149, %s150
      %p154 = pneg %p148
      %p155 = scmp.eq.s32.totalorder %s10, 1
      %p156 = por %p154, %p155
      %p157 = scmp.ne.s32.totalorder %s149, %s152
      %p158 = scmp.eq.s32.totalorder %s10, 0
      %p159 = por %p157, %p158
      %p160 = scmp.ne.s32.totalorder %s149, %s152
      %p161 = scmp.eq.s32.totalorder %s15, 1
      %p162 = por %p160, %p161
      %p163 = scmp.ne.s32.totalorder %s152, %s153
      %p164 = scmp.eq.s32.totalorder %s15, 0
      %p165 = por %p163, %p164
      %p166 = scmp.ne.s32.totalorder %s152, %s153
      %p167 = scmp.eq.s32.totalorder %s16, 1
      %p168 = por %p166, %p167
      %p170 = scmp.ne.s32.totalorder %s153, %s169
      %p171 = scmp.eq.s32.totalorder %s16, 0
      %p172 = por %p170, %p171
      %p173 = scmp.le.s32.totalorder 1, %s10
      %p174 = scmp.lt.s32.totalorder %s10, 3
      %p175 = pnand %p173, %p174
      %p176 = pneg %p175
      // Predicated region
      $region9: #{cpnet_forward.27} parent=5 // pred_check
        _
      $region10: #{cpnet_forward.27} parent=5 // pred_check_branch
        %178 = sbr.rel (%p175) target = $region12
      $region11: #{cpnet_forward.27} parent=5 // pred_region
        %s179 = ssub.s32 %s10, 1
        // Predicated region
        $region13: #{cpnet_forward.27} parent=11 // pred_check
          %p180 = pneg %p111
        $region14: #{cpnet_forward.27} parent=11 // pred_check_branch
          %182 = sbr.rel (%p180) target = $region16
        $region15: #{cpnet_forward.27} parent=11 // pred_region
          %p183 = scmp.lt.s32.totalorder %s21, 0
          %s184 = scalar_select %p183, %s21, 0
          %s185 = scalar_lea.vmem %s2, %s184
        $region16: #{cpnet_forward.27} parent=11 // pred_fallthru
          _
        // Predicated region
        $region17: #{cpnet_forward.27} parent=11 // pred_check
          %p186 = pneg %p137
        $region18: #{cpnet_forward.27} parent=11 // pred_check_branch
          %188 = sbr.rel (%p186) target = $region20
        $region19: #{cpnet_forward.27} parent=11 // pred_region
          %p189 = scmp.lt.s32.totalorder %s21, 0
          %s190 = scalar_select %p189, %s21, 0
          %s191 = scalar_lea.vmem %s3, %s190
        $region20: #{cpnet_forward.27} parent=11 // pred_fallthru
          _
      $region12: #{cpnet_forward.27} parent=5 // pred_fallthru
        _
      %p192 = scmp.lt.s32.totalorder %s10, 2
      // Predicated region
      $region21: #{cpnet_forward.27} parent=5 // pred_check
        %p193 = pneg %p192
      $region22: #{cpnet_forward.27} parent=5 // pred_check_branch
        %195 = sbr.rel (%p193) target = $region24
      $region23: #{cpnet_forward.27} parent=5 // pred_region
        // Predicated region
        $region25: #{cpnet_forward.27} parent=23 // pred_check
          %p196 = pneg %p51
        $region26: #{cpnet_forward.27} parent=23 // pred_check_branch
          %198 = sbr.rel (%p196) target = $region28
        $region27: #{cpnet_forward.27} parent=23 // pred_region
          %s199 = sand.u32 %s41, 1
          %s200 = sand.u32 %s41, 1
          %s201 = smul.addr %s200, 128
          %s202 = scalar_lea.vmem [#allocation3], %s201
          %s203 = smul.u32 4, %s17
          %s204 = smul.u32 8, %s19
          %s205 = smul.addr %s203, 16
          %s206 = sadd.s32 %s204, %s205
          %s207 = smul.addr %s206, 4
          %s208 = scalar_lea.vmem %s0, %s207
          // Predicated region
          $region29: #{cpnet_forward.27} parent=27 // pred_check
            _
          $region30: #{cpnet_forward.27} parent=27 // pred_check_branch
            %210 = sbr.rel (0) target = $region32
          $region31: #{cpnet_forward.27} parent=27 // pred_region
            // Predicated region
            $region33: #{cpnet_forward.27} parent=31 // pred_check
              _
            $region34: #{cpnet_forward.27} parent=31 // pred_check_branch
              %212 = sbr.rel (0) target = $region36
            $region35: #{cpnet_forward.27} parent=31 // pred_region
              loop: start=0, step=1, limit=1
              $region37: #{cpnet_forward.27} parent=35 // loop_pre_header
                _
              $region38: #{cpnet_forward.27} parent=35 // loop_header
                %s214 = sphi 0, %s218
                %p215 = scmp.ge.s32.totalorder %s214, 1
                %s219 = sphi %s208, %s208
                %s220 = sphi %s202, %s202
              $region39: #{cpnet_forward.27} parent=35 // loop_header_branch
                %217 = sbr.rel (%p215) target = $region43
              $region40: #{cpnet_forward.27} parent=35 // loop_body
                %v221 = vld [vmem:[%s219] sm:$0xff]
                %222 = vst [vmem:[%s220] sm:$0xff] %v221
                %v223 = vld [vmem:[%s219 + $0x8] sm:$0xff]
                %224 = vst [vmem:[%s220 + $0x8] sm:$0xff] %v223
                %v225 = vld [vmem:[%s219 + $0x10] sm:$0xff]
                %226 = vst [vmem:[%s220 + $0x10] sm:$0xff] %v225
                %v227 = vld [vmem:[%s219 + $0x18] sm:$0xff]
                %228 = vst [vmem:[%s220 + $0x18] sm:$0xff] %v227
                %v229 = vld [vmem:[%s219 + $0x40] sm:$0xff]
                %230 = vst [vmem:[%s220 + $0x20] sm:$0xff] %v229
                %v231 = vld [vmem:[%s219 + $0x48] sm:$0xff]
                %232 = vst [vmem:[%s220 + $0x28] sm:$0xff] %v231
                %v233 = vld [vmem:[%s219 + $0x50] sm:$0xff]
                %234 = vst [vmem:[%s220 + $0x30] sm:$0xff] %v233
                %v235 = vld [vmem:[%s219 + $0x58] sm:$0xff]
                %236 = vst [vmem:[%s220 + $0x38] sm:$0xff] %v235
                %v237 = vld [vmem:[%s219 + $0x80] sm:$0xff]
                %238 = vst [vmem:[%s220 + $0x40] sm:$0xff] %v237
                %v239 = vld [vmem:[%s219 + $0x88] sm:$0xff]
                %240 = vst [vmem:[%s220 + $0x48] sm:$0xff] %v239
                %v241 = vld [vmem:[%s219 + $0x90] sm:$0xff]
                %242 = vst [vmem:[%s220 + $0x50] sm:$0xff] %v241
                %v243 = vld [vmem:[%s219 + $0x98] sm:$0xff]
                %244 = vst [vmem:[%s220 + $0x58] sm:$0xff] %v243
                %v245 = vld [vmem:[%s219 + $0xc0] sm:$0xff]
                %246 = vst [vmem:[%s220 + $0x60] sm:$0xff] %v245
                %v247 = vld [vmem:[%s219 + $0xc8] sm:$0xff]
                %248 = vst [vmem:[%s220 + $0x68] sm:$0xff] %v247
                %v249 = vld [vmem:[%s219 + $0xd0] sm:$0xff]
                %250 = vst [vmem:[%s220 + $0x70] sm:$0xff] %v249
                %v251 = vld [vmem:[%s219 + $0xd8] sm:$0xff]
                %252 = vst [vmem:[%s220 + $0x78] sm:$0xff] %v251
              $region41: #{cpnet_forward.27} parent=35 // loop_footer
                %s218 = sadd.s32 1, %s214
              $region42: #{cpnet_forward.27} parent=35 // loop_footer_branch
                %213 = sbr.rel target = $region38
              $region43: #{cpnet_forward.27} parent=35 // loop_exit
                _
            $region36: #{cpnet_forward.27} parent=31 // pred_fallthru
              _
            // Predicated region
            $region44: #{cpnet_forward.27} parent=31 // pred_check
              _
            $region45: #{cpnet_forward.27} parent=31 // pred_check_branch
              %254 = sbr.rel target = $region47
            $region46: #{cpnet_forward.27} parent=31 // pred_region
              _
            $region47: #{cpnet_forward.27} parent=31 // pred_fallthru
              _
          $region32: #{cpnet_forward.27} parent=27 // pred_fallthru
            _
          %255 = vnop
        $region28: #{cpnet_forward.27} parent=23 // pred_fallthru
          _
        // Predicated region
        $region48: #{cpnet_forward.27} parent=23 // pred_check
          %p256 = pneg %p79
        $region49: #{cpnet_forward.27} parent=23 // pred_check_branch
          %258 = sbr.rel (%p256) target = $region51
        $region50: #{cpnet_forward.27} parent=23 // pred_region
          %s259 = smul.u32 128, %s19
          %p260 = scmp.lt.s32.totalorder %s259, 255
          %s261 = scalar_select %p260, %s259, 255
          %p262 = scmp.lt.s32.totalorder %s18, 0
          %s263 = scalar_select %p262, %s18, 0
          %s264 = sadd.s32 %s263, %s261
          %s265 = smul.addr %s264, 4
          %s266 = scalar_lea.vmem %s1, %s265
          %s267 = smul.u32 128, %s19
        $region51: #{cpnet_forward.27} parent=23 // pred_fallthru
          _
      $region24: #{cpnet_forward.27} parent=5 // pred_fallthru
        _
      %p268 = scmp.le.s32.totalorder 1, %s10
      %p269 = scmp.lt.s32.totalorder %s10, 3
      %p270 = pnand %p268, %p269
      %p271 = pneg %p270
      // Predicated region
      $region52: #{cpnet_forward.27} parent=5 // pred_check
        _
      $region53: #{cpnet_forward.27} parent=5 // pred_check_branch
        %273 = sbr.rel (%p270) target = $region55
      $region54: #{cpnet_forward.27} parent=5 // pred_region
        %s274 = ssub.s32 %s10, 1
        %s275 = sand.u32 %s44, 1
        %s276 = sand.u32 %s44, 1
        %s277 = smul.addr %s276, 128
        %s278 = scalar_lea.vmem [#allocation3], %s277
        // Predicated region
        $region56: #{cpnet_forward.27} parent=54 // pred_check
          %p279 = pneg %p57
        $region57: #{cpnet_forward.27} parent=54 // pred_check_branch
          %281 = sbr.rel (%p279) target = $region59
        $region58: #{cpnet_forward.27} parent=54 // pred_region
          _
        $region59: #{cpnet_forward.27} parent=54 // pred_fallthru
          _
        %s282 = sand.u32 %s44, 1
        %s283 = sand.u32 %s44, 1
        %s284 = smul.addr %s283, 128
        %s285 = scalar_lea.vmem [#allocation3], %s284
        %p286 = pneg %p57
        %p287 = pneg %p54
        %s288 = smul.u32 128, %s22
        %p289 = scmp.lt.s32.totalorder %s288, 255
        %s290 = scalar_select %p289, %s288, 255
        %p291 = scmp.lt.s32.totalorder %s21, 0
        %s292 = scalar_select %p291, %s21, 0
        %s293 = sadd.s32 %s292, %s290
        %s294 = smul.addr %s293, 4
        %s295 = scalar_lea.vmem %s1, %s294
        %p296 = pneg %p85
        %p297 = pneg %p82
        %p298 = scmp.lt.s32.totalorder %s21, 0
        %s299 = scalar_select %p298, %s21, 0
        %s300 = scalar_lea.vmem %s2, %s299
        %p301 = pneg %p111
        %p302 = pneg %p108
        %p303 = scmp.lt.s32.totalorder %s21, 0
        %s304 = scalar_select %p303, %s21, 0
        %s305 = scalar_lea.vmem %s3, %s304
        %p306 = pneg %p137
        %p307 = pneg %p134
        %p308 = pneg %p165
        %p309 = pneg %p162
        %s310 = smul.u32 4, %s20
        %p311 = scmp.lt.s32.totalorder %s310, 3
        %s312 = scalar_select %p311, %s310, 3
        %p313 = scmp.lt.s32.totalorder %s21, 0
        %s314 = scalar_select %p313, %s21, 0
        %s315 = sadd.s32 %s314, %s312
        %s316 = smul.addr %s315, 4
        %s317 = scalar_lea.vmem %s4, %s316
        %s318 = smul.u32 4, %s20
        %s319 = smul.u32 8, %s22
        %s320 = smul.u32 128, %s22
        %p321 = scmp.lt.s32.totalorder %s320, 255
        %s322 = scalar_select %p321, %s320, 255
        %p323 = scmp.lt.s32.totalorder %s21, 0
        %s324 = scalar_select %p323, %s21, 0
        %s325 = sadd.s32 %s324, %s322
        %s326 = smul.addr %s325, 4
        %s327 = scalar_lea.vmem %s1, %s326
        %s328 = smul.u32 128, %s22
        %p329 = scmp.lt.s32.totalorder %s21, 0
        %s330 = scalar_select %p329, %s21, 0
        %s331 = scalar_lea.vmem %s2, %s330
        %p332 = scmp.lt.s32.totalorder %s21, 0
        %s333 = scalar_select %p332, %s21, 0
        %s334 = scalar_lea.vmem %s3, %s333
        %s335 = smul.u32 4, %s20
        %p336 = scmp.lt.s32.totalorder %s335, 3
        %s337 = scalar_select %p336, %s335, 3
        %p338 = scmp.lt.s32.totalorder %s21, 0
        %s339 = scalar_select %p338, %s21, 0
        %s340 = sadd.s32 %s339, %s337
        %s341 = smul.addr %s340, 4
        %s342 = scalar_lea.vmem %s4, %s341
        %s343 = smul.u32 4, %s20
        %p344 = scmp.eq.s32.totalorder %s22, 0
        // Predicated region
        $region60: #{cpnet_forward.27} parent=54 // pred_check
          %p345 = pneg %p344
        $region61: #{cpnet_forward.27} parent=54 // pred_check_branch
          %347 = sbr.rel (%p345) target = $region63
        $region62: #{cpnet_forward.27} parent=54 // pred_region
          %348 = vst [vmem:[#allocation2] sm:$0xff] 0.0
          %349 = vst [vmem:[#allocation2 + $0x8] sm:$0xff] 0.0
          %350 = vst [vmem:[#allocation2 + $0x10] sm:$0xff] 0.0
          %351 = vst [vmem:[#allocation2 + $0x18] sm:$0xff] 0.0
        $region63: #{cpnet_forward.27} parent=54 // pred_fallthru
          _
        %v352 = vld [vmem:[#allocation2] sm:$0xff]
        %v353 = vld [vmem:[#allocation2 + $0x8] sm:$0xff]
        %v354 = vld [vmem:[#allocation2 + $0x10] sm:$0xff]
        %v355 = vld [vmem:[#allocation2 + $0x18] sm:$0xff]
        %v356 = vld [vmem:[%s278] sm:$0xff]
        %v357 = vld [vmem:[%s278 + $0x8] sm:$0xff]
        %v358 = vld [vmem:[%s278 + $0x10] sm:$0xff]
        %v359 = vld [vmem:[%s278 + $0x18] sm:$0xff]
        %v360 = vld [vmem:[%s278 + $0x20] sm:$0xff]
        %v361 = vld [vmem:[%s278 + $0x28] sm:$0xff]
        %v362 = vld [vmem:[%s278 + $0x30] sm:$0xff]
        %v363 = vld [vmem:[%s278 + $0x38] sm:$0xff]
        %v364 = vld [vmem:[%s278 + $0x40] sm:$0xff]
        %v365 = vld [vmem:[%s278 + $0x48] sm:$0xff]
        %v366 = vld [vmem:[%s278 + $0x50] sm:$0xff]
        %v367 = vld [vmem:[%s278 + $0x58] sm:$0xff]
        %v368 = vld [vmem:[%s278 + $0x60] sm:$0xff]
        %v369 = vld [vmem:[%s278 + $0x68] sm:$0xff]
        %v370 = vld [vmem:[%s278 + $0x70] sm:$0xff]
        %v371 = vld [vmem:[%s278 + $0x78] sm:$0xff]
        %v372 = vld [vmem:[%s327] sm:$0xf]
        %v373 = vld [vmem:[%s327 + $0x4] sm:$0xf]
        %v374 = vld [vmem:[%s327 + $0x8] sm:$0xf]
        %v375 = vld [vmem:[%s327 + $0xc] sm:$0xf]
        %v376 = vld [vmem:[%s327 + $0x10] sm:$0xf]
        %v377 = vld [vmem:[%s327 + $0x14] sm:$0xf]
        %v378 = vld [vmem:[%s327 + $0x18] sm:$0xf]
        %v379 = vld [vmem:[%s327 + $0x1c] sm:$0xf]
        %v380 = vld [vmem:[%s327 + $0x20] sm:$0xf]
        %v381 = vld [vmem:[%s327 + $0x24] sm:$0xf]
        %v382 = vld [vmem:[%s327 + $0x28] sm:$0xf]
        %v383 = vld [vmem:[%s327 + $0x2c] sm:$0xf]
        %v384 = vld [vmem:[%s327 + $0x30] sm:$0xf]
        %v385 = vld [vmem:[%s327 + $0x34] sm:$0xf]
        %v386 = vld [vmem:[%s327 + $0x38] sm:$0xf]
        %v387 = vld [vmem:[%s327 + $0x3c] sm:$0xf]
        %v388 = vld [vmem:[%s327 + $0x40] sm:$0xf]
        %v389 = vld [vmem:[%s327 + $0x44] sm:$0xf]
        %v390 = vld [vmem:[%s327 + $0x48] sm:$0xf]
        %v391 = vld [vmem:[%s327 + $0x4c] sm:$0xf]
        %v392 = vld [vmem:[%s327 + $0x50] sm:$0xf]
        %v393 = vld [vmem:[%s327 + $0x54] sm:$0xf]
        %v394 = vld [vmem:[%s327 + $0x58] sm:$0xf]
        %v395 = vld [vmem:[%s327 + $0x5c] sm:$0xf]
        %v396 = vld [vmem:[%s327 + $0x60] sm:$0xf]
        %v397 = vld [vmem:[%s327 + $0x64] sm:$0xf]
        %v398 = vld [vmem:[%s327 + $0x68] sm:$0xf]
        %v399 = vld [vmem:[%s327 + $0x6c] sm:$0xf]
        %v400 = vld [vmem:[%s327 + $0x70] sm:$0xf]
        %v401 = vld [vmem:[%s327 + $0x74] sm:$0xf]
        %v402 = vld [vmem:[%s327 + $0x78] sm:$0xf]
        %v403 = vld [vmem:[%s327 + $0x7c] sm:$0xf]
        %v404 = vld [vmem:[%s327 + $0x80] sm:$0xf]
        %v405 = vld [vmem:[%s327 + $0x84] sm:$0xf]
        %v406 = vld [vmem:[%s327 + $0x88] sm:$0xf]
        %v407 = vld [vmem:[%s327 + $0x8c] sm:$0xf]
        %v408 = vld [vmem:[%s327 + $0x90] sm:$0xf]
        %v409 = vld [vmem:[%s327 + $0x94] sm:$0xf]
        %v410 = vld [vmem:[%s327 + $0x98] sm:$0xf]
        %v411 = vld [vmem:[%s327 + $0x9c] sm:$0xf]
        %v412 = vld [vmem:[%s327 + $0xa0] sm:$0xf]
        %v413 = vld [vmem:[%s327 + $0xa4] sm:$0xf]
        %v414 = vld [vmem:[%s327 + $0xa8] sm:$0xf]
        %v415 = vld [vmem:[%s327 + $0xac] sm:$0xf]
        %v416 = vld [vmem:[%s327 + $0xb0] sm:$0xf]
        %v417 = vld [vmem:[%s327 + $0xb4] sm:$0xf]
        %v418 = vld [vmem:[%s327 + $0xb8] sm:$0xf]
        %v419 = vld [vmem:[%s327 + $0xbc] sm:$0xf]
        %v420 = vld [vmem:[%s327 + $0xc0] sm:$0xf]
        %v421 = vld [vmem:[%s327 + $0xc4] sm:$0xf]
        %v422 = vld [vmem:[%s327 + $0xc8] sm:$0xf]
        %v423 = vld [vmem:[%s327 + $0xcc] sm:$0xf]
        %v424 = vld [vmem:[%s327 + $0xd0] sm:$0xf]
        %v425 = vld [vmem:[%s327 + $0xd4] sm:$0xf]
        %v426 = vld [vmem:[%s327 + $0xd8] sm:$0xf]
        %v427 = vld [vmem:[%s327 + $0xdc] sm:$0xf]
        %v428 = vld [vmem:[%s327 + $0xe0] sm:$0xf]
        %v429 = vld [vmem:[%s327 + $0xe4] sm:$0xf]
        %v430 = vld [vmem:[%s327 + $0xe8] sm:$0xf]
        %v431 = vld [vmem:[%s327 + $0xec] sm:$0xf]
        %v432 = vld [vmem:[%s327 + $0xf0] sm:$0xf]
        %v433 = vld [vmem:[%s327 + $0xf4] sm:$0xf]
        %v434 = vld [vmem:[%s327 + $0xf8] sm:$0xf]
        %v435 = vld [vmem:[%s327 + $0xfc] sm:$0xf]
        %v436 = vld [vmem:[%s327 + $0x100] sm:$0xf]
        %v437 = vld [vmem:[%s327 + $0x104] sm:$0xf]
        %v438 = vld [vmem:[%s327 + $0x108] sm:$0xf]
        %v439 = vld [vmem:[%s327 + $0x10c] sm:$0xf]
        %v440 = vld [vmem:[%s327 + $0x110] sm:$0xf]
        %v441 = vld [vmem:[%s327 + $0x114] sm:$0xf]
        %v442 = vld [vmem:[%s327 + $0x118] sm:$0xf]
        %v443 = vld [vmem:[%s327 + $0x11c] sm:$0xf]
        %v444 = vld [vmem:[%s327 + $0x120] sm:$0xf]
        %v445 = vld [vmem:[%s327 + $0x124] sm:$0xf]
        %v446 = vld [vmem:[%s327 + $0x128] sm:$0xf]
        %v447 = vld [vmem:[%s327 + $0x12c] sm:$0xf]
        %v448 = vld [vmem:[%s327 + $0x130] sm:$0xf]
        %v449 = vld [vmem:[%s327 + $0x134] sm:$0xf]
        %v450 = vld [vmem:[%s327 + $0x138] sm:$0xf]
        %v451 = vld [vmem:[%s327 + $0x13c] sm:$0xf]
        %v452 = vld [vmem:[%s327 + $0x140] sm:$0xf]
        %v453 = vld [vmem:[%s327 + $0x144] sm:$0xf]
        %v454 = vld [vmem:[%s327 + $0x148] sm:$0xf]
        %v455 = vld [vmem:[%s327 + $0x14c] sm:$0xf]
        %v456 = vld [vmem:[%s327 + $0x150] sm:$0xf]
        %v457 = vld [vmem:[%s327 + $0x154] sm:$0xf]
        %v458 = vld [vmem:[%s327 + $0x158] sm:$0xf]
        %v459 = vld [vmem:[%s327 + $0x15c] sm:$0xf]
        %v460 = vld [vmem:[%s327 + $0x160] sm:$0xf]
        %v461 = vld [vmem:[%s327 + $0x164] sm:$0xf]
        %v462 = vld [vmem:[%s327 + $0x168] sm:$0xf]
        %v463 = vld [vmem:[%s327 + $0x16c] sm:$0xf]
        %v464 = vld [vmem:[%s327 + $0x170] sm:$0xf]
        %v465 = vld [vmem:[%s327 + $0x174] sm:$0xf]
        %v466 = vld [vmem:[%s327 + $0x178] sm:$0xf]
        %v467 = vld [vmem:[%s327 + $0x17c] sm:$0xf]
        %v468 = vld [vmem:[%s327 + $0x180] sm:$0xf]
        %v469 = vld [vmem:[%s327 + $0x184] sm:$0xf]
        %v470 = vld [vmem:[%s327 + $0x188] sm:$0xf]
        %v471 = vld [vmem:[%s327 + $0x18c] sm:$0xf]
        %v472 = vld [vmem:[%s327 + $0x190] sm:$0xf]
        %v473 = vld [vmem:[%s327 + $0x194] sm:$0xf]
        %v474 = vld [vmem:[%s327 + $0x198] sm:$0xf]
        %v475 = vld [vmem:[%s327 + $0x19c] sm:$0xf]
        %v476 = vld [vmem:[%s327 + $0x1a0] sm:$0xf]
        %v477 = vld [vmem:[%s327 + $0x1a4] sm:$0xf]
        %v478 = vld [vmem:[%s327 + $0x1a8] sm:$0xf]
        %v479 = vld [vmem:[%s327 + $0x1ac] sm:$0xf]
        %v480 = vld [vmem:[%s327 + $0x1b0] sm:$0xf]
        %v481 = vld [vmem:[%s327 + $0x1b4] sm:$0xf]
        %v482 = vld [vmem:[%s327 + $0x1b8] sm:$0xf]
        %v483 = vld [vmem:[%s327 + $0x1bc] sm:$0xf]
        %v484 = vld [vmem:[%s327 + $0x1c0] sm:$0xf]
        %v485 = vld [vmem:[%s327 + $0x1c4] sm:$0xf]
        %v486 = vld [vmem:[%s327 + $0x1c8] sm:$0xf]
        %v487 = vld [vmem:[%s327 + $0x1cc] sm:$0xf]
        %v488 = vld [vmem:[%s327 + $0x1d0] sm:$0xf]
        %v489 = vld [vmem:[%s327 + $0x1d4] sm:$0xf]
        %v490 = vld [vmem:[%s327 + $0x1d8] sm:$0xf]
        %v491 = vld [vmem:[%s327 + $0x1dc] sm:$0xf]
        %v492 = vld [vmem:[%s327 + $0x1e0] sm:$0xf]
        %v493 = vld [vmem:[%s327 + $0x1e4] sm:$0xf]
        %v494 = vld [vmem:[%s327 + $0x1e8] sm:$0xf]
        %v495 = vld [vmem:[%s327 + $0x1ec] sm:$0xf]
        %v496 = vld [vmem:[%s327 + $0x1f0] sm:$0xf]
        %v497 = vld [vmem:[%s327 + $0x1f4] sm:$0xf]
        %v498 = vld [vmem:[%s327 + $0x1f8] sm:$0xf]
        %v499 = vld [vmem:[%s327 + $0x1fc] sm:$0xf]
        %v516 = vunpack.c.l.b16 %v356
        %v517 = vunpack.c.h.b16 %v356
        %v518 = vunpack.c.l.b16 %v357
        %v519 = vunpack.c.h.b16 %v357
        %v520 = vunpack.c.l.b16 %v358
        %v521 = vunpack.c.h.b16 %v358
        %v522 = vunpack.c.l.b16 %v359
        %v523 = vunpack.c.h.b16 %v359
        %v524 = vunpack.c.l.b16 %v360
        %v525 = vunpack.c.h.b16 %v360
        %v526 = vunpack.c.l.b16 %v361
        %v527 = vunpack.c.h.b16 %v361
        %v528 = vunpack.c.l.b16 %v362
        %v529 = vunpack.c.h.b16 %v362
        %v530 = vunpack.c.l.b16 %v363
        %v531 = vunpack.c.h.b16 %v363
        %v532 = vunpack.c.l.b16 %v364
        %v533 = vunpack.c.h.b16 %v364
        %v534 = vunpack.c.l.b16 %v365
        %v535 = vunpack.c.h.b16 %v365
        %v536 = vunpack.c.l.b16 %v366
        %v537 = vunpack.c.h.b16 %v366
        %v538 = vunpack.c.l.b16 %v367
        %v539 = vunpack.c.h.b16 %v367
        %v540 = vunpack.c.l.b16 %v368
        %v541 = vunpack.c.h.b16 %v368
        %v542 = vunpack.c.l.b16 %v369
        %v543 = vunpack.c.h.b16 %v369
        %v544 = vunpack.c.l.b16 %v370
        %v545 = vunpack.c.h.b16 %v370
        %v546 = vunpack.c.l.b16 %v371
        %v547 = vunpack.c.h.b16 %v371
        %v548 = vpack.c.b16 %v524, %v516
        %v549 = vpack.c.b16 %v525, %v517
        %v550 = vpack.c.b16 %v526, %v518
        %v551 = vpack.c.b16 %v527, %v519
        %v552 = vpack.c.b16 %v528, %v520
        %v553 = vpack.c.b16 %v529, %v521
        %v554 = vpack.c.b16 %v530, %v522
        %v555 = vpack.c.b16 %v531, %v523
        %v556 = vpack.c.b16 %v540, %v532
        %v557 = vpack.c.b16 %v541, %v533
        %v558 = vpack.c.b16 %v542, %v534
        %v559 = vpack.c.b16 %v543, %v535
        %v560 = vpack.c.b16 %v544, %v536
        %v561 = vpack.c.b16 %v545, %v537
        %v562 = vpack.c.b16 %v546, %v538
        %v563 = vpack.c.b16 %v547, %v539
        %v708 = vunpack.c.l.b16 %v372
        %v709 = vunpack.c.l.b16 %v373
        %v710 = vunpack.c.l.b16 %v374
        %v711 = vunpack.c.l.b16 %v375
        %v712 = vunpack.c.l.b16 %v376
        %v713 = vunpack.c.l.b16 %v377
        %v714 = vunpack.c.l.b16 %v378
        %v715 = vunpack.c.l.b16 %v379
        %v716 = vunpack.c.l.b16 %v380
        %v717 = vunpack.c.l.b16 %v381
        %v718 = vunpack.c.l.b16 %v382
        %v719 = vunpack.c.l.b16 %v383
        %v720 = vunpack.c.l.b16 %v384
        %v721 = vunpack.c.l.b16 %v385
        %v722 = vunpack.c.l.b16 %v386
        %v723 = vunpack.c.l.b16 %v387
        %v724 = vunpack.c.l.b16 %v388
        %v725 = vunpack.c.l.b16 %v389
        %v726 = vunpack.c.l.b16 %v390
        %v727 = vunpack.c.l.b16 %v391
        %v728 = vunpack.c.l.b16 %v392
        %v729 = vunpack.c.l.b16 %v393
        %v730 = vunpack.c.l.b16 %v394
        %v731 = vunpack.c.l.b16 %v395
        %v732 = vunpack.c.l.b16 %v396
        %v733 = vunpack.c.l.b16 %v397
        %v734 = vunpack.c.l.b16 %v398
        %v735 = vunpack.c.l.b16 %v399
        %v736 = vunpack.c.l.b16 %v400
        %v737 = vunpack.c.l.b16 %v401
        %v738 = vunpack.c.l.b16 %v402
        %v739 = vunpack.c.l.b16 %v403
        %v740 = vunpack.c.l.b16 %v404
        %v741 = vunpack.c.l.b16 %v405
        %v742 = vunpack.c.l.b16 %v406
        %v743 = vunpack.c.l.b16 %v407
        %v744 = vunpack.c.l.b16 %v408
        %v745 = vunpack.c.l.b16 %v409
        %v746 = vunpack.c.l.b16 %v410
        %v747 = vunpack.c.l.b16 %v411
        %v748 = vunpack.c.l.b16 %v412
        %v749 = vunpack.c.l.b16 %v413
        %v750 = vunpack.c.l.b16 %v414
        %v751 = vunpack.c.l.b16 %v415
        %v752 = vunpack.c.l.b16 %v416
        %v753 = vunpack.c.l.b16 %v417
        %v754 = vunpack.c.l.b16 %v418
        %v755 = vunpack.c.l.b16 %v419
        %v756 = vunpack.c.l.b16 %v420
        %v757 = vunpack.c.l.b16 %v421
        %v758 = vunpack.c.l.b16 %v422
        %v759 = vunpack.c.l.b16 %v423
        %v760 = vunpack.c.l.b16 %v424
        %v761 = vunpack.c.l.b16 %v425
        %v762 = vunpack.c.l.b16 %v426
        %v763 = vunpack.c.l.b16 %v427
        %v764 = vunpack.c.l.b16 %v428
        %v765 = vunpack.c.l.b16 %v429
        %v766 = vunpack.c.l.b16 %v430
        %v767 = vunpack.c.l.b16 %v431
        %v768 = vunpack.c.l.b16 %v432
        %v769 = vunpack.c.l.b16 %v433
        %v770 = vunpack.c.l.b16 %v434
        %v771 = vunpack.c.l.b16 %v435
        %v772 = vunpack.c.l.b16 %v436
        %v773 = vunpack.c.l.b16 %v437
        %v774 = vunpack.c.l.b16 %v438
        %v775 = vunpack.c.l.b16 %v439
        %v776 = vunpack.c.l.b16 %v440
        %v777 = vunpack.c.l.b16 %v441
        %v778 = vunpack.c.l.b16 %v442
        %v779 = vunpack.c.l.b16 %v443
        %v780 = vunpack.c.l.b16 %v444
        %v781 = vunpack.c.l.b16 %v445
        %v782 = vunpack.c.l.b16 %v446
        %v783 = vunpack.c.l.b16 %v447
        %v784 = vunpack.c.l.b16 %v448
        %v785 = vunpack.c.l.b16 %v449
        %v786 = vunpack.c.l.b16 %v450
        %v787 = vunpack.c.l.b16 %v451
        %v788 = vunpack.c.l.b16 %v452
        %v789 = vunpack.c.l.b16 %v453
        %v790 = vunpack.c.l.b16 %v454
        %v791 = vunpack.c.l.b16 %v455
        %v792 = vunpack.c.l.b16 %v456
        %v793 = vunpack.c.l.b16 %v457
        %v794 = vunpack.c.l.b16 %v458
        %v795 = vunpack.c.l.b16 %v459
        %v796 = vunpack.c.l.b16 %v460
        %v797 = vunpack.c.l.b16 %v461
        %v798 = vunpack.c.l.b16 %v462
        %v799 = vunpack.c.l.b16 %v463
        %v800 = vunpack.c.l.b16 %v464
        %v801 = vunpack.c.l.b16 %v465
        %v802 = vunpack.c.l.b16 %v466
        %v803 = vunpack.c.l.b16 %v467
        %v804 = vunpack.c.l.b16 %v468
        %v805 = vunpack.c.l.b16 %v469
        %v806 = vunpack.c.l.b16 %v470
        %v807 = vunpack.c.l.b16 %v471
        %v808 = vunpack.c.l.b16 %v472
        %v809 = vunpack.c.l.b16 %v473
        %v810 = vunpack.c.l.b16 %v474
        %v811 = vunpack.c.l.b16 %v475
        %v812 = vunpack.c.l.b16 %v476
        %v813 = vunpack.c.l.b16 %v477
        %v814 = vunpack.c.l.b16 %v478
        %v815 = vunpack.c.l.b16 %v479
        %v816 = vunpack.c.l.b16 %v480
        %v817 = vunpack.c.l.b16 %v481
        %v818 = vunpack.c.l.b16 %v482
        %v819 = vunpack.c.l.b16 %v483
        %v820 = vunpack.c.l.b16 %v484
        %v821 = vunpack.c.l.b16 %v485
        %v822 = vunpack.c.l.b16 %v486
        %v823 = vunpack.c.l.b16 %v487
        %v824 = vunpack.c.l.b16 %v488
        %v825 = vunpack.c.l.b16 %v489
        %v826 = vunpack.c.l.b16 %v490
        %v827 = vunpack.c.l.b16 %v491
        %v828 = vunpack.c.l.b16 %v492
        %v829 = vunpack.c.l.b16 %v493
        %v830 = vunpack.c.l.b16 %v494
        %v831 = vunpack.c.l.b16 %v495
        %v832 = vunpack.c.l.b16 %v496
        %v833 = vunpack.c.l.b16 %v497
        %v834 = vunpack.c.l.b16 %v498
        %v835 = vunpack.c.l.b16 %v499
        %v836 = vpack.c.b16 %v709, %v708
        %v837 = vpack.c.b16 %v711, %v710
        %v838 = vpack.c.b16 %v713, %v712
        %v839 = vpack.c.b16 %v715, %v714
        %v840 = vpack.c.b16 %v717, %v716
        %v841 = vpack.c.b16 %v719, %v718
        %v842 = vpack.c.b16 %v721, %v720
        %v843 = vpack.c.b16 %v723, %v722
        %v844 = vpack.c.b16 %v725, %v724
        %v845 = vpack.c.b16 %v727, %v726
        %v846 = vpack.c.b16 %v729, %v728
        %v847 = vpack.c.b16 %v731, %v730
        %v848 = vpack.c.b16 %v733, %v732
        %v849 = vpack.c.b16 %v735, %v734
        %v850 = vpack.c.b16 %v737, %v736
        %v851 = vpack.c.b16 %v739, %v738
        %v852 = vpack.c.b16 %v741, %v740
        %v853 = vpack.c.b16 %v743, %v742
        %v854 = vpack.c.b16 %v745, %v744
        %v855 = vpack.c.b16 %v747, %v746
        %v856 = vpack.c.b16 %v749, %v748
        %v857 = vpack.c.b16 %v751, %v750
        %v858 = vpack.c.b16 %v753, %v752
        %v859 = vpack.c.b16 %v755, %v754
        %v860 = vpack.c.b16 %v757, %v756
        %v861 = vpack.c.b16 %v759, %v758
        %v862 = vpack.c.b16 %v761, %v760
        %v863 = vpack.c.b16 %v763, %v762
        %v864 = vpack.c.b16 %v765, %v764
        %v865 = vpack.c.b16 %v767, %v766
        %v866 = vpack.c.b16 %v769, %v768
        %v867 = vpack.c.b16 %v771, %v770
        %v868 = vpack.c.b16 %v773, %v772
        %v869 = vpack.c.b16 %v775, %v774
        %v870 = vpack.c.b16 %v777, %v776
        %v871 = vpack.c.b16 %v779, %v778
        %v872 = vpack.c.b16 %v781, %v780
        %v873 = vpack.c.b16 %v783, %v782
        %v874 = vpack.c.b16 %v785, %v784
        %v875 = vpack.c.b16 %v787, %v786
        %v876 = vpack.c.b16 %v789, %v788
        %v877 = vpack.c.b16 %v791, %v790
        %v878 = vpack.c.b16 %v793, %v792
        %v879 = vpack.c.b16 %v795, %v794
        %v880 = vpack.c.b16 %v797, %v796
        %v881 = vpack.c.b16 %v799, %v798
        %v882 = vpack.c.b16 %v801, %v800
        %v883 = vpack.c.b16 %v803, %v802
        %v884 = vpack.c.b16 %v805, %v804
        %v885 = vpack.c.b16 %v807, %v806
        %v886 = vpack.c.b16 %v809, %v808
        %v887 = vpack.c.b16 %v811, %v810
        %v888 = vpack.c.b16 %v813, %v812
        %v889 = vpack.c.b16 %v815, %v814
        %v890 = vpack.c.b16 %v817, %v816
        %v891 = vpack.c.b16 %v819, %v818
        %v892 = vpack.c.b16 %v821, %v820
        %v893 = vpack.c.b16 %v823, %v822
        %v894 = vpack.c.b16 %v825, %v824
        %v895 = vpack.c.b16 %v827, %v826
        %v896 = vpack.c.b16 %v829, %v828
        %v897 = vpack.c.b16 %v831, %v830
        %v898 = vpack.c.b16 %v833, %v832
        %v899 = vpack.c.b16 %v835, %v834
        %964 = vmatpush.bf16.msra.mxu0 %v843
        %965 = vmatpush.bf16.msra.mxu0 %v842
        %966 = vmatpush.bf16.msra.mxu0 %v841
        %967 = vmatpush.bf16.msra.mxu0 %v840
        %968 = vmatpush.bf16.msra.mxu0 %v839
        %969 = vmatpush.bf16.msra.mxu0 %v838
        %970 = vmatpush.bf16.msra.mxu0 %v837
        %971 = vmatpush.bf16.msra.mxu0 %v836
        %972 = vmatmul.bf16.gmra.mxu0 %v548
        %v973 = vpop.f32.mrf.mxu0
        %v974 = vadd.f32 0.0, %v973
        %v975 = vpop.f32.mrf.mxu0
        %v976 = vadd.f32 0.0, %v975
        %977 = vmatmul.bf16.gmra.mxu0 %v556
        %v978 = vpop.f32.mrf.mxu0
        %v979 = vadd.f32 0.0, %v978
        %v980 = vpop.f32.mrf.mxu0
        %v981 = vadd.f32 0.0, %v980
        %982 = vdwg.mxu0
        %983 = vmatpush.bf16.msra.mxu0 %v851
        %984 = vmatpush.bf16.msra.mxu0 %v850
        %985 = vmatpush.bf16.msra.mxu0 %v849
        %986 = vmatpush.bf16.msra.mxu0 %v848
        %987 = vmatpush.bf16.msra.mxu0 %v847
        %988 = vmatpush.bf16.msra.mxu0 %v846
        %989 = vmatpush.bf16.msra.mxu0 %v845
        %990 = vmatpush.bf16.msra.mxu0 %v844
        %991 = vmatmul.bf16.gmra.mxu0 %v549
        %v992 = vpop.f32.mrf.mxu0
        %v993 = vadd.f32 %v974, %v992
        %v994 = vpop.f32.mrf.mxu0
        %v995 = vadd.f32 %v976, %v994
        %996 = vmatmul.bf16.gmra.mxu0 %v557
        %v997 = vpop.f32.mrf.mxu0
        %v998 = vadd.f32 %v979, %v997
        %v999 = vpop.f32.mrf.mxu0
        %v1000 = vadd.f32 %v981, %v999
        %1001 = vdwg.mxu0
        %1002 = vmatpush.bf16.msra.mxu0 %v859
        %1003 = vmatpush.bf16.msra.mxu0 %v858
        %1004 = vmatpush.bf16.msra.mxu0 %v857
        %1005 = vmatpush.bf16.msra.mxu0 %v856
        %1006 = vmatpush.bf16.msra.mxu0 %v855
        %1007 = vmatpush.bf16.msra.mxu0 %v854
        %1008 = vmatpush.bf16.msra.mxu0 %v853
        %1009 = vmatpush.bf16.msra.mxu0 %v852
        %1010 = vmatmul.bf16.gmra.mxu0 %v550
        %v1011 = vpop.f32.mrf.mxu0
        %v1012 = vadd.f32 %v993, %v1011
        %v1013 = vpop.f32.mrf.mxu0
        %v1014 = vadd.f32 %v995, %v1013
        %1015 = vmatmul.bf16.gmra.mxu0 %v558
        %v1016 = vpop.f32.mrf.mxu0
        %v1017 = vadd.f32 %v998, %v1016
        %v1018 = vpop.f32.mrf.mxu0
        %v1019 = vadd.f32 %v1000, %v1018
        %1020 = vdwg.mxu0
        %1021 = vmatpush.bf16.msra.mxu0 %v867
        %1022 = vmatpush.bf16.msra.mxu0 %v866
        %1023 = vmatpush.bf16.msra.mxu0 %v865
        %1024 = vmatpush.bf16.msra.mxu0 %v864
        %1025 = vmatpush.bf16.msra.mxu0 %v863
        %1026 = vmatpush.bf16.msra.mxu0 %v862
        %1027 = vmatpush.bf16.msra.mxu0 %v861
        %1028 = vmatpush.bf16.msra.mxu0 %v860
        %1029 = vmatmul.bf16.gmra.mxu0 %v551
        %v1030 = vpop.f32.mrf.mxu0
        %v1031 = vadd.f32 %v1012, %v1030
        %v1032 = vpop.f32.mrf.mxu0
        %v1033 = vadd.f32 %v1014, %v1032
        %1034 = vmatmul.bf16.gmra.mxu0 %v559
        %v1035 = vpop.f32.mrf.mxu0
        %v1036 = vadd.f32 %v1017, %v1035
        %v1037 = vpop.f32.mrf.mxu0
        %v1038 = vadd.f32 %v1019, %v1037
        %1039 = vdwg.mxu0
        %1040 = vmatpush.bf16.msra.mxu0 %v875
        %1041 = vmatpush.bf16.msra.mxu0 %v874
        %1042 = vmatpush.bf16.msra.mxu0 %v873
        %1043 = vmatpush.bf16.msra.mxu0 %v872
        %1044 = vmatpush.bf16.msra.mxu0 %v871
        %1045 = vmatpush.bf16.msra.mxu0 %v870
        %1046 = vmatpush.bf16.msra.mxu0 %v869
        %1047 = vmatpush.bf16.msra.mxu0 %v868
        %1048 = vmatmul.bf16.gmra.mxu0 %v552
        %v1049 = vpop.f32.mrf.mxu0
        %v1050 = vadd.f32 %v1031, %v1049
        %v1051 = vpop.f32.mrf.mxu0
        %v1052 = vadd.f32 %v1033, %v1051
        %1053 = vmatmul.bf16.gmra.mxu0 %v560
        %v1054 = vpop.f32.mrf.mxu0
        %v1055 = vadd.f32 %v1036, %v1054
        %v1056 = vpop.f32.mrf.mxu0
        %v1057 = vadd.f32 %v1038, %v1056
        %1058 = vdwg.mxu0
        %1059 = vmatpush.bf16.msra.mxu0 %v883
        %1060 = vmatpush.bf16.msra.mxu0 %v882
        %1061 = vmatpush.bf16.msra.mxu0 %v881
        %1062 = vmatpush.bf16.msra.mxu0 %v880
        %1063 = vmatpush.bf16.msra.mxu0 %v879
        %1064 = vmatpush.bf16.msra.mxu0 %v878
        %1065 = vmatpush.bf16.msra.mxu0 %v877
        %1066 = vmatpush.bf16.msra.mxu0 %v876
        %1067 = vmatmul.bf16.gmra.mxu0 %v553
        %v1068 = vpop.f32.mrf.mxu0
        %v1069 = vadd.f32 %v1050, %v1068
        %v1070 = vpop.f32.mrf.mxu0
        %v1071 = vadd.f32 %v1052, %v1070
        %1072 = vmatmul.bf16.gmra.mxu0 %v561
        %v1073 = vpop.f32.mrf.mxu0
        %v1074 = vadd.f32 %v1055, %v1073
        %v1075 = vpop.f32.mrf.mxu0
        %v1076 = vadd.f32 %v1057, %v1075
        %1077 = vdwg.mxu0
        %1078 = vmatpush.bf16.msra.mxu0 %v891
        %1079 = vmatpush.bf16.msra.mxu0 %v890
        %1080 = vmatpush.bf16.msra.mxu0 %v889
        %1081 = vmatpush.bf16.msra.mxu0 %v888
        %1082 = vmatpush.bf16.msra.mxu0 %v887
        %1083 = vmatpush.bf16.msra.mxu0 %v886
        %1084 = vmatpush.bf16.msra.mxu0 %v885
        %1085 = vmatpush.bf16.msra.mxu0 %v884
        %1086 = vmatmul.bf16.gmra.mxu0 %v554
        %v1087 = vpop.f32.mrf.mxu0
        %v1088 = vadd.f32 %v1069, %v1087
        %v1089 = vpop.f32.mrf.mxu0
        %v1090 = vadd.f32 %v1071, %v1089
        %1091 = vmatmul.bf16.gmra.mxu0 %v562
        %v1092 = vpop.f32.mrf.mxu0
        %v1093 = vadd.f32 %v1074, %v1092
        %v1094 = vpop.f32.mrf.mxu0
        %v1095 = vadd.f32 %v1076, %v1094
        %1096 = vdwg.mxu0
        %1097 = vmatpush.bf16.msra.mxu0 %v899
        %1098 = vmatpush.bf16.msra.mxu0 %v898
        %1099 = vmatpush.bf16.msra.mxu0 %v897
        %1100 = vmatpush.bf16.msra.mxu0 %v896
        %1101 = vmatpush.bf16.msra.mxu0 %v895
        %1102 = vmatpush.bf16.msra.mxu0 %v894
        %1103 = vmatpush.bf16.msra.mxu0 %v893
        %1104 = vmatpush.bf16.msra.mxu0 %v892
        %1105 = vmatmul.bf16.gmra.mxu0 %v555
        %v1106 = vpop.f32.mrf.mxu0
        %v1107 = vadd.f32 %v1088, %v1106
        %v1108 = vpop.f32.mrf.mxu0
        %v1109 = vadd.f32 %v1090, %v1108
        %1110 = vmatmul.bf16.gmra.mxu0 %v563
        %v1111 = vpop.f32.mrf.mxu0
        %v1112 = vadd.f32 %v1093, %v1111
        %v1113 = vpop.f32.mrf.mxu0
        %v1114 = vadd.f32 %v1095, %v1113
        %1115 = vdwg.mxu0
        %v1116 = vadd.f32 %v352, %v1107
        %v1117 = vadd.f32 %v353, %v1109
        %v1118 = vadd.f32 %v354, %v1112
        %v1119 = vadd.f32 %v355, %v1114
        %1120 = vst [vmem:[#allocation2] sm:$0xff] %v1116
        %1121 = vst [vmem:[#allocation2 + $0x8] sm:$0xff] %v1117
        %1122 = vst [vmem:[#allocation2 + $0x10] sm:$0xff] %v1118
        %1123 = vst [vmem:[#allocation2 + $0x18] sm:$0xff] %v1119
        %p1124 = scmp.eq.s32.totalorder %s22, 1
        // Predicated region
        $region64: #{cpnet_forward.27} parent=54 // pred_check
          %p1125 = pneg %p1124
        $region65: #{cpnet_forward.27} parent=54 // pred_check_branch
          %1127 = sbr.rel (%p1125) target = $region67
        $region66: #{cpnet_forward.27} parent=54 // pred_region
          %v1128 = vld [vmem:[#allocation2] sm:$0xff]
          %v1129 = vld [vmem:[#allocation2 + $0x8] sm:$0xff]
          %v1130 = vld [vmem:[#allocation2 + $0x10] sm:$0xff]
          %v1131 = vld [vmem:[#allocation2 + $0x18] sm:$0xff]
          %v1132 = vld [vmem:[%s331] sm:$0x1]
          %v1134 = vperm.slane %v1132, 0
          %v1136 = vmul.f32 %v1128, %v1134
          %v1137 = vmul.f32 %v1129, %v1134
          %v1138 = vmul.f32 %v1130, %v1134
          %v1139 = vmul.f32 %v1131, %v1134
          %v1140 = vld [vmem:[%s334] sm:$0x1]
          %v1142 = vperm.slane %v1140, 0
          %v1144 = vadd.f32 %v1136, %v1142
          %v1145 = vadd.f32 %v1137, %v1142
          %v1146 = vadd.f32 %v1138, %v1142
          %v1147 = vadd.f32 %v1139, %v1142
          %v1148 = vmax.f32 %v1144, 0.0
          %v1149 = vmax.f32 %v1145, 0.0
          %v1150 = vmax.f32 %v1146, 0.0
          %v1151 = vmax.f32 %v1147, 0.0
          %v1152 = vpack.c.bf16 %v1148, %v1148
          %v1153 = vpack.c.bf16 %v1149, %v1149
          %v1154 = vpack.c.bf16 %v1150, %v1150
          %v1155 = vpack.c.bf16 %v1151, %v1151
          %1156 = vst [vmem:[%s342] sm:$0xf] %v1152
          %1157 = vst [vmem:[%s342 + $0x4] sm:$0xf] %v1153
          %1158 = vst [vmem:[%s342 + $0x8] sm:$0xf] %v1154
          %1159 = vst [vmem:[%s342 + $0xc] sm:$0xf] %v1155
        $region67: #{cpnet_forward.27} parent=54 // pred_fallthru
          _
        %s1160 = smul.u32 4, %s20
        %p1161 = scmp.lt.s32.totalorder %s1160, 3
        %s1162 = scalar_select %p1161, %s1160, 3
        %p1163 = scmp.lt.s32.totalorder %s21, 0
        %s1164 = scalar_select %p1163, %s21, 0
        %s1165 = sadd.s32 %s1164, %s1162
        %s1166 = smul.addr %s1165, 4
        %s1167 = scalar_lea.vmem %s4, %s1166
        // Predicated region
        $region68: #{cpnet_forward.27} parent=54 // pred_check
          %p1168 = pneg %p162
        $region69: #{cpnet_forward.27} parent=54 // pred_check_branch
          %1170 = sbr.rel (%p1168) target = $region71
        $region70: #{cpnet_forward.27} parent=54 // pred_region
          %s1171 = smul.u32 4, %s20
        $region71: #{cpnet_forward.27} parent=54 // pred_fallthru
          _
        // Predicated region
        $region72: #{cpnet_forward.27} parent=54 // pred_check
          %p1172 = pneg %p162
        $region73: #{cpnet_forward.27} parent=54 // pred_check_branch
          %1174 = sbr.rel (%p1172) target = $region75
        $region74: #{cpnet_forward.27} parent=54 // pred_region
          %s1175 = smul.u32 4, %s20
          %p1176 = scmp.lt.s32.totalorder %s1175, 3
          %s1177 = scalar_select %p1176, %s1175, 3
          %p1178 = scmp.lt.s32.totalorder %s21, 0
          %s1179 = scalar_select %p1178, %s21, 0
          %s1180 = sadd.s32 %s1179, %s1177
          %s1181 = smul.addr %s1180, 4
          %s1182 = scalar_lea.vmem %s4, %s1181
        $region75: #{cpnet_forward.27} parent=54 // pred_fallthru
          _
      $region55: #{cpnet_forward.27} parent=5 // pred_fallthru
        _
      %p1183 = scmp.le.s32.totalorder 2, %s10
      // Predicated region
      $region76: #{cpnet_forward.27} parent=5 // pred_check
        %p1184 = pneg %p1183
      $region77: #{cpnet_forward.27} parent=5 // pred_check_branch
        %1186 = sbr.rel (%p1184) target = $region79
      $region78: #{cpnet_forward.27} parent=5 // pred_region
        %s1187 = ssub.s32 %s10, 2
      $region79: #{cpnet_forward.27} parent=5 // pred_fallthru
        _
    $region6: #{cpnet_forward.27} parent=1 // loop_footer
      %s14 = sadd.s32 1, %s10
    $region7: #{cpnet_forward.27} parent=1 // loop_footer_branch
      %9 = sbr.rel target = $region3
    $region8: #{cpnet_forward.27} parent=1 // loop_exit
      _

// kernel: cpnet_forward.29
$region0: #{cpnet_forward.29}
  #allocation0 [shape = 'u32[]', space=smem, size = 0x4, offset = 0x4, fixed_abs, tag = 'smem constant byte address 0x4 - core index']
  #allocation1 [shape = 'u32[72,128]{1,0:T(1,128)}', space=vmem, size = 0x9000, scoped, tag = 'internal scratch']
  %s0 = inlined_call_operand.vmem [shape: f32[2,8,32,32], index: 0, kind: input, shape index: {}]
  %s1 = inlined_call_operand.hbm [shape: f32[2,8,32,32], index: 1, kind: output, shape index: {}]
  %s2 = sld [smem:[#allocation0]]
  $region37: #{cpnet_forward.29} parent=0
    _
  %s4 = ssub.s32 1, %s2
  %s5 = scalar_select 0, %s4, %s2
  $region1: #{cpnet_forward.29} parent=0
    #allocation2 [shape = 'u8[262144]{0}', space=vmem, size = 0x40000, scoped, tag = 'output window, operand 0']
    #allocation3 [shape = 's32[2]{0}', space=sflag, size = 0x8, scoped, tag = 'scoped memory for cpnet_forward.29']
    %6 = vsyncpa [#allocation3], 0
    %s7 = scalar_lea.sflag [#allocation3], 1
    %8 = vsyncpa %s7, 0
    loop: start=0, step=1, limit=4
    $region2: #{cpnet_forward.29} parent=1 // loop_pre_header
      _
    $region3: #{cpnet_forward.29} parent=1 // loop_header
      %s10 = sphi 0, %s14
      %p11 = scmp.ge.s32.totalorder %s10, 4
      %s17 = sphi 0, %s29
      %s18 = sphi 0, %s25
      %s19 = sphi 0, %s17
      %s20 = sphi 0, %s18
      %s21 = sphi 0, %s19
      %s22 = sphi 0, %s20
      %s34 = sphi 0, %s36
      %s37 = sphi 0, %s34
      %s38 = sphi 0, %s37
      %s54 = sphi 0, %s38
      %s62 = sphi 0, %s64
      %s65 = sphi 0, %s62
      %s66 = sphi 0, %s65
      %s82 = sphi 0, %s66
    $region4: #{cpnet_forward.29} parent=1 // loop_header_branch
      %13 = sbr.rel (%p11) target = $region8
    $region5: #{cpnet_forward.29} parent=1 // loop_body
      %s15 = ssub.s32 %s10, 1
      %s16 = ssub.s32 %s10, 2
      %s23 = sadd.s32 1, %s18
      %p24 = scmp.ge.s32.totalorder %s23, 1
      %s25 = scalar_select %p24, 0, %s23
      %s26 = sadd.s32 1, %s17
      %s27 = scalar_select %p24, %s26, %s17
      %p28 = scmp.ge.s32.totalorder %s27, 2
      %s29 = scalar_select %p28, 0, %s27
      %s30 = ssub.s32 %s17, %s29
      %s31 = ssub.s32 %s18, %s25
      %s32 = sor.u32 %s30, %s31
      %p33 = scmp.eq.s32.totalorder %s32, 0
      %s35 = sadd.s32 %s34, 1
      %s36 = scalar_select %p33, %s34, %s35
      %p39 = pneg %p33
      %p40 = scmp.eq.s32.totalorder %s10, 1
      %p41 = por %p39, %p40
      %p42 = scmp.ne.s32.totalorder %s34, %s37
      %p43 = scmp.eq.s32.totalorder %s10, 0
      %p44 = por %p42, %p43
      %p45 = scmp.ne.s32.totalorder %s34, %s37
      %p46 = scmp.eq.s32.totalorder %s15, 1
      %p47 = por %p45, %p46
      %p48 = scmp.ne.s32.totalorder %s37, %s38
      %p49 = scmp.eq.s32.totalorder %s15, 0
      %p50 = por %p48, %p49
      %p51 = scmp.ne.s32.totalorder %s37, %s38
      %p52 = scmp.eq.s32.totalorder %s16, 1
      %p53 = por %p51, %p52
      %p55 = scmp.ne.s32.totalorder %s38, %s54
      %p56 = scmp.eq.s32.totalorder %s16, 0
      %p57 = por %p55, %p56
      %s58 = ssub.s32 %s17, %s29
      %s59 = ssub.s32 %s18, %s25
      %s60 = sor.u32 %s58, %s59
      %p61 = scmp.eq.s32.totalorder %s60, 0
      %s63 = sadd.s32 %s62, 1
      %s64 = scalar_select %p61, %s62, %s63
      %p67 = pneg %p61
      %p68 = scmp.eq.s32.totalorder %s10, 1
      %p69 = por %p67, %p68
      %p70 = scmp.ne.s32.totalorder %s62, %s65
      %p71 = scmp.eq.s32.totalorder %s10, 0
      %p72 = por %p70, %p71
      %p73 = scmp.ne.s32.totalorder %s62, %s65
      %p74 = scmp.eq.s32.totalorder %s15, 1
      %p75 = por %p73, %p74
      %p76 = scmp.ne.s32.totalorder %s65, %s66
      %p77 = scmp.eq.s32.totalorder %s15, 0
      %p78 = por %p76, %p77
      %p79 = scmp.ne.s32.totalorder %s65, %s66
      %p80 = scmp.eq.s32.totalorder %s16, 1
      %p81 = por %p79, %p80
      %p83 = scmp.ne.s32.totalorder %s66, %s82
      %p84 = scmp.eq.s32.totalorder %s16, 0
      %p85 = por %p83, %p84
      %p86 = scmp.le.s32.totalorder 1, %s10
      %p87 = scmp.lt.s32.totalorder %s10, 3
      %p88 = pnand %p86, %p87
      %p89 = pneg %p88
      // Predicated region
      $region9: #{cpnet_forward.29} parent=5 // pred_check
        _
      $region10: #{cpnet_forward.29} parent=5 // pred_check_branch
        %91 = sbr.rel (%p88) target = $region12
      $region11: #{cpnet_forward.29} parent=5 // pred_region
        %s92 = ssub.s32 %s10, 1
      $region12: #{cpnet_forward.29} parent=5 // pred_fallthru
        _
      %p93 = scmp.lt.s32.totalorder %s10, 2
      // Predicated region
      $region13: #{cpnet_forward.29} parent=5 // pred_check
        %p94 = pneg %p93
      $region14: #{cpnet_forward.29} parent=5 // pred_check_branch
        %96 = sbr.rel (%p94) target = $region16
      $region15: #{cpnet_forward.29} parent=5 // pred_region
        // Predicated region
        $region17: #{cpnet_forward.29} parent=15 // pred_check
          %p97 = pneg %p44
        $region18: #{cpnet_forward.29} parent=15 // pred_check_branch
          %99 = sbr.rel (%p97) target = $region20
        $region19: #{cpnet_forward.29} parent=15 // pred_region
          %s100 = smul.u32 4, %s18
          %p101 = scmp.lt.s32.totalorder %s17, 1
          %s102 = scalar_select %p101, %s17, 1
          %p103 = scmp.lt.s32.totalorder %s100, 3
          %s104 = scalar_select %p103, %s100, 3
          %s105 = smul.addr %s102, 32
          %s106 = sadd.s32 %s104, %s105
          %s107 = smul.addr %s106, 8
          %s108 = scalar_lea.vmem %s0, %s107
          %s109 = smul.u32 4, %s18
        $region20: #{cpnet_forward.29} parent=15 // pred_fallthru
          _
      $region16: #{cpnet_forward.29} parent=5 // pred_fallthru
        _
      %p110 = scmp.le.s32.totalorder 1, %s10
      %p111 = scmp.lt.s32.totalorder %s10, 3
      %p112 = pnand %p110, %p111
      %p113 = pneg %p112
      // Predicated region
      $region21: #{cpnet_forward.29} parent=5 // pred_check
        _
      $region22: #{cpnet_forward.29} parent=5 // pred_check_branch
        %115 = sbr.rel (%p112) target = $region24
      $region23: #{cpnet_forward.29} parent=5 // pred_region
        %s116 = ssub.s32 %s10, 1
        %s117 = smul.u32 4, %s20
        %p118 = scmp.lt.s32.totalorder %s19, 1
        %s119 = scalar_select %p118, %s19, 1
        %p120 = scmp.lt.s32.totalorder %s117, 3
        %s121 = scalar_select %p120, %s117, 3
        %s122 = smul.addr %s119, 32
        %s123 = sadd.s32 %s121, %s122
        %s124 = smul.addr %s123, 8
        %s125 = scalar_lea.vmem %s0, %s124
        %p126 = pneg %p50
        %p127 = pneg %p47
        %p128 = pneg %p78
        %p129 = pneg %p75
        %s130 = sand.u32 %s65, 1
        %s131 = scalar_lea.sflag [#allocation3], %s130
        %s132 = sand.u32 %s65, 1
        %s133 = smul.addr %s132, 256
        %s134 = scalar_lea.vmem [#allocation2], %s133
        %s135 = smul.u32 4, %s20
        %p136 = scmp.lt.s32.totalorder %s19, 1
        %s137 = scalar_select %p136, %s19, 1
        %p138 = scmp.lt.s32.totalorder %s135, 3
        %s139 = scalar_select %p138, %s135, 3
        %s140 = smul.addr %s137, 32
        %s141 = sadd.s32 %s139, %s140
        %s142 = smul.addr %s141, 8
        %s143 = scalar_lea.vmem %s0, %s142
        %s144 = smul.u32 4, %s20
        %s145 = smul.u32 4, %s20
        %v146 = vld [vmem:[%s143] sm:$0xff]
        %v147 = vld [vmem:[%s143 + $0x8] sm:$0xff]
        %v148 = vld [vmem:[%s143 + $0x10] sm:$0xff]
        %v149 = vld [vmem:[%s143 + $0x18] sm:$0xff]
        %v150 = vld [vmem:[%s143 + $0x20] sm:$0xff]
        %v151 = vld [vmem:[%s143 + $0x28] sm:$0xff]
        %v152 = vld [vmem:[%s143 + $0x30] sm:$0xff]
        %v153 = vld [vmem:[%s143 + $0x38] sm:$0xff]
        %v154 = vld [vmem:[%s143 + $0x40] sm:$0xff]
        %v155 = vld [vmem:[%s143 + $0x48] sm:$0xff]
        %v156 = vld [vmem:[%s143 + $0x50] sm:$0xff]
        %v157 = vld [vmem:[%s143 + $0x58] sm:$0xff]
        %v158 = vld [vmem:[%s143 + $0x60] sm:$0xff]
        %v159 = vld [vmem:[%s143 + $0x68] sm:$0xff]
        %v160 = vld [vmem:[%s143 + $0x70] sm:$0xff]
        %v161 = vld [vmem:[%s143 + $0x78] sm:$0xff]
        %v162 = vld [vmem:[%s143 + $0x80] sm:$0xff]
        %v163 = vld [vmem:[%s143 + $0x88] sm:$0xff]
        %v164 = vld [vmem:[%s143 + $0x90] sm:$0xff]
        %v165 = vld [vmem:[%s143 + $0x98] sm:$0xff]
        %v166 = vld [vmem:[%s143 + $0xa0] sm:$0xff]
        %v167 = vld [vmem:[%s143 + $0xa8] sm:$0xff]
        %v168 = vld [vmem:[%s143 + $0xb0] sm:$0xff]
        %v169 = vld [vmem:[%s143 + $0xb8] sm:$0xff]
        %v170 = vld [vmem:[%s143 + $0xc0] sm:$0xff]
        %v171 = vld [vmem:[%s143 + $0xc8] sm:$0xff]
        %v172 = vld [vmem:[%s143 + $0xd0] sm:$0xff]
        %v173 = vld [vmem:[%s143 + $0xd8] sm:$0xff]
        %v174 = vld [vmem:[%s143 + $0xe0] sm:$0xff]
        %v175 = vld [vmem:[%s143 + $0xe8] sm:$0xff]
        %v176 = vld [vmem:[%s143 + $0xf0] sm:$0xff]
        %v177 = vld [vmem:[%s143 + $0xf8] sm:$0xff]
        %vm178 = vcmask 261120
        %v179 = vsel %vm178, %v146, -inf
        %v180 = vsel %vm178, %v150, -inf
        %v181 = vmax.f32 %v179, %v180
        %v182 = vsel %vm178, %v154, -inf
        %v183 = vmax.f32 %v181, %v182
        %v184 = vsel %vm178, %v158, -inf
        %v185 = vmax.f32 %v183, %v184
        %v186 = vsel %vm178, %v162, -inf
        %v187 = vmax.f32 %v185, %v186
        %v188 = vsel %vm178, %v166, -inf
        %v189 = vmax.f32 %v187, %v188
        %v190 = vsel %vm178, %v170, -inf
        %v191 = vmax.f32 %v189, %v190
        %v192 = vsel %vm178, %v174, -inf
        %v193 = vmax.f32 %v191, %v192
        %v194 = vsel %vm178, %v147, -inf
        %v195 = vsel %vm178, %v151, -inf
        %v196 = vmax.f32 %v194, %v195
        %v197 = vsel %vm178, %v155, -inf
        %v198 = vmax.f32 %v196, %v197
        %v199 = vsel %vm178, %v159, -inf
        %v200 = vmax.f32 %v198, %v199
        %v201 = vsel %vm178, %v163, -inf
        %v202 = vmax.f32 %v200, %v201
        %v203 = vsel %vm178, %v167, -inf
        %v204 = vmax.f32 %v202, %v203
        %v205 = vsel %vm178, %v171, -inf
        %v206 = vmax.f32 %v204, %v205
        %v207 = vsel %vm178, %v175, -inf
        %v208 = vmax.f32 %v206, %v207
        %v209 = vsel %vm178, %v148, -inf
        %v210 = vsel %vm178, %v152, -inf
        %v211 = vmax.f32 %v209, %v210
        %v212 = vsel %vm178, %v156, -inf
        %v213 = vmax.f32 %v211, %v212
        %v214 = vsel %vm178, %v160, -inf
        %v215 = vmax.f32 %v213, %v214
        %v216 = vsel %vm178, %v164, -inf
        %v217 = vmax.f32 %v215, %v216
        %v218 = vsel %vm178, %v168, -inf
        %v219 = vmax.f32 %v217, %v218
        %v220 = vsel %vm178, %v172, -inf
        %v221 = vmax.f32 %v219, %v220
        %v222 = vsel %vm178, %v176, -inf
        %v223 = vmax.f32 %v221, %v222
        %v224 = vsel %vm178, %v149, -inf
        %v225 = vsel %vm178, %v153, -inf
        %v226 = vmax.f32 %v224, %v225
        %v227 = vsel %vm178, %v157, -inf
        %v228 = vmax.f32 %v226, %v227
        %v229 = vsel %vm178, %v161, -inf
        %v230 = vmax.f32 %v228, %v229
        %v231 = vsel %vm178, %v165, -inf
        %v232 = vmax.f32 %v230, %v231
        %v233 = vsel %vm178, %v169, -inf
        %v234 = vmax.f32 %v232, %v233
        %v235 = vsel %vm178, %v173, -inf
        %v236 = vmax.f32 %v234, %v235
        %v237 = vsel %vm178, %v177, -inf
        %v238 = vmax.f32 %v236, %v237
        %v239 = vsub.f32 %v146, %v193
        %v240 = vsub.f32 %v147, %v208
        %v241 = vsub.f32 %v148, %v223
        %v242 = vsub.f32 %v149, %v238
        %v243 = vsub.f32 %v150, %v193
        %v244 = vsub.f32 %v151, %v208
        %v245 = vsub.f32 %v152, %v223
        %v246 = vsub.f32 %v153, %v238
        %v247 = vsub.f32 %v154, %v193
        %v248 = vsub.f32 %v155, %v208
        %v249 = vsub.f32 %v156, %v223
        %v250 = vsub.f32 %v157, %v238
        %v251 = vsub.f32 %v158, %v193
        %v252 = vsub.f32 %v159, %v208
        %v253 = vsub.f32 %v160, %v223
        %v254 = vsub.f32 %v161, %v238
        %v255 = vsub.f32 %v162, %v193
        %v256 = vsub.f32 %v163, %v208
        %v257 = vsub.f32 %v164, %v223
        %v258 = vsub.f32 %v165, %v238
        %v259 = vsub.f32 %v166, %v193
        %v260 = vsub.f32 %v167, %v208
        %v261 = vsub.f32 %v168, %v223
        %v262 = vsub.f32 %v169, %v238
        %v263 = vsub.f32 %v170, %v193
        %v264 = vsub.f32 %v171, %v208
        %v265 = vsub.f32 %v172, %v223
        %v266 = vsub.f32 %v173, %v238
        %v267 = vsub.f32 %v174, %v193
        %v268 = vsub.f32 %v175, %v208
        %v269 = vsub.f32 %v176, %v223
        %v270 = vsub.f32 %v177, %v238
        %v271 = vmul.f32 %v239, 1.442695
        %v272 = vpow.pop %v271
        %v273 = vmul.f32 %v240, 1.442695
        %v274 = vpow.pop %v273
        %v275 = vmul.f32 %v241, 1.442695
        %v276 = vpow.pop %v275
        %v277 = vmul.f32 %v242, 1.442695
        %v278 = vpow.pop %v277
        %v279 = vmul.f32 %v243, 1.442695
        %v280 = vpow.pop %v279
        %v281 = vmul.f32 %v244, 1.442695
        %v282 = vpow.pop %v281
        %v283 = vmul.f32 %v245, 1.442695
        %v284 = vpow.pop %v283
        %v285 = vmul.f32 %v246, 1.442695
        %v286 = vpow.pop %v285
        %v287 = vmul.f32 %v247, 1.442695
        %v288 = vpow.pop %v287
        %v289 = vmul.f32 %v248, 1.442695
        %v290 = vpow.pop %v289
        %v291 = vmul.f32 %v249, 1.442695
        %v292 = vpow.pop %v291
        %v293 = vmul.f32 %v250, 1.442695
        %v294 = vpow.pop %v293
        %v295 = vmul.f32 %v251, 1.442695
        %v296 = vpow.pop %v295
        %v297 = vmul.f32 %v252, 1.442695
        %v298 = vpow.pop %v297
        %v299 = vmul.f32 %v253, 1.442695
        %v300 = vpow.pop %v299
        %v301 = vmul.f32 %v254, 1.442695
        %v302 = vpow.pop %v301
        %v303 = vmul.f32 %v255, 1.442695
        %v304 = vpow.pop %v303
        %v305 = vmul.f32 %v256, 1.442695
        %v306 = vpow.pop %v305
        %v307 = vmul.f32 %v257, 1.442695
        %v308 = vpow.pop %v307
        %v309 = vmul.f32 %v258, 1.442695
        %v310 = vpow.pop %v309
        %v311 = vmul.f32 %v259, 1.442695
        %v312 = vpow.pop %v311
        %v313 = vmul.f32 %v260, 1.442695
        %v314 = vpow.pop %v313
        %v315 = vmul.f32 %v261, 1.442695
        %v316 = vpow.pop %v315
        %v317 = vmul.f32 %v262, 1.442695
        %v318 = vpow.pop %v317
        %v319 = vmul.f32 %v263, 1.442695
        %v320 = vpow.pop %v319
        %v321 = vmul.f32 %v264, 1.442695
        %v322 = vpow.pop %v321
        %v323 = vmul.f32 %v265, 1.442695
        %v324 = vpow.pop %v323
        %v325 = vmul.f32 %v266, 1.442695
        %v326 = vpow.pop %v325
        %v327 = vmul.f32 %v267, 1.442695
        %v328 = vpow.pop %v327
        %v329 = vmul.f32 %v268, 1.442695
        %v330 = vpow.pop %v329
        %v331 = vmul.f32 %v269, 1.442695
        %v332 = vpow.pop %v331
        %v333 = vmul.f32 %v270, 1.442695
        %v334 = vpow.pop %v333
        %v335 = vsel %vm178, %v272, 0.0
        %v336 = vsel %vm178, %v280, 0.0
        %v337 = vadd.f32 %v335, %v336
        %v338 = vsel %vm178, %v288, 0.0
        %v339 = vadd.f32 %v337, %v338
        %v340 = vsel %vm178, %v296, 0.0
        %v341 = vadd.f32 %v339, %v340
        %v342 = vsel %vm178, %v304, 0.0
        %v343 = vadd.f32 %v341, %v342
        %v344 = vsel %vm178, %v312, 0.0
        %v345 = vadd.f32 %v343, %v344
        %v346 = vsel %vm178, %v320, 0.0
        %v347 = vadd.f32 %v345, %v346
        %v348 = vsel %vm178, %v328, 0.0
        %v349 = vadd.f32 %v347, %v348
        %v350 = vsel %vm178, %v274, 0.0
        %v351 = vsel %vm178, %v282, 0.0
        %v352 = vadd.f32 %v350, %v351
        %v353 = vsel %vm178, %v290, 0.0
        %v354 = vadd.f32 %v352, %v353
        %v355 = vsel %vm178, %v298, 0.0
        %v356 = vadd.f32 %v354, %v355
        %v357 = vsel %vm178, %v306, 0.0
        %v358 = vadd.f32 %v356, %v357
        %v359 = vsel %vm178, %v314, 0.0
        %v360 = vadd.f32 %v358, %v359
        %v361 = vsel %vm178, %v322, 0.0
        %v362 = vadd.f32 %v360, %v361
        %v363 = vsel %vm178, %v330, 0.0
        %v364 = vadd.f32 %v362, %v363
        %v365 = vsel %vm178, %v276, 0.0
        %v366 = vsel %vm178, %v284, 0.0
        %v367 = vadd.f32 %v365, %v366
        %v368 = vsel %vm178, %v292, 0.0
        %v369 = vadd.f32 %v367, %v368
        %v370 = vsel %vm178, %v300, 0.0
        %v371 = vadd.f32 %v369, %v370
        %v372 = vsel %vm178, %v308, 0.0
        %v373 = vadd.f32 %v371, %v372
        %v374 = vsel %vm178, %v316, 0.0
        %v375 = vadd.f32 %v373, %v374
        %v376 = vsel %vm178, %v324, 0.0
        %v377 = vadd.f32 %v375, %v376
        %v378 = vsel %vm178, %v332, 0.0
        %v379 = vadd.f32 %v377, %v378
        %v380 = vsel %vm178, %v278, 0.0
        %v381 = vsel %vm178, %v286, 0.0
        %v382 = vadd.f32 %v380, %v381
        %v383 = vsel %vm178, %v294, 0.0
        %v384 = vadd.f32 %v382, %v383
        %v385 = vsel %vm178, %v302, 0.0
        %v386 = vadd.f32 %v384, %v385
        %v387 = vsel %vm178, %v310, 0.0
        %v388 = vadd.f32 %v386, %v387
        %v389 = vsel %vm178, %v318, 0.0
        %v390 = vadd.f32 %v388, %v389
        %v391 = vsel %vm178, %v326, 0.0
        %v392 = vadd.f32 %v390, %v391
        %v393 = vsel %vm178, %v334, 0.0
        %v394 = vadd.f32 %v392, %v393
        %v395 = vlog2.pop %v349
        %v396 = vmul.f32 %v395, 0.6931472
        %v397 = vlog2.pop %v364
        %v398 = vmul.f32 %v397, 0.6931472
        %v399 = vlog2.pop %v379
        %v400 = vmul.f32 %v399, 0.6931472
        %v401 = vlog2.pop %v394
        %v402 = vmul.f32 %v401, 0.6931472
        %v403 = vsub.f32 %v239, %v396
        %v404 = vsub.f32 %v240, %v398
        %v405 = vsub.f32 %v241, %v400
        %v406 = vsub.f32 %v242, %v402
        %v407 = vsub.f32 %v243, %v396
        %v408 = vsub.f32 %v244, %v398
        %v409 = vsub.f32 %v245, %v400
        %v410 = vsub.f32 %v246, %v402
        %v411 = vsub.f32 %v247, %v396
        %v412 = vsub.f32 %v248, %v398
        %v413 = vsub.f32 %v249, %v400
        %v414 = vsub.f32 %v250, %v402
        %v415 = vsub.f32 %v251, %v396
        %v416 = vsub.f32 %v252, %v398
        %v417 = vsub.f32 %v253, %v400
        %v418 = vsub.f32 %v254, %v402
        %v419 = vsub.f32 %v255, %v396
        %v420 = vsub.f32 %v256, %v398
        %v421 = vsub.f32 %v257, %v400
        %v422 = vsub.f32 %v258, %v402
        %v423 = vsub.f32 %v259, %v396
        %v424 = vsub.f32 %v260, %v398
        %v425 = vsub.f32 %v261, %v400
        %v426 = vsub.f32 %v262, %v402
        %v427 = vsub.f32 %v263, %v396
        %v428 = vsub.f32 %v264, %v398
        %v429 = vsub.f32 %v265, %v400
        %v430 = vsub.f32 %v266, %v402
        %v431 = vsub.f32 %v267, %v396
        %v432 = vsub.f32 %v268, %v398
        %v433 = vsub.f32 %v269, %v400
        %v434 = vsub.f32 %v270, %v402
        %435 = vst.msk [vmem:[%s134] sm:$0xff] %vm178, %v403
        %436 = vst.msk [vmem:[%s134 + $0x8] sm:$0xff] %vm178, %v404
        %437 = vst.msk [vmem:[%s134 + $0x10] sm:$0xff] %vm178, %v405
        %438 = vst.msk [vmem:[%s134 + $0x18] sm:$0xff] %vm178, %v406
        %439 = vst.msk [vmem:[%s134 + $0x20] sm:$0xff] %vm178, %v407
        %440 = vst.msk [vmem:[%s134 + $0x28] sm:$0xff] %vm178, %v408
        %441 = vst.msk [vmem:[%s134 + $0x30] sm:$0xff] %vm178, %v409
        %442 = vst.msk [vmem:[%s134 + $0x38] sm:$0xff] %vm178, %v410
        %443 = vst.msk [vmem:[%s134 + $0x40] sm:$0xff] %vm178, %v411
        %444 = vst.msk [vmem:[%s134 + $0x48] sm:$0xff] %vm178, %v412
        %445 = vst.msk [vmem:[%s134 + $0x50] sm:$0xff] %vm178, %v413
        %446 = vst.msk [vmem:[%s134 + $0x58] sm:$0xff] %vm178, %v414
        %447 = vst.msk [vmem:[%s134 + $0x60] sm:$0xff] %vm178, %v415
        %448 = vst.msk [vmem:[%s134 + $0x68] sm:$0xff] %vm178, %v416
        %449 = vst.msk [vmem:[%s134 + $0x70] sm:$0xff] %vm178, %v417
        %450 = vst.msk [vmem:[%s134 + $0x78] sm:$0xff] %vm178, %v418
        %451 = vst.msk [vmem:[%s134 + $0x80] sm:$0xff] %vm178, %v419
        %452 = vst.msk [vmem:[%s134 + $0x88] sm:$0xff] %vm178, %v420
        %453 = vst.msk [vmem:[%s134 + $0x90] sm:$0xff] %vm178, %v421
        %454 = vst.msk [vmem:[%s134 + $0x98] sm:$0xff] %vm178, %v422
        %455 = vst.msk [vmem:[%s134 + $0xa0] sm:$0xff] %vm178, %v423
        %456 = vst.msk [vmem:[%s134 + $0xa8] sm:$0xff] %vm178, %v424
        %457 = vst.msk [vmem:[%s134 + $0xb0] sm:$0xff] %vm178, %v425
        %458 = vst.msk [vmem:[%s134 + $0xb8] sm:$0xff] %vm178, %v426
        %459 = vst.msk [vmem:[%s134 + $0xc0] sm:$0xff] %vm178, %v427
        %460 = vst.msk [vmem:[%s134 + $0xc8] sm:$0xff] %vm178, %v428
        %461 = vst.msk [vmem:[%s134 + $0xd0] sm:$0xff] %vm178, %v429
        %462 = vst.msk [vmem:[%s134 + $0xd8] sm:$0xff] %vm178, %v430
        %463 = vst.msk [vmem:[%s134 + $0xe0] sm:$0xff] %vm178, %v431
        %464 = vst.msk [vmem:[%s134 + $0xe8] sm:$0xff] %vm178, %v432
        %465 = vst.msk [vmem:[%s134 + $0xf0] sm:$0xff] %vm178, %v433
        %466 = vst.msk [vmem:[%s134 + $0xf8] sm:$0xff] %vm178, %v434
        %s467 = sand.u32 %s65, 1
        %s468 = scalar_lea.sflag [#allocation3], %s467
        %s469 = sand.u32 %s65, 1
        %s470 = smul.addr %s469, 256
        %s471 = scalar_lea.vmem [#allocation2], %s470
        // Predicated region
        $region25: #{cpnet_forward.29} parent=23 // pred_check
          %p472 = pneg %p75
        $region26: #{cpnet_forward.29} parent=23 // pred_check_branch
          %474 = sbr.rel (%p472) target = $region28
        $region27: #{cpnet_forward.29} parent=23 // pred_region
          %s475 = smul.u32 4, %s20
          %477 = vsyncadd %s468, 0
          %s478 = smul.addr %s19, 32
          %s479 = sadd.s32 %s475, %s478
          %s480 = smul.addr %s479, 8
          %s481 = scalar_lea.hbm %s1, %s480
          %s482 = sshll.u32 %s471, 4
          %s483 = int_to_ptr.vmem [resolvable:$true] %s482
          %s484 = sshll.u32 %s481, 4
          %s485 = int_to_ptr.hbm [resolvable:$true] %s484
          %490 = dma.vmem_to_hbm [thread:$0]  %s483, 4096, %s485, %s468, 128, 128, 8
        $region28: #{cpnet_forward.29} parent=23 // pred_fallthru
          _
      $region24: #{cpnet_forward.29} parent=5 // pred_fallthru
        _
      %p491 = scmp.le.s32.totalorder 2, %s10
      // Predicated region
      $region29: #{cpnet_forward.29} parent=5 // pred_check
        %p492 = pneg %p491
      $region30: #{cpnet_forward.29} parent=5 // pred_check_branch
        %494 = sbr.rel (%p492) target = $region32
      $region31: #{cpnet_forward.29} parent=5 // pred_region
        %s495 = ssub.s32 %s10, 2
        // Predicated region
        $region33: #{cpnet_forward.29} parent=31 // pred_check
          %p496 = pneg %p81
        $region34: #{cpnet_forward.29} parent=31 // pred_check_branch
          %498 = sbr.rel (%p496) target = $region36
        $region35: #{cpnet_forward.29} parent=31 // pred_region
          %s499 = sand.u32 %s66, 1
          %s500 = scalar_lea.sflag [#allocation3], %s499
          %s501 = sand.u32 %s66, 1
          %s502 = smul.addr %s501, 256
          %s503 = scalar_lea.vmem [#allocation2], %s502
          %505 = dma.done %s500, 4096
        $region36: #{cpnet_forward.29} parent=31 // pred_fallthru
          _
      $region32: #{cpnet_forward.29} parent=5 // pred_fallthru
        _
    $region6: #{cpnet_forward.29} parent=1 // loop_footer
      %s14 = sadd.s32 1, %s10
    $region7: #{cpnet_forward.29} parent=1 // loop_footer_branch
      %9 = sbr.rel target = $region3
    $region8: #{cpnet_forward.29} parent=1 // loop_exit
      _
    %506 = vsyncpa [#allocation3], 1
    %s507 = scalar_lea.sflag [#allocation3], 1
    %508 = vsyncpa %s507, 1

</llo_original>
